<compile_context>
chip_gen: v5e
topology: v5e:2x2
jax: 0.10.0
libtpu: 0.0.40
codegen_flags: <defaults>
</compile_context>

<pallas_src>
import functools
import math

import jax
import jax.numpy as jnp
from jax.experimental import pallas as pl
from jax.experimental.pallas import tpu as pltpu


def _round_up(v, m):
    return ((v + m - 1) // m) * m


# --------------------------------------------------------------------------
# Pallas kernel: full attention-temporal-encoder forward for one batch block.
# --------------------------------------------------------------------------
def attention_kernel(x_ref, mask_ref, wqkv_ref, bqkv_ref, wo_ref, bo_ref,
                     out_ref, *, num_heads, head_dim, t_valid):
    f32 = jnp.float32
    bf16 = jnp.bfloat16
    blk_b, hidden, t = x_ref.shape
    nh, hd = num_heads, head_dim

    # Input arrives in native (blk_b, hidden, T) layout; relayout in VMEM only.
    xt = jnp.transpose(x_ref[...], (0, 2, 1))              # (blk_b, T, hidden)
    x2d = xt.reshape(blk_b * t, hidden).astype(bf16)       # free merge: T % 8 == 0

    # Fused Q|K|V projection: one MXU matmul, bf16 weights (pre-cast), f32 acc.
    # All three biases (incl. bk) are kept: the clamp(-50,50) quirk makes a
    # constant key-score shift non-invariant under softmax.
    qkv = jnp.dot(x2d, wqkv_ref[...], preferred_element_type=f32) + bqkv_ref[...]
    qkv = qkv.reshape(blk_b, t, 3 * hidden)

    # Fold heads into the matmul batch dim: (nh*blk_b, T, hd); head h occupies
    # rows [h*blk_b, (h+1)*blk_b).
    def head_stack(base):
        return jnp.concatenate(
            [qkv[:, :, base + h * hd: base + (h + 1) * hd] for h in range(nh)],
            axis=0)

    q = head_stack(0)               # (nh*blk_b, T, hd)
    k = head_stack(hidden)
    v = head_stack(2 * hidden)

    # Scores for all heads in ONE batched matmul (f32: MXU is idle at these
    # shapes and it keeps the softmax math exact).
    s = jnp.einsum("bqd,bkd->bqk", q, k,
                   preferred_element_type=f32) * (1.0 / math.sqrt(hd))

    # masked_fill(mask==0, -inf) then clamp(-50, 50)  ==  exactly -50 on masked keys.
    mrep = jnp.concatenate([mask_ref[...]] * nh, axis=0)    # (nh*blk_b, T)
    keep = (mrep != 0.0)[:, None, :]                        # (nh*blk_b, 1, T)
    s = jnp.where(keep, jnp.clip(s, -50.0, 50.0), -50.0)

    # Softmax over keys; normalization deferred past the PV matmul.
    # TODO(synk): with production T >= 128 the softmax tiles become lane-dense;
    # at T=16 the exp/max/sum run at ~12% lane occupancy (accepted, HBM-bound).
    s = s - jnp.max(s, axis=-1, keepdims=True)
    p = jnp.exp(s)                                          # (nh*blk_b, T, T)
    denom = jnp.sum(p, axis=-1, keepdims=True)              # (nh*blk_b, T, 1)
    ctx = jnp.einsum("bqk,bkd->bqd", p, v, preferred_element_type=f32)
    ctx = ctx * pl.reciprocal(denom, approx=True)           # EUP, not a VALU divide

    # Un-stack heads back onto lanes (head-major columns match wo's row order),
    # then a SINGLE full-width output projection.
    ctx = jnp.concatenate([ctx[h * blk_b:(h + 1) * blk_b] for h in range(nh)],
                          axis=-1)                           # (blk_b, T, hidden)
    proj = jnp.dot(ctx.reshape(blk_b * t, hidden).astype(bf16), wo_ref[...],
                   preferred_element_type=f32)
    proj = proj.reshape(blk_b, t, hidden)
    if t_valid < t:                                          # drop padded time rows
        proj = proj[:, :t_valid, :]

    # Max over time, THEN the output bias (exact: max commutes with a constant
    # per-feature add) -> T x less bias work, no broadcast over the time tile.
    out_ref[...] = jnp.max(proj, axis=1) + bo_ref[...]


# --------------------------------------------------------------------------
# Wrapper
# --------------------------------------------------------------------------
@functools.partial(jax.jit, static_argnames=("num_heads", "head_dim", "block_b"))
def attention_temporal_encoder(x, mask, params, *, num_heads, head_dim,
                               block_b=128):
    """x: (B, hidden, T) native layout, mask: (B, T) (nonzero = keep) -> (B, hidden)."""
    B, hidden, T = x.shape
    assert num_heads * head_dim == hidden

    f32 = jnp.float32
    bf16 = jnp.bfloat16
    x = x.astype(f32)                       # native layout: NO wrapper transpose
    maskf = mask.astype(f32)

    # Fused QKV weights, pre-cast to bf16 once (VMEM-resident across the grid);
    # biases stay f32.
    wqkv = jnp.concatenate([params["wq"], params["wk"], params["wv"]],
                           axis=1).astype(bf16)
    bqkv = jnp.concatenate([params["bq"], params["bk"], params["bv"]]
                           ).reshape(1, 3 * hidden).astype(f32)
    wo = params["wo"].astype(bf16)
    bo = params["bo"].reshape(1, hidden).astype(f32)

    # Pad T to the f32 sublane tile so the in-kernel (blk_b,T,H)->(blk_b*T,H)
    # merge is layout-free (no-op when T % 8 == 0, as in the example).
    t_pad = _round_up(T, 8)
    if t_pad != T:
        x = jnp.pad(x, ((0, 0), (0, 0), (0, t_pad - T)))
        maskf = jnp.pad(maskf, ((0, 0), (0, t_pad - T)))    # padded keys masked out

    # Batch-block sizing: multiple of 8, >= 2 grid steps when the batch allows
    # it (megacore sharding + DMA/compute pipelining), VMEM-capped for v7x.
    def vmem_bytes(bb):
        rows = bb * t_pad
        per_row = (hidden * 4 * 2                  # x tile (f32, double buffered)
                   + hidden * 2                    # bf16 copy of x
                   + 3 * hidden * 4                # qkv
                   + 3 * hidden * 4                # head-stacked q/k/v
                   + 2 * num_heads * t_pad * 4     # scores + exp
                   + 2 * hidden * 4                # ctx (stacked + lane-concat)
                   + hidden * 4 + hidden * 2)      # proj f32 + bf16 ctx copy
        weights = 4 * hidden * hidden * 2 + 8 * hidden * 4
        return rows * per_row + weights

    blk_b = min(_round_up(block_b, 8), _round_up(B, 8))
    while blk_b > 8 and (B + blk_b - 1) // blk_b < 2:
        blk_b = _round_up(blk_b // 2, 8)
    vmem_budget = 40 * 1024 * 1024                 # fits v7x's 64 MiB with headroom
    while blk_b > 8 and vmem_bytes(blk_b) > vmem_budget:
        blk_b = _round_up(blk_b // 2, 8)

    b_pad = _round_up(B, blk_b)
    if b_pad != B:
        x = jnp.pad(x, ((0, b_pad - B), (0, 0), (0, 0)))
        maskf = jnp.pad(maskf, ((0, b_pad - B), (0, 0)), constant_values=1.0)

    kernel = functools.partial(attention_kernel, num_heads=num_heads,
                               head_dim=head_dim, t_valid=T)

    out = pl.pallas_call(
        kernel,
        out_shape=jax.ShapeDtypeStruct((b_pad, hidden), f32),
        grid_spec=pltpu.PrefetchScalarGridSpec(
            num_scalar_prefetch=0,
            grid=(b_pad // blk_b,),
            in_specs=[
                pl.BlockSpec((blk_b, hidden, t_pad), lambda b: (b, 0, 0)),
                pl.BlockSpec((blk_b, t_pad), lambda b: (b, 0)),
                pl.BlockSpec((hidden, 3 * hidden), lambda b: (0, 0)),
                pl.BlockSpec((1, 3 * hidden), lambda b: (0, 0)),
                pl.BlockSpec((hidden, hidden), lambda b: (0, 0)),
                pl.BlockSpec((1, hidden), lambda b: (0, 0)),
            ],
            # Lane-density note: with hidden=32 the output is ~3% of HBM traffic;
            # repacking it to 128-lane rows needs an in-kernel minor-dim reshape
            # costing about as much as the masked stores it saves, so the natural
            # (blk_b, hidden) block is kept.  For hidden >= 128 the store is
            # already lane-dense.
            out_specs=pl.BlockSpec((blk_b, hidden), lambda b: (b, 0)),
        ),
        compiler_params=pltpu.CompilerParams(
            dimension_semantics=("parallel",),     # shards batch across TCs on v7x
            vmem_limit_bytes=48 * 1024 * 1024),
    )(x, maskf, wqkv, bqkv, wo, bo)

    return out[:B]


# --------------------------------------------------------------------------
# Pure-JAX reference (mirrors the PyTorch forward exactly)
# --------------------------------------------------------------------------
def reference_forward(x, mask, p, num_heads, head_dim):
    B, hidden, T = x.shape
    xt = jnp.transpose(x, (0, 2, 1))                       # (B, T, hidden)

    def heads(w, b):
        y = xt @ w + b
        return y.reshape(B, T, num_heads, head_dim).transpose(0, 2, 1, 3)

    Q = heads(p["wq"], p["bq"])
    K = heads(p["wk"], p["bk"])
    V = heads(p["wv"], p["bv"])
    s = jnp.einsum("bhqd,bhkd->bhqk", Q, K) / math.sqrt(head_dim)
    s = jnp.where(mask[:, None, None, :] != 0, s, -jnp.inf)
    s = jnp.clip(s, -50.0, 50.0)
    w = jax.nn.softmax(s, axis=-1)
    o = jnp.einsum("bhqk,bhkd->bhqd", w, V)
    o = o.transpose(0, 2, 1, 3).reshape(B, T, hidden)
    out = o @ p["wo"] + p["bo"]
    return jnp.max(out, axis=1)


# --------------------------------------------------------------------------
# Deterministic parameters / inputs and test
# --------------------------------------------------------------------------
def make_params(key, hidden):
    ks = jax.random.split(key, 8)

    def nrm(k, shape, scale=0.1):
        return scale * jax.random.normal(k, shape, dtype=jnp.float32)

    # Linear weights pre-transposed to (fan_in, fan_out); biases (fan_out,).
    return {
        "wq": nrm(ks[0], (hidden, hidden)), "bq": nrm(ks[1], (hidden,)),
        "wk": nrm(ks[2], (hidden, hidden)), "bk": nrm(ks[3], (hidden,)),
        "wv": nrm(ks[4], (hidden, hidden)), "bv": nrm(ks[5], (hidden,)),
        "wo": nrm(ks[6], (hidden, hidden)), "bo": nrm(ks[7], (hidden,)),
    }


if __name__ == "__main__":
    batch, hidden_dim, num_heads, head_dim, seq = 4, 32, 4, 8, 16

    key = jax.random.PRNGKey(0)
    kx, km, kp = jax.random.split(key, 3)
    x = jax.random.normal(kx, (batch, hidden_dim, seq), dtype=jnp.float32)
    mask = (jax.random.uniform(km, (batch, seq)) > 0.2).astype(jnp.float32)
    mask = mask.at[:, 0].set(1.0)      # ensure at least one valid key per row
    params = make_params(kp, hidden_dim)

    out = attention_temporal_encoder(
        x, mask, params, num_heads=num_heads, head_dim=head_dim)
    out = jax.block_until_ready(out)

    assert out.shape == (batch, hidden_dim), out.shape
    assert bool(jnp.all(jnp.isfinite(out)))

    ref = jax.block_until_ready(
        reference_forward(x, mask, params, num_heads, head_dim))
    assert bool(jnp.allclose(out, ref, rtol=5e-2, atol=5e-2)), \
        float(jnp.max(jnp.abs(out - ref)))

    print("KERNEL_OK")
</pallas_src>

<mosaic_0001>
module attributes {stable_mosaic.version = 11 : i64} {
  func.func @attention_kernel(%arg0: i32, %arg1: memref<8x32x16xf32, #tpu.memory_space<vmem>>, %arg2: memref<8x16xf32, #tpu.memory_space<vmem>>, %arg3: memref<32x96xbf16, #tpu.memory_space<vmem>>, %arg4: memref<1x96xf32, #tpu.memory_space<vmem>>, %arg5: memref<32x32xbf16, #tpu.memory_space<vmem>>, %arg6: memref<1x32xf32, #tpu.memory_space<vmem>>, %arg7: memref<8x32xf32, #tpu.memory_space<vmem>>) attributes {dimension_semantics = [#tpu.dimension_semantics<parallel>], iteration_bounds = array<i64: 1>, scalar_prefetch = 0 : i64, scratch_operands = 0 : i64, tpu.core_type = #tpu.core_type<tc>, window_params = [{transform_indices = @transform_0, window_bounds = array<i64: 8, 32, 16>}, {transform_indices = @transform_1, window_bounds = array<i64: 8, 16>}, {pipeline_mode = #tpu.pipeline_mode<synchronous>, transform_indices = @transform_2, window_bounds = array<i64: 32, 96>}, {pipeline_mode = #tpu.pipeline_mode<synchronous>, transform_indices = @transform_3, window_bounds = array<i64: 1, 96>}, {pipeline_mode = #tpu.pipeline_mode<synchronous>, transform_indices = @transform_4, window_bounds = array<i64: 32, 32>}, {pipeline_mode = #tpu.pipeline_mode<synchronous>, transform_indices = @transform_5, window_bounds = array<i64: 1, 32>}, {transform_indices = @transform_6, window_bounds = array<i64: 8, 32>}]} {
    %c0 = arith.constant 0 : index
    %c0_0 = arith.constant 0 : index
    %c0_1 = arith.constant 0 : index
    %0 = vector.load %arg1[%c0, %c0_0, %c0_1] : memref<8x32x16xf32, #tpu.memory_space<vmem>>, vector<8x32x16xf32>
    %1 = tpu.transpose %0, [0, 2, 1] : vector<8x32x16xf32> -> vector<8x16x32xf32>
    %2 = vector.shape_cast %1 : vector<8x16x32xf32> to vector<128x32xf32>
    %3 = arith.truncf %2 : vector<128x32xf32> to vector<128x32xbf16>
    %c0_2 = arith.constant 0 : index
    %c0_3 = arith.constant 0 : index
    %4 = vector.load %arg3[%c0_2, %c0_3] : memref<32x96xbf16, #tpu.memory_space<vmem>>, vector<32x96xbf16>
    %cst = arith.constant dense<0.000000e+00> : vector<128x96xf32>
    %5 = tpu.matmul %3, %4, %cst {dimension_numbers = #tpu.dot_dimension_numbers<[1], [0], [0], [1], [0, 0, 1, 1], [], []>} : vector<128x32xbf16>, vector<32x96xbf16>, vector<128x96xf32> -> vector<128x96xf32>
    %c0_4 = arith.constant 0 : index
    %c0_5 = arith.constant 0 : index
    %6 = vector.load %arg4[%c0_4, %c0_5] : memref<1x96xf32, #tpu.memory_space<vmem>>, vector<1x96xf32>
    %7 = vector.broadcast %6 : vector<1x96xf32> to vector<128x96xf32>
    %8 = arith.addf %5, %7 : vector<128x96xf32>
    %9 = vector.shape_cast %8 : vector<128x96xf32> to vector<8x16x96xf32>
    %10 = vector.extract_strided_slice %9 {offsets = [0, 0, 0], sizes = [8, 16, 8], strides = [1, 1, 1]} : vector<8x16x96xf32> to vector<8x16x8xf32>
    %11 = vector.extract_strided_slice %9 {offsets = [0, 0, 8], sizes = [8, 16, 8], strides = [1, 1, 1]} : vector<8x16x96xf32> to vector<8x16x8xf32>
    %12 = vector.extract_strided_slice %9 {offsets = [0, 0, 16], sizes = [8, 16, 8], strides = [1, 1, 1]} : vector<8x16x96xf32> to vector<8x16x8xf32>
    %13 = vector.extract_strided_slice %9 {offsets = [0, 0, 24], sizes = [8, 16, 8], strides = [1, 1, 1]} : vector<8x16x96xf32> to vector<8x16x8xf32>
    %14 = tpu.concatenate %10, %11, %12, %13 in 0 : vector<8x16x8xf32>, vector<8x16x8xf32>, vector<8x16x8xf32>, vector<8x16x8xf32> -> vector<32x16x8xf32>
    %15 = vector.extract_strided_slice %9 {offsets = [0, 0, 32], sizes = [8, 16, 8], strides = [1, 1, 1]} : vector<8x16x96xf32> to vector<8x16x8xf32>
    %16 = vector.extract_strided_slice %9 {offsets = [0, 0, 40], sizes = [8, 16, 8], strides = [1, 1, 1]} : vector<8x16x96xf32> to vector<8x16x8xf32>
    %17 = vector.extract_strided_slice %9 {offsets = [0, 0, 48], sizes = [8, 16, 8], strides = [1, 1, 1]} : vector<8x16x96xf32> to vector<8x16x8xf32>
    %18 = vector.extract_strided_slice %9 {offsets = [0, 0, 56], sizes = [8, 16, 8], strides = [1, 1, 1]} : vector<8x16x96xf32> to vector<8x16x8xf32>
    %19 = tpu.concatenate %15, %16, %17, %18 in 0 : vector<8x16x8xf32>, vector<8x16x8xf32>, vector<8x16x8xf32>, vector<8x16x8xf32> -> vector<32x16x8xf32>
    %20 = vector.extract_strided_slice %9 {offsets = [0, 0, 64], sizes = [8, 16, 8], strides = [1, 1, 1]} : vector<8x16x96xf32> to vector<8x16x8xf32>
    %21 = vector.extract_strided_slice %9 {offsets = [0, 0, 72], sizes = [8, 16, 8], strides = [1, 1, 1]} : vector<8x16x96xf32> to vector<8x16x8xf32>
    %22 = vector.extract_strided_slice %9 {offsets = [0, 0, 80], sizes = [8, 16, 8], strides = [1, 1, 1]} : vector<8x16x96xf32> to vector<8x16x8xf32>
    %23 = vector.extract_strided_slice %9 {offsets = [0, 0, 88], sizes = [8, 16, 8], strides = [1, 1, 1]} : vector<8x16x96xf32> to vector<8x16x8xf32>
    %24 = tpu.concatenate %20, %21, %22, %23 in 0 : vector<8x16x8xf32>, vector<8x16x8xf32>, vector<8x16x8xf32>, vector<8x16x8xf32> -> vector<32x16x8xf32>
    "tpu.trace_start"() <{level = 10 : i32, message = "bqd,bkd->bqk"}> : () -> ()
    %cst_6 = arith.constant dense<0.000000e+00> : vector<32x16x16xf32>
    %25 = tpu.matmul %14, %19, %cst_6 {dimension_numbers = #tpu.dot_dimension_numbers<[2], [2], [1], [1], [0, 0, 0, 1, 1, 1], [0], [0]>} : vector<32x16x8xf32>, vector<32x16x8xf32>, vector<32x16x16xf32> -> vector<32x16x16xf32>
    "tpu.trace_stop"() : () -> ()
    %cst_7 = arith.constant 0.353553385 : f32
    %26 = vector.broadcast %cst_7 : f32 to vector<32x16x16xf32>
    %27 = arith.mulf %25, %26 : vector<32x16x16xf32>
    %c0_8 = arith.constant 0 : index
    %c0_9 = arith.constant 0 : index
    %28 = vector.load %arg2[%c0_8, %c0_9] : memref<8x16xf32, #tpu.memory_space<vmem>>, vector<8x16xf32>
    %29 = tpu.concatenate %28, %28, %28, %28 in 0 : vector<8x16xf32>, vector<8x16xf32>, vector<8x16xf32>, vector<8x16xf32> -> vector<32x16xf32>
    %cst_10 = arith.constant 0.000000e+00 : f32
    %30 = vector.broadcast %cst_10 : f32 to vector<32x16xf32>
    %31 = arith.cmpf one, %29, %30 : vector<32x16xf32>
    %32 = vector.shape_cast %31 : vector<32x16xi1> to vector<32x1x16xi1>
    %cst_11 = arith.constant -5.000000e+01 : f32
    %cst_12 = arith.constant 5.000000e+01 : f32
    %33 = vector.broadcast %cst_11 : f32 to vector<32x16x16xf32>
    %34 = arith.maximumf %33, %27 : vector<32x16x16xf32>
    %35 = vector.broadcast %cst_12 : f32 to vector<32x16x16xf32>
    %36 = arith.minimumf %35, %34 : vector<32x16x16xf32>
    %cst_13 = arith.constant -5.000000e+01 : f32
    %37 = vector.shape_cast %32 : vector<32x1x16xi1> to vector<32x1x16xi1>
    %38 = vector.broadcast %37 : vector<32x1x16xi1> to vector<32x16x16xi1>
    %39 = vector.broadcast %cst_13 : f32 to vector<32x16x16xf32>
    %40 = arith.select %38, %36, %39 : vector<32x16x16xi1>, vector<32x16x16xf32>
    %cst_14 = arith.constant dense<0xFF800000> : vector<32x16xf32>
    %41 = vector.multi_reduction <maximumf>, %40, %cst_14 [2] : vector<32x16x16xf32> to vector<32x16xf32>
    %42 = vector.shape_cast %41 : vector<32x16xf32> to vector<32x16x1xf32>
    %43 = vector.broadcast %42 : vector<32x16x1xf32> to vector<32x16x16xf32>
    %44 = arith.subf %40, %43 : vector<32x16x16xf32>
    %45 = math.exp %44 : vector<32x16x16xf32>
    %cst_15 = arith.constant dense<0.000000e+00> : vector<32x16xf32>
    %46 = vector.multi_reduction <add>, %45, %cst_15 [2] : vector<32x16x16xf32> to vector<32x16xf32>
    %47 = vector.shape_cast %46 : vector<32x16xf32> to vector<32x16x1xf32>
    "tpu.trace_start"() <{level = 10 : i32, message = "bqk,bkd->bqd"}> : () -> ()
    %cst_16 = arith.constant dense<0.000000e+00> : vector<32x16x8xf32>
    %48 = tpu.matmul %45, %24, %cst_16 {dimension_numbers = #tpu.dot_dimension_numbers<[2], [1], [1], [2], [0, 0, 0, 1, 1, 2], [0], [0]>} : vector<32x16x16xf32>, vector<32x16x8xf32>, vector<32x16x8xf32> -> vector<32x16x8xf32>
    "tpu.trace_stop"() : () -> ()
    %49 = tpu.reciprocal %47 {approx = true} : vector<32x16x1xf32> -> vector<32x16x1xf32>
    %50 = vector.broadcast %49 : vector<32x16x1xf32> to vector<32x16x8xf32>
    %51 = arith.mulf %48, %50 : vector<32x16x8xf32>
    %52 = vector.extract_strided_slice %51 {offsets = [0, 0, 0], sizes = [8, 16, 8], strides = [1, 1, 1]} : vector<32x16x8xf32> to vector<8x16x8xf32>
    %53 = vector.extract_strided_slice %51 {offsets = [8, 0, 0], sizes = [8, 16, 8], strides = [1, 1, 1]} : vector<32x16x8xf32> to vector<8x16x8xf32>
    %54 = vector.extract_strided_slice %51 {offsets = [16, 0, 0], sizes = [8, 16, 8], strides = [1, 1, 1]} : vector<32x16x8xf32> to vector<8x16x8xf32>
    %55 = vector.extract_strided_slice %51 {offsets = [24, 0, 0], sizes = [8, 16, 8], strides = [1, 1, 1]} : vector<32x16x8xf32> to vector<8x16x8xf32>
    %56 = tpu.concatenate %52, %53, %54, %55 in 2 : vector<8x16x8xf32>, vector<8x16x8xf32>, vector<8x16x8xf32>, vector<8x16x8xf32> -> vector<8x16x32xf32>
    %57 = vector.shape_cast %56 : vector<8x16x32xf32> to vector<128x32xf32>
    %58 = arith.truncf %57 : vector<128x32xf32> to vector<128x32xbf16>
    %c0_17 = arith.constant 0 : index
    %c0_18 = arith.constant 0 : index
    %59 = vector.load %arg5[%c0_17, %c0_18] : memref<32x32xbf16, #tpu.memory_space<vmem>>, vector<32x32xbf16>
    %cst_19 = arith.constant dense<0.000000e+00> : vector<128x32xf32>
    %60 = tpu.matmul %58, %59, %cst_19 {dimension_numbers = #tpu.dot_dimension_numbers<[1], [0], [0], [1], [0, 0, 1, 1], [], []>} : vector<128x32xbf16>, vector<32x32xbf16>, vector<128x32xf32> -> vector<128x32xf32>
    %61 = vector.shape_cast %60 : vector<128x32xf32> to vector<8x16x32xf32>
    %cst_20 = arith.constant dense<0xFF800000> : vector<8x32xf32>
    %62 = vector.multi_reduction <maximumf>, %61, %cst_20 [1] : vector<8x16x32xf32> to vector<8x32xf32>
    %c0_21 = arith.constant 0 : index
    %c0_22 = arith.constant 0 : index
    %63 = vector.load %arg6[%c0_21, %c0_22] : memref<1x32xf32, #tpu.memory_space<vmem>>, vector<1x32xf32>
    %64 = vector.broadcast %63 : vector<1x32xf32> to vector<8x32xf32>
    %65 = arith.addf %62, %64 : vector<8x32xf32>
    %c0_23 = arith.constant 0 : index
    %c0_24 = arith.constant 0 : index
    %66 = vector.load %arg7[%c0_23, %c0_24] : memref<8x32xf32, #tpu.memory_space<vmem>>, vector<8x32xf32>
    tpu.vector_store %arg7[%c0_23, %c0_24], %65 {strides = array<i32>} : memref<8x32xf32, #tpu.memory_space<vmem>>, vector<8x32xf32>,
    return
  }
  func.func @transform_0(%arg0: i32) -> (i32, i32, i32) {
    %c0_i32 = arith.constant 0 : i32
    %c0_i32_0 = arith.constant 0 : i32
    %c0_i32_1 = arith.constant 0 : i32
    return %arg0, %c0_i32, %c0_i32_0 : i32, i32, i32
  }
  func.func @transform_1(%arg0: i32) -> (i32, i32) {
    %c0_i32 = arith.constant 0 : i32
    %c0_i32_0 = arith.constant 0 : i32
    return %arg0, %c0_i32 : i32, i32
  }
  func.func @transform_2(%arg0: i32) -> (i32, i32) {
    %c0_i32 = arith.constant 0 : i32
    %c0_i32_0 = arith.constant 0 : i32
    %c0_i32_1 = arith.constant 0 : i32
    return %c0_i32, %c0_i32_0 : i32, i32
  }
  func.func @transform_3(%arg0: i32) -> (i32, i32) {
    %c0_i32 = arith.constant 0 : i32
    %c0_i32_0 = arith.constant 0 : i32
    %c0_i32_1 = arith.constant 0 : i32
    return %c0_i32, %c0_i32_0 : i32, i32
  }
  func.func @transform_4(%arg0: i32) -> (i32, i32) {
    %c0_i32 = arith.constant 0 : i32
    %c0_i32_0 = arith.constant 0 : i32
    %c0_i32_1 = arith.constant 0 : i32
    return %c0_i32, %c0_i32_0 : i32, i32
  }
  func.func @transform_5(%arg0: i32) -> (i32, i32) {
    %c0_i32 = arith.constant 0 : i32
    %c0_i32_0 = arith.constant 0 : i32
    %c0_i32_1 = arith.constant 0 : i32
    return %c0_i32, %c0_i32_0 : i32, i32
  }
  func.func @transform_6(%arg0: i32) -> (i32, i32) {
    %c0_i32 = arith.constant 0 : i32
    %c0_i32_0 = arith.constant 0 : i32
    return %arg0, %c0_i32 : i32, i32
  }
}

</mosaic_0001>

<llo_original>
// kernel: attention_temporal_encoder.1
$region0: #{attention_temporal_encoder.1}
  #allocation0 [shape = 'u32[]', space=smem, size = 0x4, offset = 0x4, fixed_abs, tag = 'smem constant byte address 0x4 - core index']
  #allocation1 [shape = 'u32[72,128]{1,0:T(1,128)}', space=vmem, size = 0x9000, scoped, tag = 'internal scratch']
  %s0 = inlined_call_operand.vmem [shape: f32[8,32,16], index: 0, kind: input, shape index: {}]
  %s1 = inlined_call_operand.vmem [shape: f32[8,16], index: 1, kind: input, shape index: {}]
  %s2 = inlined_call_operand.vmem [shape: bf16[32,96], index: 2, kind: input, shape index: {}]
  %s3 = inlined_call_operand.vmem [shape: f32[1,96], index: 3, kind: input, shape index: {}]
  %s4 = inlined_call_operand.vmem [shape: bf16[32,32], index: 4, kind: input, shape index: {}]
  %s5 = inlined_call_operand.vmem [shape: f32[1,32], index: 5, kind: input, shape index: {}]
  %s6 = inlined_call_operand.vmem [shape: f32[8,32], index: 6, kind: output, shape index: {}]
  %s7 = sld [smem:[#allocation0]]
  $region34: #{attention_temporal_encoder.1} parent=0
    _
  %s9 = ssub.s32 1, %s7
  %s10 = scalar_select 0, %s9, %s7
  // Predicated region
  $region2: #{attention_temporal_encoder.1} parent=0 // pred_check
    _
  $region3: #{attention_temporal_encoder.1} parent=0 // pred_check_branch
    %12 = sbr.rel (0) target = $region5
  $region4: #{attention_temporal_encoder.1} parent=0 // pred_region
    _
  $region5: #{attention_temporal_encoder.1} parent=0 // pred_fallthru
    _
  // Predicated region
  $region6: #{attention_temporal_encoder.1} parent=0 // pred_check
    _
  $region7: #{attention_temporal_encoder.1} parent=0 // pred_check_branch
    %14 = sbr.rel (0) target = $region9
  $region8: #{attention_temporal_encoder.1} parent=0 // pred_region
    _
  $region9: #{attention_temporal_encoder.1} parent=0 // pred_fallthru
    _
  // Predicated region
  $region10: #{attention_temporal_encoder.1} parent=0 // pred_check
    _
  $region11: #{attention_temporal_encoder.1} parent=0 // pred_check_branch
    %16 = sbr.rel (0) target = $region13
  $region12: #{attention_temporal_encoder.1} parent=0 // pred_region
    _
  $region13: #{attention_temporal_encoder.1} parent=0 // pred_fallthru
    _
  // Predicated region
  $region14: #{attention_temporal_encoder.1} parent=0 // pred_check
    _
  $region15: #{attention_temporal_encoder.1} parent=0 // pred_check_branch
    %18 = sbr.rel (0) target = $region17
  $region16: #{attention_temporal_encoder.1} parent=0 // pred_region
    _
  $region17: #{attention_temporal_encoder.1} parent=0 // pred_fallthru
    _
  // Predicated region
  $region18: #{attention_temporal_encoder.1} parent=0 // pred_check
    _
  $region19: #{attention_temporal_encoder.1} parent=0 // pred_check_branch
    %20 = sbr.rel (0) target = $region21
  $region20: #{attention_temporal_encoder.1} parent=0 // pred_region
    _
  $region21: #{attention_temporal_encoder.1} parent=0 // pred_fallthru
    _
  // Predicated region
  $region22: #{attention_temporal_encoder.1} parent=0 // pred_check
    _
  $region23: #{attention_temporal_encoder.1} parent=0 // pred_check_branch
    %22 = sbr.rel (0) target = $region25
  $region24: #{attention_temporal_encoder.1} parent=0 // pred_region
    _
  $region25: #{attention_temporal_encoder.1} parent=0 // pred_fallthru
    _
  %v24 = vld [vmem:[%s0] sm:$0xff]
  %v25 = vld [vmem:[%s0 + $0x8] sm:$0xff]
  %v26 = vld [vmem:[%s0 + $0x10] sm:$0xff]
  %v27 = vld [vmem:[%s0 + $0x18] sm:$0xff]
  %v28 = vld [vmem:[%s0 + $0x20] sm:$0xff]
  %v29 = vld [vmem:[%s0 + $0x28] sm:$0xff]
  %v30 = vld [vmem:[%s0 + $0x30] sm:$0xff]
  %v31 = vld [vmem:[%s0 + $0x38] sm:$0xff]
  %v32 = vld [vmem:[%s0 + $0x40] sm:$0xff]
  %v33 = vld [vmem:[%s0 + $0x48] sm:$0xff]
  %v34 = vld [vmem:[%s0 + $0x50] sm:$0xff]
  %v35 = vld [vmem:[%s0 + $0x58] sm:$0xff]
  %v36 = vld [vmem:[%s0 + $0x60] sm:$0xff]
  %v37 = vld [vmem:[%s0 + $0x68] sm:$0xff]
  %v38 = vld [vmem:[%s0 + $0x70] sm:$0xff]
  %v39 = vld [vmem:[%s0 + $0x78] sm:$0xff]
  %v40 = vld [vmem:[%s0 + $0x80] sm:$0xff]
  %v41 = vld [vmem:[%s0 + $0x88] sm:$0xff]
  %v42 = vld [vmem:[%s0 + $0x90] sm:$0xff]
  %v43 = vld [vmem:[%s0 + $0x98] sm:$0xff]
  %v44 = vld [vmem:[%s0 + $0xa0] sm:$0xff]
  %v45 = vld [vmem:[%s0 + $0xa8] sm:$0xff]
  %v46 = vld [vmem:[%s0 + $0xb0] sm:$0xff]
  %v47 = vld [vmem:[%s0 + $0xb8] sm:$0xff]
  %v48 = vld [vmem:[%s0 + $0xc0] sm:$0xff]
  %v49 = vld [vmem:[%s0 + $0xc8] sm:$0xff]
  %v50 = vld [vmem:[%s0 + $0xd0] sm:$0xff]
  %v51 = vld [vmem:[%s0 + $0xd8] sm:$0xff]
  %v52 = vld [vmem:[%s0 + $0xe0] sm:$0xff]
  %v53 = vld [vmem:[%s0 + $0xe8] sm:$0xff]
  %v54 = vld [vmem:[%s0 + $0xf0] sm:$0xff]
  %v55 = vld [vmem:[%s0 + $0xf8] sm:$0xff]
  %56 = vxpose.xlu0.b32.start [1/16] %v24, 128
  %57 = vxpose.xlu0.b32.cont [2/16] %v25, 128
  %58 = vxpose.xlu0.b32.cont [3/16] %v26, 128
  %59 = vxpose.xlu0.b32.cont [4/16] %v27, 128
  %60 = vxpose.xlu0.b32.cont [5/16] 0.0, 128
  %61 = vxpose.xlu0.b32.cont [6/16] 0.0, 128
  %62 = vxpose.xlu0.b32.cont [7/16] 0.0, 128
  %63 = vxpose.xlu0.b32.cont [8/16] 0.0, 128
  %64 = vxpose.xlu0.b32.cont [9/16] 0.0, 128
  %65 = vxpose.xlu0.b32.cont [10/16] 0.0, 128
  %66 = vxpose.xlu0.b32.cont [11/16] 0.0, 128
  %67 = vxpose.xlu0.b32.cont [12/16] 0.0, 128
  %68 = vxpose.xlu0.b32.cont [13/16] 0.0, 128
  %69 = vxpose.xlu0.b32.cont [14/16] 0.0, 128
  %70 = vxpose.xlu0.b32.cont [15/16] 0.0, 128
  %71 = vxpose.xlu0.b32.end [16/16] 0.0, 128
  %v72 = vpop.trf.xlu0
  %v73 = vpop.trf.xlu0
  %v74 = vpop.trf.xlu0
  %v75 = vpop.trf.xlu0
  %v76 = vpop.trf.xlu0
  %v77 = vpop.trf.xlu0
  %v78 = vpop.trf.xlu0
  %v79 = vpop.trf.xlu0
  %v80 = vpop.trf.xlu0
  %v81 = vpop.trf.xlu0
  %v82 = vpop.trf.xlu0
  %v83 = vpop.trf.xlu0
  %v84 = vpop.trf.xlu0
  %v85 = vpop.trf.xlu0
  %v86 = vpop.trf.xlu0
  %v87 = vpop.trf.xlu0
  %88 = vxpose.xlu0.b32.start [1/16] %v28, 128
  %89 = vxpose.xlu0.b32.cont [2/16] %v29, 128
  %90 = vxpose.xlu0.b32.cont [3/16] %v30, 128
  %91 = vxpose.xlu0.b32.cont [4/16] %v31, 128
  %92 = vxpose.xlu0.b32.cont [5/16] 0.0, 128
  %93 = vxpose.xlu0.b32.cont [6/16] 0.0, 128
  %94 = vxpose.xlu0.b32.cont [7/16] 0.0, 128
  %95 = vxpose.xlu0.b32.cont [8/16] 0.0, 128
  %96 = vxpose.xlu0.b32.cont [9/16] 0.0, 128
  %97 = vxpose.xlu0.b32.cont [10/16] 0.0, 128
  %98 = vxpose.xlu0.b32.cont [11/16] 0.0, 128
  %99 = vxpose.xlu0.b32.cont [12/16] 0.0, 128
  %100 = vxpose.xlu0.b32.cont [13/16] 0.0, 128
  %101 = vxpose.xlu0.b32.cont [14/16] 0.0, 128
  %102 = vxpose.xlu0.b32.cont [15/16] 0.0, 128
  %103 = vxpose.xlu0.b32.end [16/16] 0.0, 128
  %v104 = vpop.trf.xlu0
  %v105 = vpop.trf.xlu0
  %v106 = vpop.trf.xlu0
  %v107 = vpop.trf.xlu0
  %v108 = vpop.trf.xlu0
  %v109 = vpop.trf.xlu0
  %v110 = vpop.trf.xlu0
  %v111 = vpop.trf.xlu0
  %v112 = vpop.trf.xlu0
  %v113 = vpop.trf.xlu0
  %v114 = vpop.trf.xlu0
  %v115 = vpop.trf.xlu0
  %v116 = vpop.trf.xlu0
  %v117 = vpop.trf.xlu0
  %v118 = vpop.trf.xlu0
  %v119 = vpop.trf.xlu0
  %120 = vxpose.xlu0.b32.start [1/16] %v32, 128
  %121 = vxpose.xlu0.b32.cont [2/16] %v33, 128
  %122 = vxpose.xlu0.b32.cont [3/16] %v34, 128
  %123 = vxpose.xlu0.b32.cont [4/16] %v35, 128
  %124 = vxpose.xlu0.b32.cont [5/16] 0.0, 128
  %125 = vxpose.xlu0.b32.cont [6/16] 0.0, 128
  %126 = vxpose.xlu0.b32.cont [7/16] 0.0, 128
  %127 = vxpose.xlu0.b32.cont [8/16] 0.0, 128
  %128 = vxpose.xlu0.b32.cont [9/16] 0.0, 128
  %129 = vxpose.xlu0.b32.cont [10/16] 0.0, 128
  %130 = vxpose.xlu0.b32.cont [11/16] 0.0, 128
  %131 = vxpose.xlu0.b32.cont [12/16] 0.0, 128
  %132 = vxpose.xlu0.b32.cont [13/16] 0.0, 128
  %133 = vxpose.xlu0.b32.cont [14/16] 0.0, 128
  %134 = vxpose.xlu0.b32.cont [15/16] 0.0, 128
  %135 = vxpose.xlu0.b32.end [16/16] 0.0, 128
  %v136 = vpop.trf.xlu0
  %v137 = vpop.trf.xlu0
  %v138 = vpop.trf.xlu0
  %v139 = vpop.trf.xlu0
  %v140 = vpop.trf.xlu0
  %v141 = vpop.trf.xlu0
  %v142 = vpop.trf.xlu0
  %v143 = vpop.trf.xlu0
  %v144 = vpop.trf.xlu0
  %v145 = vpop.trf.xlu0
  %v146 = vpop.trf.xlu0
  %v147 = vpop.trf.xlu0
  %v148 = vpop.trf.xlu0
  %v149 = vpop.trf.xlu0
  %v150 = vpop.trf.xlu0
  %v151 = vpop.trf.xlu0
  %152 = vxpose.xlu0.b32.start [1/16] %v36, 128
  %153 = vxpose.xlu0.b32.cont [2/16] %v37, 128
  %154 = vxpose.xlu0.b32.cont [3/16] %v38, 128
  %155 = vxpose.xlu0.b32.cont [4/16] %v39, 128
  %156 = vxpose.xlu0.b32.cont [5/16] 0.0, 128
  %157 = vxpose.xlu0.b32.cont [6/16] 0.0, 128
  %158 = vxpose.xlu0.b32.cont [7/16] 0.0, 128
  %159 = vxpose.xlu0.b32.cont [8/16] 0.0, 128
  %160 = vxpose.xlu0.b32.cont [9/16] 0.0, 128
  %161 = vxpose.xlu0.b32.cont [10/16] 0.0, 128
  %162 = vxpose.xlu0.b32.cont [11/16] 0.0, 128
  %163 = vxpose.xlu0.b32.cont [12/16] 0.0, 128
  %164 = vxpose.xlu0.b32.cont [13/16] 0.0, 128
  %165 = vxpose.xlu0.b32.cont [14/16] 0.0, 128
  %166 = vxpose.xlu0.b32.cont [15/16] 0.0, 128
  %167 = vxpose.xlu0.b32.end [16/16] 0.0, 128
  %v168 = vpop.trf.xlu0
  %v169 = vpop.trf.xlu0
  %v170 = vpop.trf.xlu0
  %v171 = vpop.trf.xlu0
  %v172 = vpop.trf.xlu0
  %v173 = vpop.trf.xlu0
  %v174 = vpop.trf.xlu0
  %v175 = vpop.trf.xlu0
  %v176 = vpop.trf.xlu0
  %v177 = vpop.trf.xlu0
  %v178 = vpop.trf.xlu0
  %v179 = vpop.trf.xlu0
  %v180 = vpop.trf.xlu0
  %v181 = vpop.trf.xlu0
  %v182 = vpop.trf.xlu0
  %v183 = vpop.trf.xlu0
  %184 = vxpose.xlu0.b32.start [1/16] %v40, 128
  %185 = vxpose.xlu0.b32.cont [2/16] %v41, 128
  %186 = vxpose.xlu0.b32.cont [3/16] %v42, 128
  %187 = vxpose.xlu0.b32.cont [4/16] %v43, 128
  %188 = vxpose.xlu0.b32.cont [5/16] 0.0, 128
  %189 = vxpose.xlu0.b32.cont [6/16] 0.0, 128
  %190 = vxpose.xlu0.b32.cont [7/16] 0.0, 128
  %191 = vxpose.xlu0.b32.cont [8/16] 0.0, 128
  %192 = vxpose.xlu0.b32.cont [9/16] 0.0, 128
  %193 = vxpose.xlu0.b32.cont [10/16] 0.0, 128
  %194 = vxpose.xlu0.b32.cont [11/16] 0.0, 128
  %195 = vxpose.xlu0.b32.cont [12/16] 0.0, 128
  %196 = vxpose.xlu0.b32.cont [13/16] 0.0, 128
  %197 = vxpose.xlu0.b32.cont [14/16] 0.0, 128
  %198 = vxpose.xlu0.b32.cont [15/16] 0.0, 128
  %199 = vxpose.xlu0.b32.end [16/16] 0.0, 128
  %v200 = vpop.trf.xlu0
  %v201 = vpop.trf.xlu0
  %v202 = vpop.trf.xlu0
  %v203 = vpop.trf.xlu0
  %v204 = vpop.trf.xlu0
  %v205 = vpop.trf.xlu0
  %v206 = vpop.trf.xlu0
  %v207 = vpop.trf.xlu0
  %v208 = vpop.trf.xlu0
  %v209 = vpop.trf.xlu0
  %v210 = vpop.trf.xlu0
  %v211 = vpop.trf.xlu0
  %v212 = vpop.trf.xlu0
  %v213 = vpop.trf.xlu0
  %v214 = vpop.trf.xlu0
  %v215 = vpop.trf.xlu0
  %216 = vxpose.xlu0.b32.start [1/16] %v44, 128
  %217 = vxpose.xlu0.b32.cont [2/16] %v45, 128
  %218 = vxpose.xlu0.b32.cont [3/16] %v46, 128
  %219 = vxpose.xlu0.b32.cont [4/16] %v47, 128
  %220 = vxpose.xlu0.b32.cont [5/16] 0.0, 128
  %221 = vxpose.xlu0.b32.cont [6/16] 0.0, 128
  %222 = vxpose.xlu0.b32.cont [7/16] 0.0, 128
  %223 = vxpose.xlu0.b32.cont [8/16] 0.0, 128
  %224 = vxpose.xlu0.b32.cont [9/16] 0.0, 128
  %225 = vxpose.xlu0.b32.cont [10/16] 0.0, 128
  %226 = vxpose.xlu0.b32.cont [11/16] 0.0, 128
  %227 = vxpose.xlu0.b32.cont [12/16] 0.0, 128
  %228 = vxpose.xlu0.b32.cont [13/16] 0.0, 128
  %229 = vxpose.xlu0.b32.cont [14/16] 0.0, 128
  %230 = vxpose.xlu0.b32.cont [15/16] 0.0, 128
  %231 = vxpose.xlu0.b32.end [16/16] 0.0, 128
  %v232 = vpop.trf.xlu0
  %v233 = vpop.trf.xlu0
  %v234 = vpop.trf.xlu0
  %v235 = vpop.trf.xlu0
  %v236 = vpop.trf.xlu0
  %v237 = vpop.trf.xlu0
  %v238 = vpop.trf.xlu0
  %v239 = vpop.trf.xlu0
  %v240 = vpop.trf.xlu0
  %v241 = vpop.trf.xlu0
  %v242 = vpop.trf.xlu0
  %v243 = vpop.trf.xlu0
  %v244 = vpop.trf.xlu0
  %v245 = vpop.trf.xlu0
  %v246 = vpop.trf.xlu0
  %v247 = vpop.trf.xlu0
  %248 = vxpose.xlu0.b32.start [1/16] %v48, 128
  %249 = vxpose.xlu0.b32.cont [2/16] %v49, 128
  %250 = vxpose.xlu0.b32.cont [3/16] %v50, 128
  %251 = vxpose.xlu0.b32.cont [4/16] %v51, 128
  %252 = vxpose.xlu0.b32.cont [5/16] 0.0, 128
  %253 = vxpose.xlu0.b32.cont [6/16] 0.0, 128
  %254 = vxpose.xlu0.b32.cont [7/16] 0.0, 128
  %255 = vxpose.xlu0.b32.cont [8/16] 0.0, 128
  %256 = vxpose.xlu0.b32.cont [9/16] 0.0, 128
  %257 = vxpose.xlu0.b32.cont [10/16] 0.0, 128
  %258 = vxpose.xlu0.b32.cont [11/16] 0.0, 128
  %259 = vxpose.xlu0.b32.cont [12/16] 0.0, 128
  %260 = vxpose.xlu0.b32.cont [13/16] 0.0, 128
  %261 = vxpose.xlu0.b32.cont [14/16] 0.0, 128
  %262 = vxpose.xlu0.b32.cont [15/16] 0.0, 128
  %263 = vxpose.xlu0.b32.end [16/16] 0.0, 128
  %v264 = vpop.trf.xlu0
  %v265 = vpop.trf.xlu0
  %v266 = vpop.trf.xlu0
  %v267 = vpop.trf.xlu0
  %v268 = vpop.trf.xlu0
  %v269 = vpop.trf.xlu0
  %v270 = vpop.trf.xlu0
  %v271 = vpop.trf.xlu0
  %v272 = vpop.trf.xlu0
  %v273 = vpop.trf.xlu0
  %v274 = vpop.trf.xlu0
  %v275 = vpop.trf.xlu0
  %v276 = vpop.trf.xlu0
  %v277 = vpop.trf.xlu0
  %v278 = vpop.trf.xlu0
  %v279 = vpop.trf.xlu0
  %280 = vxpose.xlu0.b32.start [1/16] %v52, 128
  %281 = vxpose.xlu0.b32.cont [2/16] %v53, 128
  %282 = vxpose.xlu0.b32.cont [3/16] %v54, 128
  %283 = vxpose.xlu0.b32.cont [4/16] %v55, 128
  %284 = vxpose.xlu0.b32.cont [5/16] 0.0, 128
  %285 = vxpose.xlu0.b32.cont [6/16] 0.0, 128
  %286 = vxpose.xlu0.b32.cont [7/16] 0.0, 128
  %287 = vxpose.xlu0.b32.cont [8/16] 0.0, 128
  %288 = vxpose.xlu0.b32.cont [9/16] 0.0, 128
  %289 = vxpose.xlu0.b32.cont [10/16] 0.0, 128
  %290 = vxpose.xlu0.b32.cont [11/16] 0.0, 128
  %291 = vxpose.xlu0.b32.cont [12/16] 0.0, 128
  %292 = vxpose.xlu0.b32.cont [13/16] 0.0, 128
  %293 = vxpose.xlu0.b32.cont [14/16] 0.0, 128
  %294 = vxpose.xlu0.b32.cont [15/16] 0.0, 128
  %295 = vxpose.xlu0.b32.end [16/16] 0.0, 128
  %v296 = vpop.trf.xlu0
  %v297 = vpop.trf.xlu0
  %v298 = vpop.trf.xlu0
  %v299 = vpop.trf.xlu0
  %v300 = vpop.trf.xlu0
  %v301 = vpop.trf.xlu0
  %v302 = vpop.trf.xlu0
  %v303 = vpop.trf.xlu0
  %v304 = vpop.trf.xlu0
  %v305 = vpop.trf.xlu0
  %v306 = vpop.trf.xlu0
  %v307 = vpop.trf.xlu0
  %v308 = vpop.trf.xlu0
  %v309 = vpop.trf.xlu0
  %v310 = vpop.trf.xlu0
  %v311 = vpop.trf.xlu0
  %v312 = vpack.c.bf16 %v73, %v72
  %v313 = vpack.c.bf16 %v105, %v104
  %v314 = vpack.c.bf16 %v137, %v136
  %v315 = vpack.c.bf16 %v169, %v168
  %v316 = vpack.c.bf16 %v201, %v200
  %v317 = vpack.c.bf16 %v233, %v232
  %v318 = vpack.c.bf16 %v265, %v264
  %v319 = vpack.c.bf16 %v297, %v296
  %v320 = vld [vmem:[%s2] sm:$0xf]
  %v321 = vld [vmem:[%s2 + $0x4] sm:$0xf]
  %v322 = vld [vmem:[%s2 + $0x8] sm:$0xf]
  %v323 = vld [vmem:[%s2 + $0xc] sm:$0xf]
  %v324 = vld [vmem:[%s3] sm:$0x1]
  %v326 = vperm.slane %v324, 0
  %v332 = vunpack.c.l.b16 %v320
  %v333 = vunpack.c.l.b16 %v321
  %v334 = vunpack.c.l.b16 %v322
  %v335 = vunpack.c.l.b16 %v323
  %v336 = vpack.c.b16 %v333, %v332
  %v337 = vpack.c.b16 %v335, %v334
  %vm340 = vcmask 261120
  %v342 = vsel %vm340, %v312, 0
  %v345 = vsel %vm340, %v313, 0
  %v348 = vsel %vm340, %v314, 0
  %v351 = vsel %vm340, %v315, 0
  %v354 = vsel %vm340, %v316, 0
  %v357 = vsel %vm340, %v317, 0
  %v360 = vsel %vm340, %v318, 0
  %v363 = vsel %vm340, %v319, 0
  %365 = vmatpush.bf16.msra.mxu0 0
  %366 = vmatpush.bf16.msra.mxu0 0
  %367 = vmatpush.bf16.msra.mxu0 0
  %368 = vmatpush.bf16.msra.mxu0 0
  %369 = vmatpush.bf16.msra.mxu0 0
  %370 = vmatpush.bf16.msra.mxu0 0
  %371 = vmatpush.bf16.msra.mxu0 %v337
  %372 = vmatpush.bf16.msra.mxu0 %v336
  %373 = vmatmul.bf16.gmra.mxu0 %v342
  %v374 = vpop.f32.mrf.mxu0
  %v375 = vadd.f32 %v326, %v374
  %v376 = vpop.f32.mrf.mxu0
  %v377 = vadd.f32 %v326, %v376
  %378 = vmatmul.bf16.gmra.mxu0 %v345
  %v379 = vpop.f32.mrf.mxu0
  %v380 = vadd.f32 %v326, %v379
  %v381 = vpop.f32.mrf.mxu0
  %v382 = vadd.f32 %v326, %v381
  %383 = vmatmul.bf16.gmra.mxu0 %v348
  %v384 = vpop.f32.mrf.mxu0
  %v385 = vadd.f32 %v326, %v384
  %v386 = vpop.f32.mrf.mxu0
  %v387 = vadd.f32 %v326, %v386
  %388 = vmatmul.bf16.gmra.mxu0 %v351
  %v389 = vpop.f32.mrf.mxu0
  %v390 = vadd.f32 %v326, %v389
  %v391 = vpop.f32.mrf.mxu0
  %v392 = vadd.f32 %v326, %v391
  %393 = vmatmul.bf16.gmra.mxu0 %v354
  %v394 = vpop.f32.mrf.mxu0
  %v395 = vadd.f32 %v326, %v394
  %v396 = vpop.f32.mrf.mxu0
  %v397 = vadd.f32 %v326, %v396
  %398 = vmatmul.bf16.gmra.mxu0 %v357
  %v399 = vpop.f32.mrf.mxu0
  %v400 = vadd.f32 %v326, %v399
  %v401 = vpop.f32.mrf.mxu0
  %v402 = vadd.f32 %v326, %v401
  %403 = vmatmul.bf16.gmra.mxu0 %v360
  %v404 = vpop.f32.mrf.mxu0
  %v405 = vadd.f32 %v326, %v404
  %v406 = vpop.f32.mrf.mxu0
  %v407 = vadd.f32 %v326, %v406
  %408 = vmatmul.bf16.gmra.mxu0 %v363
  %v409 = vpop.f32.mrf.mxu0
  %v410 = vadd.f32 %v326, %v409
  %v411 = vpop.f32.mrf.mxu0
  %v412 = vadd.f32 %v326, %v411
  %413 = vdwg.mxu0
  %430 = vrot.lane.b32.xlu0 %v375, 120
  %v431 = vpop.permute.xlu0 %430
  %432 = vrot.lane.b32.xlu0 %v377, 120
  %v433 = vpop.permute.xlu0 %432
  %434 = vrot.lane.b32.xlu0 %v380, 120
  %v435 = vpop.permute.xlu0 %434
  %436 = vrot.lane.b32.xlu0 %v382, 120
  %v437 = vpop.permute.xlu0 %436
  %438 = vrot.lane.b32.xlu0 %v385, 120
  %v439 = vpop.permute.xlu0 %438
  %440 = vrot.lane.b32.xlu0 %v387, 120
  %v441 = vpop.permute.xlu0 %440
  %442 = vrot.lane.b32.xlu0 %v390, 120
  %v443 = vpop.permute.xlu0 %442
  %444 = vrot.lane.b32.xlu0 %v392, 120
  %v445 = vpop.permute.xlu0 %444
  %446 = vrot.lane.b32.xlu0 %v395, 120
  %v447 = vpop.permute.xlu0 %446
  %448 = vrot.lane.b32.xlu0 %v397, 120
  %v449 = vpop.permute.xlu0 %448
  %450 = vrot.lane.b32.xlu0 %v400, 120
  %v451 = vpop.permute.xlu0 %450
  %452 = vrot.lane.b32.xlu0 %v402, 120
  %v453 = vpop.permute.xlu0 %452
  %454 = vrot.lane.b32.xlu0 %v405, 120
  %v455 = vpop.permute.xlu0 %454
  %456 = vrot.lane.b32.xlu0 %v407, 120
  %v457 = vpop.permute.xlu0 %456
  %458 = vrot.lane.b32.xlu0 %v410, 120
  %v459 = vpop.permute.xlu0 %458
  %460 = vrot.lane.b32.xlu0 %v412, 120
  %v461 = vpop.permute.xlu0 %460
  %462 = vrot.lane.b32.xlu0 %v375, 112
  %v463 = vpop.permute.xlu0 %462
  %464 = vrot.lane.b32.xlu0 %v377, 112
  %v465 = vpop.permute.xlu0 %464
  %466 = vrot.lane.b32.xlu0 %v380, 112
  %v467 = vpop.permute.xlu0 %466
  %468 = vrot.lane.b32.xlu0 %v382, 112
  %v469 = vpop.permute.xlu0 %468
  %470 = vrot.lane.b32.xlu0 %v385, 112
  %v471 = vpop.permute.xlu0 %470
  %472 = vrot.lane.b32.xlu0 %v387, 112
  %v473 = vpop.permute.xlu0 %472
  %474 = vrot.lane.b32.xlu0 %v390, 112
  %v475 = vpop.permute.xlu0 %474
  %476 = vrot.lane.b32.xlu0 %v392, 112
  %v477 = vpop.permute.xlu0 %476
  %478 = vrot.lane.b32.xlu0 %v395, 112
  %v479 = vpop.permute.xlu0 %478
  %480 = vrot.lane.b32.xlu0 %v397, 112
  %v481 = vpop.permute.xlu0 %480
  %482 = vrot.lane.b32.xlu0 %v400, 112
  %v483 = vpop.permute.xlu0 %482
  %484 = vrot.lane.b32.xlu0 %v402, 112
  %v485 = vpop.permute.xlu0 %484
  %486 = vrot.lane.b32.xlu0 %v405, 112
  %v487 = vpop.permute.xlu0 %486
  %488 = vrot.lane.b32.xlu0 %v407, 112
  %v489 = vpop.permute.xlu0 %488
  %490 = vrot.lane.b32.xlu0 %v410, 112
  %v491 = vpop.permute.xlu0 %490
  %492 = vrot.lane.b32.xlu0 %v412, 112
  %v493 = vpop.permute.xlu0 %492
  %494 = vrot.lane.b32.xlu0 %v375, 104
  %v495 = vpop.permute.xlu0 %494
  %496 = vrot.lane.b32.xlu0 %v377, 104
  %v497 = vpop.permute.xlu0 %496
  %498 = vrot.lane.b32.xlu0 %v380, 104
  %v499 = vpop.permute.xlu0 %498
  %500 = vrot.lane.b32.xlu0 %v382, 104
  %v501 = vpop.permute.xlu0 %500
  %502 = vrot.lane.b32.xlu0 %v385, 104
  %v503 = vpop.permute.xlu0 %502
  %504 = vrot.lane.b32.xlu0 %v387, 104
  %v505 = vpop.permute.xlu0 %504
  %506 = vrot.lane.b32.xlu0 %v390, 104
  %v507 = vpop.permute.xlu0 %506
  %508 = vrot.lane.b32.xlu0 %v392, 104
  %v509 = vpop.permute.xlu0 %508
  %510 = vrot.lane.b32.xlu0 %v395, 104
  %v511 = vpop.permute.xlu0 %510
  %512 = vrot.lane.b32.xlu0 %v397, 104
  %v513 = vpop.permute.xlu0 %512
  %514 = vrot.lane.b32.xlu0 %v400, 104
  %v515 = vpop.permute.xlu0 %514
  %516 = vrot.lane.b32.xlu0 %v402, 104
  %v517 = vpop.permute.xlu0 %516
  %518 = vrot.lane.b32.xlu0 %v405, 104
  %v519 = vpop.permute.xlu0 %518
  %520 = vrot.lane.b32.xlu0 %v407, 104
  %v521 = vpop.permute.xlu0 %520
  %522 = vrot.lane.b32.xlu0 %v410, 104
  %v523 = vpop.permute.xlu0 %522
  %524 = vrot.lane.b32.xlu0 %v412, 104
  %v525 = vpop.permute.xlu0 %524
  %526 = vrot.lane.b32.xlu0 %v375, 96
  %v527 = vpop.permute.xlu0 %526
  %528 = vrot.lane.b32.xlu0 %v377, 96
  %v529 = vpop.permute.xlu0 %528
  %vm530 = vcmask 64512
  %v531 = vsel %vm530, %v375, 0
  %v533 = vsel %vm530, %v377, 0
  %v535 = vsel %vm530, %v527, 0
  %v537 = vsel %vm530, %v529, 0
  %539 = vmatpush.xpose.msra.mxu0 0.0
  %540 = vmatpush.xpose.msra.mxu0 0.0
  %541 = vmatpush.xpose.msra.mxu0 0.0
  %542 = vmatpush.xpose.msra.mxu0 0.0
  %543 = vmatpush.xpose.msra.mxu0 0.0
  %544 = vmatpush.xpose.msra.mxu0 0.0
  %545 = vmatpush.xpose.msra.mxu0 0.0
  %546 = vmatpush.xpose.msra.mxu0 0.0
  %547 = vmatpush.xpose.msra.mxu0 0.0
  %548 = vmatpush.xpose.msra.mxu0 0.0
  %549 = vmatpush.xpose.msra.mxu0 0.0
  %550 = vmatpush.xpose.msra.mxu0 0.0
  %551 = vmatpush.xpose.msra.mxu0 0.0
  %552 = vmatpush.xpose.msra.mxu0 0.0
  %553 = vmatpush.xpose.msra.mxu0 %v537
  %554 = vmatpush.xpose.msra.mxu0 %v535
  %555 = vmatmul.f32.gmra.mxu0 %v531
  %v556 = vpop.f32.mrf.mxu0
  %v557 = vadd.f32 0.0, %v556
  %558 = vmatmul.f32.gmra.mxu0 %v533
  %v559 = vpop.f32.mrf.mxu0
  %v560 = vadd.f32 0.0, %v559
  %561 = vdwg.mxu0
  %562 = vrot.lane.b32.xlu0 %v380, 96
  %v563 = vpop.permute.xlu0 %562
  %564 = vrot.lane.b32.xlu0 %v382, 96
  %v565 = vpop.permute.xlu0 %564
  %v566 = vsel %vm530, %v380, 0
  %v568 = vsel %vm530, %v382, 0
  %v570 = vsel %vm530, %v563, 0
  %v572 = vsel %vm530, %v565, 0
  %574 = vmatpush.xpose.msra.mxu0 0.0
  %575 = vmatpush.xpose.msra.mxu0 0.0
  %576 = vmatpush.xpose.msra.mxu0 0.0
  %577 = vmatpush.xpose.msra.mxu0 0.0
  %578 = vmatpush.xpose.msra.mxu0 0.0
  %579 = vmatpush.xpose.msra.mxu0 0.0
  %580 = vmatpush.xpose.msra.mxu0 0.0
  %581 = vmatpush.xpose.msra.mxu0 0.0
  %582 = vmatpush.xpose.msra.mxu0 0.0
  %583 = vmatpush.xpose.msra.mxu0 0.0
  %584 = vmatpush.xpose.msra.mxu0 0.0
  %585 = vmatpush.xpose.msra.mxu0 0.0
  %586 = vmatpush.xpose.msra.mxu0 0.0
  %587 = vmatpush.xpose.msra.mxu0 0.0
  %588 = vmatpush.xpose.msra.mxu0 %v572
  %589 = vmatpush.xpose.msra.mxu0 %v570
  %590 = vmatmul.f32.gmra.mxu0 %v566
  %v591 = vpop.f32.mrf.mxu0
  %v592 = vadd.f32 0.0, %v591
  %593 = vmatmul.f32.gmra.mxu0 %v568
  %v594 = vpop.f32.mrf.mxu0
  %v595 = vadd.f32 0.0, %v594
  %596 = vdwg.mxu0
  %597 = vrot.lane.b32.xlu0 %v385, 96
  %v598 = vpop.permute.xlu0 %597
  %599 = vrot.lane.b32.xlu0 %v387, 96
  %v600 = vpop.permute.xlu0 %599
  %v601 = vsel %vm530, %v385, 0
  %v603 = vsel %vm530, %v387, 0
  %v605 = vsel %vm530, %v598, 0
  %v607 = vsel %vm530, %v600, 0
  %609 = vmatpush.xpose.msra.mxu0 0.0
  %610 = vmatpush.xpose.msra.mxu0 0.0
  %611 = vmatpush.xpose.msra.mxu0 0.0
  %612 = vmatpush.xpose.msra.mxu0 0.0
  %613 = vmatpush.xpose.msra.mxu0 0.0
  %614 = vmatpush.xpose.msra.mxu0 0.0
  %615 = vmatpush.xpose.msra.mxu0 0.0
  %616 = vmatpush.xpose.msra.mxu0 0.0
  %617 = vmatpush.xpose.msra.mxu0 0.0
  %618 = vmatpush.xpose.msra.mxu0 0.0
  %619 = vmatpush.xpose.msra.mxu0 0.0
  %620 = vmatpush.xpose.msra.mxu0 0.0
  %621 = vmatpush.xpose.msra.mxu0 0.0
  %622 = vmatpush.xpose.msra.mxu0 0.0
  %623 = vmatpush.xpose.msra.mxu0 %v607
  %624 = vmatpush.xpose.msra.mxu0 %v605
  %625 = vmatmul.f32.gmra.mxu0 %v601
  %v626 = vpop.f32.mrf.mxu0
  %v627 = vadd.f32 0.0, %v626
  %628 = vmatmul.f32.gmra.mxu0 %v603
  %v629 = vpop.f32.mrf.mxu0
  %v630 = vadd.f32 0.0, %v629
  %631 = vdwg.mxu0
  %632 = vrot.lane.b32.xlu0 %v390, 96
  %v633 = vpop.permute.xlu0 %632
  %634 = vrot.lane.b32.xlu0 %v392, 96
  %v635 = vpop.permute.xlu0 %634
  %v636 = vsel %vm530, %v390, 0
  %v638 = vsel %vm530, %v392, 0
  %v640 = vsel %vm530, %v633, 0
  %v642 = vsel %vm530, %v635, 0
  %644 = vmatpush.xpose.msra.mxu0 0.0
  %645 = vmatpush.xpose.msra.mxu0 0.0
  %646 = vmatpush.xpose.msra.mxu0 0.0
  %647 = vmatpush.xpose.msra.mxu0 0.0
  %648 = vmatpush.xpose.msra.mxu0 0.0
  %649 = vmatpush.xpose.msra.mxu0 0.0
  %650 = vmatpush.xpose.msra.mxu0 0.0
  %651 = vmatpush.xpose.msra.mxu0 0.0
  %652 = vmatpush.xpose.msra.mxu0 0.0
  %653 = vmatpush.xpose.msra.mxu0 0.0
  %654 = vmatpush.xpose.msra.mxu0 0.0
  %655 = vmatpush.xpose.msra.mxu0 0.0
  %656 = vmatpush.xpose.msra.mxu0 0.0
  %657 = vmatpush.xpose.msra.mxu0 0.0
  %658 = vmatpush.xpose.msra.mxu0 %v642
  %659 = vmatpush.xpose.msra.mxu0 %v640
  %660 = vmatmul.f32.gmra.mxu0 %v636
  %v661 = vpop.f32.mrf.mxu0
  %v662 = vadd.f32 0.0, %v661
  %663 = vmatmul.f32.gmra.mxu0 %v638
  %v664 = vpop.f32.mrf.mxu0
  %v665 = vadd.f32 0.0, %v664
  %666 = vdwg.mxu0
  %667 = vrot.lane.b32.xlu0 %v395, 96
  %v668 = vpop.permute.xlu0 %667
  %669 = vrot.lane.b32.xlu0 %v397, 96
  %v670 = vpop.permute.xlu0 %669
  %v671 = vsel %vm530, %v395, 0
  %v673 = vsel %vm530, %v397, 0
  %v675 = vsel %vm530, %v668, 0
  %v677 = vsel %vm530, %v670, 0
  %679 = vmatpush.xpose.msra.mxu0 0.0
  %680 = vmatpush.xpose.msra.mxu0 0.0
  %681 = vmatpush.xpose.msra.mxu0 0.0
  %682 = vmatpush.xpose.msra.mxu0 0.0
  %683 = vmatpush.xpose.msra.mxu0 0.0
  %684 = vmatpush.xpose.msra.mxu0 0.0
  %685 = vmatpush.xpose.msra.mxu0 0.0
  %686 = vmatpush.xpose.msra.mxu0 0.0
  %687 = vmatpush.xpose.msra.mxu0 0.0
  %688 = vmatpush.xpose.msra.mxu0 0.0
  %689 = vmatpush.xpose.msra.mxu0 0.0
  %690 = vmatpush.xpose.msra.mxu0 0.0
  %691 = vmatpush.xpose.msra.mxu0 0.0
  %692 = vmatpush.xpose.msra.mxu0 0.0
  %693 = vmatpush.xpose.msra.mxu0 %v677
  %694 = vmatpush.xpose.msra.mxu0 %v675
  %695 = vmatmul.f32.gmra.mxu0 %v671
  %v696 = vpop.f32.mrf.mxu0
  %v697 = vadd.f32 0.0, %v696
  %698 = vmatmul.f32.gmra.mxu0 %v673
  %v699 = vpop.f32.mrf.mxu0
  %v700 = vadd.f32 0.0, %v699
  %701 = vdwg.mxu0
  %702 = vrot.lane.b32.xlu0 %v400, 96
  %v703 = vpop.permute.xlu0 %702
  %704 = vrot.lane.b32.xlu0 %v402, 96
  %v705 = vpop.permute.xlu0 %704
  %v706 = vsel %vm530, %v400, 0
  %v708 = vsel %vm530, %v402, 0
  %v710 = vsel %vm530, %v703, 0
  %v712 = vsel %vm530, %v705, 0
  %714 = vmatpush.xpose.msra.mxu0 0.0
  %715 = vmatpush.xpose.msra.mxu0 0.0
  %716 = vmatpush.xpose.msra.mxu0 0.0
  %717 = vmatpush.xpose.msra.mxu0 0.0
  %718 = vmatpush.xpose.msra.mxu0 0.0
  %719 = vmatpush.xpose.msra.mxu0 0.0
  %720 = vmatpush.xpose.msra.mxu0 0.0
  %721 = vmatpush.xpose.msra.mxu0 0.0
  %722 = vmatpush.xpose.msra.mxu0 0.0
  %723 = vmatpush.xpose.msra.mxu0 0.0
  %724 = vmatpush.xpose.msra.mxu0 0.0
  %725 = vmatpush.xpose.msra.mxu0 0.0
  %726 = vmatpush.xpose.msra.mxu0 0.0
  %727 = vmatpush.xpose.msra.mxu0 0.0
  %728 = vmatpush.xpose.msra.mxu0 %v712
  %729 = vmatpush.xpose.msra.mxu0 %v710
  %730 = vmatmul.f32.gmra.mxu0 %v706
  %v731 = vpop.f32.mrf.mxu0
  %v732 = vadd.f32 0.0, %v731
  %733 = vmatmul.f32.gmra.mxu0 %v708
  %v734 = vpop.f32.mrf.mxu0
  %v735 = vadd.f32 0.0, %v734
  %736 = vdwg.mxu0
  %737 = vrot.lane.b32.xlu0 %v405, 96
  %v738 = vpop.permute.xlu0 %737
  %739 = vrot.lane.b32.xlu0 %v407, 96
  %v740 = vpop.permute.xlu0 %739
  %v741 = vsel %vm530, %v405, 0
  %v743 = vsel %vm530, %v407, 0
  %v745 = vsel %vm530, %v738, 0
  %v747 = vsel %vm530, %v740, 0
  %749 = vmatpush.xpose.msra.mxu0 0.0
  %750 = vmatpush.xpose.msra.mxu0 0.0
  %751 = vmatpush.xpose.msra.mxu0 0.0
  %752 = vmatpush.xpose.msra.mxu0 0.0
  %753 = vmatpush.xpose.msra.mxu0 0.0
  %754 = vmatpush.xpose.msra.mxu0 0.0
  %755 = vmatpush.xpose.msra.mxu0 0.0
  %756 = vmatpush.xpose.msra.mxu0 0.0
  %757 = vmatpush.xpose.msra.mxu0 0.0
  %758 = vmatpush.xpose.msra.mxu0 0.0
  %759 = vmatpush.xpose.msra.mxu0 0.0
  %760 = vmatpush.xpose.msra.mxu0 0.0
  %761 = vmatpush.xpose.msra.mxu0 0.0
  %762 = vmatpush.xpose.msra.mxu0 0.0
  %763 = vmatpush.xpose.msra.mxu0 %v747
  %764 = vmatpush.xpose.msra.mxu0 %v745
  %765 = vmatmul.f32.gmra.mxu0 %v741
  %v766 = vpop.f32.mrf.mxu0
  %v767 = vadd.f32 0.0, %v766
  %768 = vmatmul.f32.gmra.mxu0 %v743
  %v769 = vpop.f32.mrf.mxu0
  %v770 = vadd.f32 0.0, %v769
  %771 = vdwg.mxu0
  %772 = vrot.lane.b32.xlu0 %v410, 96
  %v773 = vpop.permute.xlu0 %772
  %774 = vrot.lane.b32.xlu0 %v412, 96
  %v775 = vpop.permute.xlu0 %774
  %v776 = vsel %vm530, %v410, 0
  %v778 = vsel %vm530, %v412, 0
  %v780 = vsel %vm530, %v773, 0
  %v782 = vsel %vm530, %v775, 0
  %784 = vmatpush.xpose.msra.mxu0 0.0
  %785 = vmatpush.xpose.msra.mxu0 0.0
  %786 = vmatpush.xpose.msra.mxu0 0.0
  %787 = vmatpush.xpose.msra.mxu0 0.0
  %788 = vmatpush.xpose.msra.mxu0 0.0
  %789 = vmatpush.xpose.msra.mxu0 0.0
  %790 = vmatpush.xpose.msra.mxu0 0.0
  %791 = vmatpush.xpose.msra.mxu0 0.0
  %792 = vmatpush.xpose.msra.mxu0 0.0
  %793 = vmatpush.xpose.msra.mxu0 0.0
  %794 = vmatpush.xpose.msra.mxu0 0.0
  %795 = vmatpush.xpose.msra.mxu0 0.0
  %796 = vmatpush.xpose.msra.mxu0 0.0
  %797 = vmatpush.xpose.msra.mxu0 0.0
  %798 = vmatpush.xpose.msra.mxu0 %v782
  %799 = vmatpush.xpose.msra.mxu0 %v780
  %800 = vmatmul.f32.gmra.mxu0 %v776
  %v801 = vpop.f32.mrf.mxu0
  %v802 = vadd.f32 0.0, %v801
  %803 = vmatmul.f32.gmra.mxu0 %v778
  %v804 = vpop.f32.mrf.mxu0
  %v805 = vadd.f32 0.0, %v804
  %806 = vdwg.mxu0
  %807 = vrot.lane.b32.xlu0 %v431, 96
  %v808 = vpop.permute.xlu0 %807
  %809 = vrot.lane.b32.xlu0 %v433, 96
  %v810 = vpop.permute.xlu0 %809
  %v811 = vsel %vm530, %v431, 0
  %v813 = vsel %vm530, %v433, 0
  %v815 = vsel %vm530, %v808, 0
  %v817 = vsel %vm530, %v810, 0
  %819 = vmatpush.xpose.msra.mxu0 0.0
  %820 = vmatpush.xpose.msra.mxu0 0.0
  %821 = vmatpush.xpose.msra.mxu0 0.0
  %822 = vmatpush.xpose.msra.mxu0 0.0
  %823 = vmatpush.xpose.msra.mxu0 0.0
  %824 = vmatpush.xpose.msra.mxu0 0.0
  %825 = vmatpush.xpose.msra.mxu0 0.0
  %826 = vmatpush.xpose.msra.mxu0 0.0
  %827 = vmatpush.xpose.msra.mxu0 0.0
  %828 = vmatpush.xpose.msra.mxu0 0.0
  %829 = vmatpush.xpose.msra.mxu0 0.0
  %830 = vmatpush.xpose.msra.mxu0 0.0
  %831 = vmatpush.xpose.msra.mxu0 0.0
  %832 = vmatpush.xpose.msra.mxu0 0.0
  %833 = vmatpush.xpose.msra.mxu0 %v817
  %834 = vmatpush.xpose.msra.mxu0 %v815
  %835 = vmatmul.f32.gmra.mxu0 %v811
  %v836 = vpop.f32.mrf.mxu0
  %v837 = vadd.f32 0.0, %v836
  %838 = vmatmul.f32.gmra.mxu0 %v813
  %v839 = vpop.f32.mrf.mxu0
  %v840 = vadd.f32 0.0, %v839
  %841 = vdwg.mxu0
  %842 = vrot.lane.b32.xlu0 %v435, 96
  %v843 = vpop.permute.xlu0 %842
  %844 = vrot.lane.b32.xlu0 %v437, 96
  %v845 = vpop.permute.xlu0 %844
  %v846 = vsel %vm530, %v435, 0
  %v848 = vsel %vm530, %v437, 0
  %v850 = vsel %vm530, %v843, 0
  %v852 = vsel %vm530, %v845, 0
  %854 = vmatpush.xpose.msra.mxu0 0.0
  %855 = vmatpush.xpose.msra.mxu0 0.0
  %856 = vmatpush.xpose.msra.mxu0 0.0
  %857 = vmatpush.xpose.msra.mxu0 0.0
  %858 = vmatpush.xpose.msra.mxu0 0.0
  %859 = vmatpush.xpose.msra.mxu0 0.0
  %860 = vmatpush.xpose.msra.mxu0 0.0
  %861 = vmatpush.xpose.msra.mxu0 0.0
  %862 = vmatpush.xpose.msra.mxu0 0.0
  %863 = vmatpush.xpose.msra.mxu0 0.0
  %864 = vmatpush.xpose.msra.mxu0 0.0
  %865 = vmatpush.xpose.msra.mxu0 0.0
  %866 = vmatpush.xpose.msra.mxu0 0.0
  %867 = vmatpush.xpose.msra.mxu0 0.0
  %868 = vmatpush.xpose.msra.mxu0 %v852
  %869 = vmatpush.xpose.msra.mxu0 %v850
  %870 = vmatmul.f32.gmra.mxu0 %v846
  %v871 = vpop.f32.mrf.mxu0
  %v872 = vadd.f32 0.0, %v871
  %873 = vmatmul.f32.gmra.mxu0 %v848
  %v874 = vpop.f32.mrf.mxu0
  %v875 = vadd.f32 0.0, %v874
  %876 = vdwg.mxu0
  %877 = vrot.lane.b32.xlu0 %v439, 96
  %v878 = vpop.permute.xlu0 %877
  %879 = vrot.lane.b32.xlu0 %v441, 96
  %v880 = vpop.permute.xlu0 %879
  %v881 = vsel %vm530, %v439, 0
  %v883 = vsel %vm530, %v441, 0
  %v885 = vsel %vm530, %v878, 0
  %v887 = vsel %vm530, %v880, 0
  %889 = vmatpush.xpose.msra.mxu0 0.0
  %890 = vmatpush.xpose.msra.mxu0 0.0
  %891 = vmatpush.xpose.msra.mxu0 0.0
  %892 = vmatpush.xpose.msra.mxu0 0.0
  %893 = vmatpush.xpose.msra.mxu0 0.0
  %894 = vmatpush.xpose.msra.mxu0 0.0
  %895 = vmatpush.xpose.msra.mxu0 0.0
  %896 = vmatpush.xpose.msra.mxu0 0.0
  %897 = vmatpush.xpose.msra.mxu0 0.0
  %898 = vmatpush.xpose.msra.mxu0 0.0
  %899 = vmatpush.xpose.msra.mxu0 0.0
  %900 = vmatpush.xpose.msra.mxu0 0.0
  %901 = vmatpush.xpose.msra.mxu0 0.0
  %902 = vmatpush.xpose.msra.mxu0 0.0
  %903 = vmatpush.xpose.msra.mxu0 %v887
  %904 = vmatpush.xpose.msra.mxu0 %v885
  %905 = vmatmul.f32.gmra.mxu0 %v881
  %v906 = vpop.f32.mrf.mxu0
  %v907 = vadd.f32 0.0, %v906
  %908 = vmatmul.f32.gmra.mxu0 %v883
  %v909 = vpop.f32.mrf.mxu0
  %v910 = vadd.f32 0.0, %v909
  %911 = vdwg.mxu0
  %912 = vrot.lane.b32.xlu0 %v443, 96
  %v913 = vpop.permute.xlu0 %912
  %914 = vrot.lane.b32.xlu0 %v445, 96
  %v915 = vpop.permute.xlu0 %914
  %v916 = vsel %vm530, %v443, 0
  %v918 = vsel %vm530, %v445, 0
  %v920 = vsel %vm530, %v913, 0
  %v922 = vsel %vm530, %v915, 0
  %924 = vmatpush.xpose.msra.mxu0 0.0
  %925 = vmatpush.xpose.msra.mxu0 0.0
  %926 = vmatpush.xpose.msra.mxu0 0.0
  %927 = vmatpush.xpose.msra.mxu0 0.0
  %928 = vmatpush.xpose.msra.mxu0 0.0
  %929 = vmatpush.xpose.msra.mxu0 0.0
  %930 = vmatpush.xpose.msra.mxu0 0.0
  %931 = vmatpush.xpose.msra.mxu0 0.0
  %932 = vmatpush.xpose.msra.mxu0 0.0
  %933 = vmatpush.xpose.msra.mxu0 0.0
  %934 = vmatpush.xpose.msra.mxu0 0.0
  %935 = vmatpush.xpose.msra.mxu0 0.0
  %936 = vmatpush.xpose.msra.mxu0 0.0
  %937 = vmatpush.xpose.msra.mxu0 0.0
  %938 = vmatpush.xpose.msra.mxu0 %v922
  %939 = vmatpush.xpose.msra.mxu0 %v920
  %940 = vmatmul.f32.gmra.mxu0 %v916
  %v941 = vpop.f32.mrf.mxu0
  %v942 = vadd.f32 0.0, %v941
  %943 = vmatmul.f32.gmra.mxu0 %v918
  %v944 = vpop.f32.mrf.mxu0
  %v945 = vadd.f32 0.0, %v944
  %946 = vdwg.mxu0
  %947 = vrot.lane.b32.xlu0 %v447, 96
  %v948 = vpop.permute.xlu0 %947
  %949 = vrot.lane.b32.xlu0 %v449, 96
  %v950 = vpop.permute.xlu0 %949
  %v951 = vsel %vm530, %v447, 0
  %v953 = vsel %vm530, %v449, 0
  %v955 = vsel %vm530, %v948, 0
  %v957 = vsel %vm530, %v950, 0
  %959 = vmatpush.xpose.msra.mxu0 0.0
  %960 = vmatpush.xpose.msra.mxu0 0.0
  %961 = vmatpush.xpose.msra.mxu0 0.0
  %962 = vmatpush.xpose.msra.mxu0 0.0
  %963 = vmatpush.xpose.msra.mxu0 0.0
  %964 = vmatpush.xpose.msra.mxu0 0.0
  %965 = vmatpush.xpose.msra.mxu0 0.0
  %966 = vmatpush.xpose.msra.mxu0 0.0
  %967 = vmatpush.xpose.msra.mxu0 0.0
  %968 = vmatpush.xpose.msra.mxu0 0.0
  %969 = vmatpush.xpose.msra.mxu0 0.0
  %970 = vmatpush.xpose.msra.mxu0 0.0
  %971 = vmatpush.xpose.msra.mxu0 0.0
  %972 = vmatpush.xpose.msra.mxu0 0.0
  %973 = vmatpush.xpose.msra.mxu0 %v957
  %974 = vmatpush.xpose.msra.mxu0 %v955
  %975 = vmatmul.f32.gmra.mxu0 %v951
  %v976 = vpop.f32.mrf.mxu0
  %v977 = vadd.f32 0.0, %v976
  %978 = vmatmul.f32.gmra.mxu0 %v953
  %v979 = vpop.f32.mrf.mxu0
  %v980 = vadd.f32 0.0, %v979
  %981 = vdwg.mxu0
  %982 = vrot.lane.b32.xlu0 %v451, 96
  %v983 = vpop.permute.xlu0 %982
  %984 = vrot.lane.b32.xlu0 %v453, 96
  %v985 = vpop.permute.xlu0 %984
  %v986 = vsel %vm530, %v451, 0
  %v988 = vsel %vm530, %v453, 0
  %v990 = vsel %vm530, %v983, 0
  %v992 = vsel %vm530, %v985, 0
  %994 = vmatpush.xpose.msra.mxu0 0.0
  %995 = vmatpush.xpose.msra.mxu0 0.0
  %996 = vmatpush.xpose.msra.mxu0 0.0
  %997 = vmatpush.xpose.msra.mxu0 0.0
  %998 = vmatpush.xpose.msra.mxu0 0.0
  %999 = vmatpush.xpose.msra.mxu0 0.0
  %1000 = vmatpush.xpose.msra.mxu0 0.0
  %1001 = vmatpush.xpose.msra.mxu0 0.0
  %1002 = vmatpush.xpose.msra.mxu0 0.0
  %1003 = vmatpush.xpose.msra.mxu0 0.0
  %1004 = vmatpush.xpose.msra.mxu0 0.0
  %1005 = vmatpush.xpose.msra.mxu0 0.0
  %1006 = vmatpush.xpose.msra.mxu0 0.0
  %1007 = vmatpush.xpose.msra.mxu0 0.0
  %1008 = vmatpush.xpose.msra.mxu0 %v992
  %1009 = vmatpush.xpose.msra.mxu0 %v990
  %1010 = vmatmul.f32.gmra.mxu0 %v986
  %v1011 = vpop.f32.mrf.mxu0
  %v1012 = vadd.f32 0.0, %v1011
  %1013 = vmatmul.f32.gmra.mxu0 %v988
  %v1014 = vpop.f32.mrf.mxu0
  %v1015 = vadd.f32 0.0, %v1014
  %1016 = vdwg.mxu0
  %1017 = vrot.lane.b32.xlu0 %v455, 96
  %v1018 = vpop.permute.xlu0 %1017
  %1019 = vrot.lane.b32.xlu0 %v457, 96
  %v1020 = vpop.permute.xlu0 %1019
  %v1021 = vsel %vm530, %v455, 0
  %v1023 = vsel %vm530, %v457, 0
  %v1025 = vsel %vm530, %v1018, 0
  %v1027 = vsel %vm530, %v1020, 0
  %1029 = vmatpush.xpose.msra.mxu0 0.0
  %1030 = vmatpush.xpose.msra.mxu0 0.0
  %1031 = vmatpush.xpose.msra.mxu0 0.0
  %1032 = vmatpush.xpose.msra.mxu0 0.0
  %1033 = vmatpush.xpose.msra.mxu0 0.0
  %1034 = vmatpush.xpose.msra.mxu0 0.0
  %1035 = vmatpush.xpose.msra.mxu0 0.0
  %1036 = vmatpush.xpose.msra.mxu0 0.0
  %1037 = vmatpush.xpose.msra.mxu0 0.0
  %1038 = vmatpush.xpose.msra.mxu0 0.0
  %1039 = vmatpush.xpose.msra.mxu0 0.0
  %1040 = vmatpush.xpose.msra.mxu0 0.0
  %1041 = vmatpush.xpose.msra.mxu0 0.0
  %1042 = vmatpush.xpose.msra.mxu0 0.0
  %1043 = vmatpush.xpose.msra.mxu0 %v1027
  %1044 = vmatpush.xpose.msra.mxu0 %v1025
  %1045 = vmatmul.f32.gmra.mxu0 %v1021
  %v1046 = vpop.f32.mrf.mxu0
  %v1047 = vadd.f32 0.0, %v1046
  %1048 = vmatmul.f32.gmra.mxu0 %v1023
  %v1049 = vpop.f32.mrf.mxu0
  %v1050 = vadd.f32 0.0, %v1049
  %1051 = vdwg.mxu0
  %1052 = vrot.lane.b32.xlu0 %v459, 96
  %v1053 = vpop.permute.xlu0 %1052
  %1054 = vrot.lane.b32.xlu0 %v461, 96
  %v1055 = vpop.permute.xlu0 %1054
  %v1056 = vsel %vm530, %v459, 0
  %v1058 = vsel %vm530, %v461, 0
  %v1060 = vsel %vm530, %v1053, 0
  %v1062 = vsel %vm530, %v1055, 0
  %1064 = vmatpush.xpose.msra.mxu0 0.0
  %1065 = vmatpush.xpose.msra.mxu0 0.0
  %1066 = vmatpush.xpose.msra.mxu0 0.0
  %1067 = vmatpush.xpose.msra.mxu0 0.0
  %1068 = vmatpush.xpose.msra.mxu0 0.0
  %1069 = vmatpush.xpose.msra.mxu0 0.0
  %1070 = vmatpush.xpose.msra.mxu0 0.0
  %1071 = vmatpush.xpose.msra.mxu0 0.0
  %1072 = vmatpush.xpose.msra.mxu0 0.0
  %1073 = vmatpush.xpose.msra.mxu0 0.0
  %1074 = vmatpush.xpose.msra.mxu0 0.0
  %1075 = vmatpush.xpose.msra.mxu0 0.0
  %1076 = vmatpush.xpose.msra.mxu0 0.0
  %1077 = vmatpush.xpose.msra.mxu0 0.0
  %1078 = vmatpush.xpose.msra.mxu0 %v1062
  %1079 = vmatpush.xpose.msra.mxu0 %v1060
  %1080 = vmatmul.f32.gmra.mxu0 %v1056
  %v1081 = vpop.f32.mrf.mxu0
  %v1082 = vadd.f32 0.0, %v1081
  %1083 = vmatmul.f32.gmra.mxu0 %v1058
  %v1084 = vpop.f32.mrf.mxu0
  %v1085 = vadd.f32 0.0, %v1084
  %1086 = vdwg.mxu0
  %1087 = vrot.lane.b32.xlu0 %v463, 96
  %v1088 = vpop.permute.xlu0 %1087
  %1089 = vrot.lane.b32.xlu0 %v465, 96
  %v1090 = vpop.permute.xlu0 %1089
  %v1091 = vsel %vm530, %v463, 0
  %v1093 = vsel %vm530, %v465, 0
  %v1095 = vsel %vm530, %v1088, 0
  %v1097 = vsel %vm530, %v1090, 0
  %1099 = vmatpush.xpose.msra.mxu0 0.0
  %1100 = vmatpush.xpose.msra.mxu0 0.0
  %1101 = vmatpush.xpose.msra.mxu0 0.0
  %1102 = vmatpush.xpose.msra.mxu0 0.0
  %1103 = vmatpush.xpose.msra.mxu0 0.0
  %1104 = vmatpush.xpose.msra.mxu0 0.0
  %1105 = vmatpush.xpose.msra.mxu0 0.0
  %1106 = vmatpush.xpose.msra.mxu0 0.0
  %1107 = vmatpush.xpose.msra.mxu0 0.0
  %1108 = vmatpush.xpose.msra.mxu0 0.0
  %1109 = vmatpush.xpose.msra.mxu0 0.0
  %1110 = vmatpush.xpose.msra.mxu0 0.0
  %1111 = vmatpush.xpose.msra.mxu0 0.0
  %1112 = vmatpush.xpose.msra.mxu0 0.0
  %1113 = vmatpush.xpose.msra.mxu0 %v1097
  %1114 = vmatpush.xpose.msra.mxu0 %v1095
  %1115 = vmatmul.f32.gmra.mxu0 %v1091
  %v1116 = vpop.f32.mrf.mxu0
  %v1117 = vadd.f32 0.0, %v1116
  %1118 = vmatmul.f32.gmra.mxu0 %v1093
  %v1119 = vpop.f32.mrf.mxu0
  %v1120 = vadd.f32 0.0, %v1119
  %1121 = vdwg.mxu0
  %1122 = vrot.lane.b32.xlu0 %v467, 96
  %v1123 = vpop.permute.xlu0 %1122
  %1124 = vrot.lane.b32.xlu0 %v469, 96
  %v1125 = vpop.permute.xlu0 %1124
  %v1126 = vsel %vm530, %v467, 0
  %v1128 = vsel %vm530, %v469, 0
  %v1130 = vsel %vm530, %v1123, 0
  %v1132 = vsel %vm530, %v1125, 0
  %1134 = vmatpush.xpose.msra.mxu0 0.0
  %1135 = vmatpush.xpose.msra.mxu0 0.0
  %1136 = vmatpush.xpose.msra.mxu0 0.0
  %1137 = vmatpush.xpose.msra.mxu0 0.0
  %1138 = vmatpush.xpose.msra.mxu0 0.0
  %1139 = vmatpush.xpose.msra.mxu0 0.0
  %1140 = vmatpush.xpose.msra.mxu0 0.0
  %1141 = vmatpush.xpose.msra.mxu0 0.0
  %1142 = vmatpush.xpose.msra.mxu0 0.0
  %1143 = vmatpush.xpose.msra.mxu0 0.0
  %1144 = vmatpush.xpose.msra.mxu0 0.0
  %1145 = vmatpush.xpose.msra.mxu0 0.0
  %1146 = vmatpush.xpose.msra.mxu0 0.0
  %1147 = vmatpush.xpose.msra.mxu0 0.0
  %1148 = vmatpush.xpose.msra.mxu0 %v1132
  %1149 = vmatpush.xpose.msra.mxu0 %v1130
  %1150 = vmatmul.f32.gmra.mxu0 %v1126
  %v1151 = vpop.f32.mrf.mxu0
  %v1152 = vadd.f32 0.0, %v1151
  %1153 = vmatmul.f32.gmra.mxu0 %v1128
  %v1154 = vpop.f32.mrf.mxu0
  %v1155 = vadd.f32 0.0, %v1154
  %1156 = vdwg.mxu0
  %1157 = vrot.lane.b32.xlu0 %v471, 96
  %v1158 = vpop.permute.xlu0 %1157
  %1159 = vrot.lane.b32.xlu0 %v473, 96
  %v1160 = vpop.permute.xlu0 %1159
  %v1161 = vsel %vm530, %v471, 0
  %v1163 = vsel %vm530, %v473, 0
  %v1165 = vsel %vm530, %v1158, 0
  %v1167 = vsel %vm530, %v1160, 0
  %1169 = vmatpush.xpose.msra.mxu0 0.0
  %1170 = vmatpush.xpose.msra.mxu0 0.0
  %1171 = vmatpush.xpose.msra.mxu0 0.0
  %1172 = vmatpush.xpose.msra.mxu0 0.0
  %1173 = vmatpush.xpose.msra.mxu0 0.0
  %1174 = vmatpush.xpose.msra.mxu0 0.0
  %1175 = vmatpush.xpose.msra.mxu0 0.0
  %1176 = vmatpush.xpose.msra.mxu0 0.0
  %1177 = vmatpush.xpose.msra.mxu0 0.0
  %1178 = vmatpush.xpose.msra.mxu0 0.0
  %1179 = vmatpush.xpose.msra.mxu0 0.0
  %1180 = vmatpush.xpose.msra.mxu0 0.0
  %1181 = vmatpush.xpose.msra.mxu0 0.0
  %1182 = vmatpush.xpose.msra.mxu0 0.0
  %1183 = vmatpush.xpose.msra.mxu0 %v1167
  %1184 = vmatpush.xpose.msra.mxu0 %v1165
  %1185 = vmatmul.f32.gmra.mxu0 %v1161
  %v1186 = vpop.f32.mrf.mxu0
  %v1187 = vadd.f32 0.0, %v1186
  %1188 = vmatmul.f32.gmra.mxu0 %v1163
  %v1189 = vpop.f32.mrf.mxu0
  %v1190 = vadd.f32 0.0, %v1189
  %1191 = vdwg.mxu0
  %1192 = vrot.lane.b32.xlu0 %v475, 96
  %v1193 = vpop.permute.xlu0 %1192
  %1194 = vrot.lane.b32.xlu0 %v477, 96
  %v1195 = vpop.permute.xlu0 %1194
  %v1196 = vsel %vm530, %v475, 0
  %v1198 = vsel %vm530, %v477, 0
  %v1200 = vsel %vm530, %v1193, 0
  %v1202 = vsel %vm530, %v1195, 0
  %1204 = vmatpush.xpose.msra.mxu0 0.0
  %1205 = vmatpush.xpose.msra.mxu0 0.0
  %1206 = vmatpush.xpose.msra.mxu0 0.0
  %1207 = vmatpush.xpose.msra.mxu0 0.0
  %1208 = vmatpush.xpose.msra.mxu0 0.0
  %1209 = vmatpush.xpose.msra.mxu0 0.0
  %1210 = vmatpush.xpose.msra.mxu0 0.0
  %1211 = vmatpush.xpose.msra.mxu0 0.0
  %1212 = vmatpush.xpose.msra.mxu0 0.0
  %1213 = vmatpush.xpose.msra.mxu0 0.0
  %1214 = vmatpush.xpose.msra.mxu0 0.0
  %1215 = vmatpush.xpose.msra.mxu0 0.0
  %1216 = vmatpush.xpose.msra.mxu0 0.0
  %1217 = vmatpush.xpose.msra.mxu0 0.0
  %1218 = vmatpush.xpose.msra.mxu0 %v1202
  %1219 = vmatpush.xpose.msra.mxu0 %v1200
  %1220 = vmatmul.f32.gmra.mxu0 %v1196
  %v1221 = vpop.f32.mrf.mxu0
  %v1222 = vadd.f32 0.0, %v1221
  %1223 = vmatmul.f32.gmra.mxu0 %v1198
  %v1224 = vpop.f32.mrf.mxu0
  %v1225 = vadd.f32 0.0, %v1224
  %1226 = vdwg.mxu0
  %1227 = vrot.lane.b32.xlu0 %v479, 96
  %v1228 = vpop.permute.xlu0 %1227
  %1229 = vrot.lane.b32.xlu0 %v481, 96
  %v1230 = vpop.permute.xlu0 %1229
  %v1231 = vsel %vm530, %v479, 0
  %v1233 = vsel %vm530, %v481, 0
  %v1235 = vsel %vm530, %v1228, 0
  %v1237 = vsel %vm530, %v1230, 0
  %1239 = vmatpush.xpose.msra.mxu0 0.0
  %1240 = vmatpush.xpose.msra.mxu0 0.0
  %1241 = vmatpush.xpose.msra.mxu0 0.0
  %1242 = vmatpush.xpose.msra.mxu0 0.0
  %1243 = vmatpush.xpose.msra.mxu0 0.0
  %1244 = vmatpush.xpose.msra.mxu0 0.0
  %1245 = vmatpush.xpose.msra.mxu0 0.0
  %1246 = vmatpush.xpose.msra.mxu0 0.0
  %1247 = vmatpush.xpose.msra.mxu0 0.0
  %1248 = vmatpush.xpose.msra.mxu0 0.0
  %1249 = vmatpush.xpose.msra.mxu0 0.0
  %1250 = vmatpush.xpose.msra.mxu0 0.0
  %1251 = vmatpush.xpose.msra.mxu0 0.0
  %1252 = vmatpush.xpose.msra.mxu0 0.0
  %1253 = vmatpush.xpose.msra.mxu0 %v1237
  %1254 = vmatpush.xpose.msra.mxu0 %v1235
  %1255 = vmatmul.f32.gmra.mxu0 %v1231
  %v1256 = vpop.f32.mrf.mxu0
  %v1257 = vadd.f32 0.0, %v1256
  %1258 = vmatmul.f32.gmra.mxu0 %v1233
  %v1259 = vpop.f32.mrf.mxu0
  %v1260 = vadd.f32 0.0, %v1259
  %1261 = vdwg.mxu0
  %1262 = vrot.lane.b32.xlu0 %v483, 96
  %v1263 = vpop.permute.xlu0 %1262
  %1264 = vrot.lane.b32.xlu0 %v485, 96
  %v1265 = vpop.permute.xlu0 %1264
  %v1266 = vsel %vm530, %v483, 0
  %v1268 = vsel %vm530, %v485, 0
  %v1270 = vsel %vm530, %v1263, 0
  %v1272 = vsel %vm530, %v1265, 0
  %1274 = vmatpush.xpose.msra.mxu0 0.0
  %1275 = vmatpush.xpose.msra.mxu0 0.0
  %1276 = vmatpush.xpose.msra.mxu0 0.0
  %1277 = vmatpush.xpose.msra.mxu0 0.0
  %1278 = vmatpush.xpose.msra.mxu0 0.0
  %1279 = vmatpush.xpose.msra.mxu0 0.0
  %1280 = vmatpush.xpose.msra.mxu0 0.0
  %1281 = vmatpush.xpose.msra.mxu0 0.0
  %1282 = vmatpush.xpose.msra.mxu0 0.0
  %1283 = vmatpush.xpose.msra.mxu0 0.0
  %1284 = vmatpush.xpose.msra.mxu0 0.0
  %1285 = vmatpush.xpose.msra.mxu0 0.0
  %1286 = vmatpush.xpose.msra.mxu0 0.0
  %1287 = vmatpush.xpose.msra.mxu0 0.0
  %1288 = vmatpush.xpose.msra.mxu0 %v1272
  %1289 = vmatpush.xpose.msra.mxu0 %v1270
  %1290 = vmatmul.f32.gmra.mxu0 %v1266
  %v1291 = vpop.f32.mrf.mxu0
  %v1292 = vadd.f32 0.0, %v1291
  %1293 = vmatmul.f32.gmra.mxu0 %v1268
  %v1294 = vpop.f32.mrf.mxu0
  %v1295 = vadd.f32 0.0, %v1294
  %1296 = vdwg.mxu0
  %1297 = vrot.lane.b32.xlu0 %v487, 96
  %v1298 = vpop.permute.xlu0 %1297
  %1299 = vrot.lane.b32.xlu0 %v489, 96
  %v1300 = vpop.permute.xlu0 %1299
  %v1301 = vsel %vm530, %v487, 0
  %v1303 = vsel %vm530, %v489, 0
  %v1305 = vsel %vm530, %v1298, 0
  %v1307 = vsel %vm530, %v1300, 0
  %1309 = vmatpush.xpose.msra.mxu0 0.0
  %1310 = vmatpush.xpose.msra.mxu0 0.0
  %1311 = vmatpush.xpose.msra.mxu0 0.0
  %1312 = vmatpush.xpose.msra.mxu0 0.0
  %1313 = vmatpush.xpose.msra.mxu0 0.0
  %1314 = vmatpush.xpose.msra.mxu0 0.0
  %1315 = vmatpush.xpose.msra.mxu0 0.0
  %1316 = vmatpush.xpose.msra.mxu0 0.0
  %1317 = vmatpush.xpose.msra.mxu0 0.0
  %1318 = vmatpush.xpose.msra.mxu0 0.0
  %1319 = vmatpush.xpose.msra.mxu0 0.0
  %1320 = vmatpush.xpose.msra.mxu0 0.0
  %1321 = vmatpush.xpose.msra.mxu0 0.0
  %1322 = vmatpush.xpose.msra.mxu0 0.0
  %1323 = vmatpush.xpose.msra.mxu0 %v1307
  %1324 = vmatpush.xpose.msra.mxu0 %v1305
  %1325 = vmatmul.f32.gmra.mxu0 %v1301
  %v1326 = vpop.f32.mrf.mxu0
  %v1327 = vadd.f32 0.0, %v1326
  %1328 = vmatmul.f32.gmra.mxu0 %v1303
  %v1329 = vpop.f32.mrf.mxu0
  %v1330 = vadd.f32 0.0, %v1329
  %1331 = vdwg.mxu0
  %1332 = vrot.lane.b32.xlu0 %v491, 96
  %v1333 = vpop.permute.xlu0 %1332
  %1334 = vrot.lane.b32.xlu0 %v493, 96
  %v1335 = vpop.permute.xlu0 %1334
  %v1336 = vsel %vm530, %v491, 0
  %v1338 = vsel %vm530, %v493, 0
  %v1340 = vsel %vm530, %v1333, 0
  %v1342 = vsel %vm530, %v1335, 0
  %1344 = vmatpush.xpose.msra.mxu0 0.0
  %1345 = vmatpush.xpose.msra.mxu0 0.0
  %1346 = vmatpush.xpose.msra.mxu0 0.0
  %1347 = vmatpush.xpose.msra.mxu0 0.0
  %1348 = vmatpush.xpose.msra.mxu0 0.0
  %1349 = vmatpush.xpose.msra.mxu0 0.0
  %1350 = vmatpush.xpose.msra.mxu0 0.0
  %1351 = vmatpush.xpose.msra.mxu0 0.0
  %1352 = vmatpush.xpose.msra.mxu0 0.0
  %1353 = vmatpush.xpose.msra.mxu0 0.0
  %1354 = vmatpush.xpose.msra.mxu0 0.0
  %1355 = vmatpush.xpose.msra.mxu0 0.0
  %1356 = vmatpush.xpose.msra.mxu0 0.0
  %1357 = vmatpush.xpose.msra.mxu0 0.0
  %1358 = vmatpush.xpose.msra.mxu0 %v1342
  %1359 = vmatpush.xpose.msra.mxu0 %v1340
  %1360 = vmatmul.f32.gmra.mxu0 %v1336
  %v1361 = vpop.f32.mrf.mxu0
  %v1362 = vadd.f32 0.0, %v1361
  %1363 = vmatmul.f32.gmra.mxu0 %v1338
  %v1364 = vpop.f32.mrf.mxu0
  %v1365 = vadd.f32 0.0, %v1364
  %1366 = vdwg.mxu0
  %1367 = vrot.lane.b32.xlu0 %v495, 96
  %v1368 = vpop.permute.xlu0 %1367
  %1369 = vrot.lane.b32.xlu0 %v497, 96
  %v1370 = vpop.permute.xlu0 %1369
  %v1371 = vsel %vm530, %v495, 0
  %v1373 = vsel %vm530, %v497, 0
  %v1375 = vsel %vm530, %v1368, 0
  %v1377 = vsel %vm530, %v1370, 0
  %1379 = vmatpush.xpose.msra.mxu0 0.0
  %1380 = vmatpush.xpose.msra.mxu0 0.0
  %1381 = vmatpush.xpose.msra.mxu0 0.0
  %1382 = vmatpush.xpose.msra.mxu0 0.0
  %1383 = vmatpush.xpose.msra.mxu0 0.0
  %1384 = vmatpush.xpose.msra.mxu0 0.0
  %1385 = vmatpush.xpose.msra.mxu0 0.0
  %1386 = vmatpush.xpose.msra.mxu0 0.0
  %1387 = vmatpush.xpose.msra.mxu0 0.0
  %1388 = vmatpush.xpose.msra.mxu0 0.0
  %1389 = vmatpush.xpose.msra.mxu0 0.0
  %1390 = vmatpush.xpose.msra.mxu0 0.0
  %1391 = vmatpush.xpose.msra.mxu0 0.0
  %1392 = vmatpush.xpose.msra.mxu0 0.0
  %1393 = vmatpush.xpose.msra.mxu0 %v1377
  %1394 = vmatpush.xpose.msra.mxu0 %v1375
  %1395 = vmatmul.f32.gmra.mxu0 %v1371
  %v1396 = vpop.f32.mrf.mxu0
  %v1397 = vadd.f32 0.0, %v1396
  %1398 = vmatmul.f32.gmra.mxu0 %v1373
  %v1399 = vpop.f32.mrf.mxu0
  %v1400 = vadd.f32 0.0, %v1399
  %1401 = vdwg.mxu0
  %1402 = vrot.lane.b32.xlu0 %v499, 96
  %v1403 = vpop.permute.xlu0 %1402
  %1404 = vrot.lane.b32.xlu0 %v501, 96
  %v1405 = vpop.permute.xlu0 %1404
  %v1406 = vsel %vm530, %v499, 0
  %v1408 = vsel %vm530, %v501, 0
  %v1410 = vsel %vm530, %v1403, 0
  %v1412 = vsel %vm530, %v1405, 0
  %1414 = vmatpush.xpose.msra.mxu0 0.0
  %1415 = vmatpush.xpose.msra.mxu0 0.0
  %1416 = vmatpush.xpose.msra.mxu0 0.0
  %1417 = vmatpush.xpose.msra.mxu0 0.0
  %1418 = vmatpush.xpose.msra.mxu0 0.0
  %1419 = vmatpush.xpose.msra.mxu0 0.0
  %1420 = vmatpush.xpose.msra.mxu0 0.0
  %1421 = vmatpush.xpose.msra.mxu0 0.0
  %1422 = vmatpush.xpose.msra.mxu0 0.0
  %1423 = vmatpush.xpose.msra.mxu0 0.0
  %1424 = vmatpush.xpose.msra.mxu0 0.0
  %1425 = vmatpush.xpose.msra.mxu0 0.0
  %1426 = vmatpush.xpose.msra.mxu0 0.0
  %1427 = vmatpush.xpose.msra.mxu0 0.0
  %1428 = vmatpush.xpose.msra.mxu0 %v1412
  %1429 = vmatpush.xpose.msra.mxu0 %v1410
  %1430 = vmatmul.f32.gmra.mxu0 %v1406
  %v1431 = vpop.f32.mrf.mxu0
  %v1432 = vadd.f32 0.0, %v1431
  %1433 = vmatmul.f32.gmra.mxu0 %v1408
  %v1434 = vpop.f32.mrf.mxu0
  %v1435 = vadd.f32 0.0, %v1434
  %1436 = vdwg.mxu0
  %1437 = vrot.lane.b32.xlu0 %v503, 96
  %v1438 = vpop.permute.xlu0 %1437
  %1439 = vrot.lane.b32.xlu0 %v505, 96
  %v1440 = vpop.permute.xlu0 %1439
  %v1441 = vsel %vm530, %v503, 0
  %v1443 = vsel %vm530, %v505, 0
  %v1445 = vsel %vm530, %v1438, 0
  %v1447 = vsel %vm530, %v1440, 0
  %1449 = vmatpush.xpose.msra.mxu0 0.0
  %1450 = vmatpush.xpose.msra.mxu0 0.0
  %1451 = vmatpush.xpose.msra.mxu0 0.0
  %1452 = vmatpush.xpose.msra.mxu0 0.0
  %1453 = vmatpush.xpose.msra.mxu0 0.0
  %1454 = vmatpush.xpose.msra.mxu0 0.0
  %1455 = vmatpush.xpose.msra.mxu0 0.0
  %1456 = vmatpush.xpose.msra.mxu0 0.0
  %1457 = vmatpush.xpose.msra.mxu0 0.0
  %1458 = vmatpush.xpose.msra.mxu0 0.0
  %1459 = vmatpush.xpose.msra.mxu0 0.0
  %1460 = vmatpush.xpose.msra.mxu0 0.0
  %1461 = vmatpush.xpose.msra.mxu0 0.0
  %1462 = vmatpush.xpose.msra.mxu0 0.0
  %1463 = vmatpush.xpose.msra.mxu0 %v1447
  %1464 = vmatpush.xpose.msra.mxu0 %v1445
  %1465 = vmatmul.f32.gmra.mxu0 %v1441
  %v1466 = vpop.f32.mrf.mxu0
  %v1467 = vadd.f32 0.0, %v1466
  %1468 = vmatmul.f32.gmra.mxu0 %v1443
  %v1469 = vpop.f32.mrf.mxu0
  %v1470 = vadd.f32 0.0, %v1469
  %1471 = vdwg.mxu0
  %1472 = vrot.lane.b32.xlu0 %v507, 96
  %v1473 = vpop.permute.xlu0 %1472
  %1474 = vrot.lane.b32.xlu0 %v509, 96
  %v1475 = vpop.permute.xlu0 %1474
  %v1476 = vsel %vm530, %v507, 0
  %v1478 = vsel %vm530, %v509, 0
  %v1480 = vsel %vm530, %v1473, 0
  %v1482 = vsel %vm530, %v1475, 0
  %1484 = vmatpush.xpose.msra.mxu0 0.0
  %1485 = vmatpush.xpose.msra.mxu0 0.0
  %1486 = vmatpush.xpose.msra.mxu0 0.0
  %1487 = vmatpush.xpose.msra.mxu0 0.0
  %1488 = vmatpush.xpose.msra.mxu0 0.0
  %1489 = vmatpush.xpose.msra.mxu0 0.0
  %1490 = vmatpush.xpose.msra.mxu0 0.0
  %1491 = vmatpush.xpose.msra.mxu0 0.0
  %1492 = vmatpush.xpose.msra.mxu0 0.0
  %1493 = vmatpush.xpose.msra.mxu0 0.0
  %1494 = vmatpush.xpose.msra.mxu0 0.0
  %1495 = vmatpush.xpose.msra.mxu0 0.0
  %1496 = vmatpush.xpose.msra.mxu0 0.0
  %1497 = vmatpush.xpose.msra.mxu0 0.0
  %1498 = vmatpush.xpose.msra.mxu0 %v1482
  %1499 = vmatpush.xpose.msra.mxu0 %v1480
  %1500 = vmatmul.f32.gmra.mxu0 %v1476
  %v1501 = vpop.f32.mrf.mxu0
  %v1502 = vadd.f32 0.0, %v1501
  %1503 = vmatmul.f32.gmra.mxu0 %v1478
  %v1504 = vpop.f32.mrf.mxu0
  %v1505 = vadd.f32 0.0, %v1504
  %1506 = vdwg.mxu0
  %1507 = vrot.lane.b32.xlu0 %v511, 96
  %v1508 = vpop.permute.xlu0 %1507
  %1509 = vrot.lane.b32.xlu0 %v513, 96
  %v1510 = vpop.permute.xlu0 %1509
  %v1511 = vsel %vm530, %v511, 0
  %v1513 = vsel %vm530, %v513, 0
  %v1515 = vsel %vm530, %v1508, 0
  %v1517 = vsel %vm530, %v1510, 0
  %1519 = vmatpush.xpose.msra.mxu0 0.0
  %1520 = vmatpush.xpose.msra.mxu0 0.0
  %1521 = vmatpush.xpose.msra.mxu0 0.0
  %1522 = vmatpush.xpose.msra.mxu0 0.0
  %1523 = vmatpush.xpose.msra.mxu0 0.0
  %1524 = vmatpush.xpose.msra.mxu0 0.0
  %1525 = vmatpush.xpose.msra.mxu0 0.0
  %1526 = vmatpush.xpose.msra.mxu0 0.0
  %1527 = vmatpush.xpose.msra.mxu0 0.0
  %1528 = vmatpush.xpose.msra.mxu0 0.0
  %1529 = vmatpush.xpose.msra.mxu0 0.0
  %1530 = vmatpush.xpose.msra.mxu0 0.0
  %1531 = vmatpush.xpose.msra.mxu0 0.0
  %1532 = vmatpush.xpose.msra.mxu0 0.0
  %1533 = vmatpush.xpose.msra.mxu0 %v1517
  %1534 = vmatpush.xpose.msra.mxu0 %v1515
  %1535 = vmatmul.f32.gmra.mxu0 %v1511
  %v1536 = vpop.f32.mrf.mxu0
  %v1537 = vadd.f32 0.0, %v1536
  %1538 = vmatmul.f32.gmra.mxu0 %v1513
  %v1539 = vpop.f32.mrf.mxu0
  %v1540 = vadd.f32 0.0, %v1539
  %1541 = vdwg.mxu0
  %1542 = vrot.lane.b32.xlu0 %v515, 96
  %v1543 = vpop.permute.xlu0 %1542
  %1544 = vrot.lane.b32.xlu0 %v517, 96
  %v1545 = vpop.permute.xlu0 %1544
  %v1546 = vsel %vm530, %v515, 0
  %v1548 = vsel %vm530, %v517, 0
  %v1550 = vsel %vm530, %v1543, 0
  %v1552 = vsel %vm530, %v1545, 0
  %1554 = vmatpush.xpose.msra.mxu0 0.0
  %1555 = vmatpush.xpose.msra.mxu0 0.0
  %1556 = vmatpush.xpose.msra.mxu0 0.0
  %1557 = vmatpush.xpose.msra.mxu0 0.0
  %1558 = vmatpush.xpose.msra.mxu0 0.0
  %1559 = vmatpush.xpose.msra.mxu0 0.0
  %1560 = vmatpush.xpose.msra.mxu0 0.0
  %1561 = vmatpush.xpose.msra.mxu0 0.0
  %1562 = vmatpush.xpose.msra.mxu0 0.0
  %1563 = vmatpush.xpose.msra.mxu0 0.0
  %1564 = vmatpush.xpose.msra.mxu0 0.0
  %1565 = vmatpush.xpose.msra.mxu0 0.0
  %1566 = vmatpush.xpose.msra.mxu0 0.0
  %1567 = vmatpush.xpose.msra.mxu0 0.0
  %1568 = vmatpush.xpose.msra.mxu0 %v1552
  %1569 = vmatpush.xpose.msra.mxu0 %v1550
  %1570 = vmatmul.f32.gmra.mxu0 %v1546
  %v1571 = vpop.f32.mrf.mxu0
  %v1572 = vadd.f32 0.0, %v1571
  %1573 = vmatmul.f32.gmra.mxu0 %v1548
  %v1574 = vpop.f32.mrf.mxu0
  %v1575 = vadd.f32 0.0, %v1574
  %1576 = vdwg.mxu0
  %1577 = vrot.lane.b32.xlu0 %v519, 96
  %v1578 = vpop.permute.xlu0 %1577
  %1579 = vrot.lane.b32.xlu0 %v521, 96
  %v1580 = vpop.permute.xlu0 %1579
  %v1581 = vsel %vm530, %v519, 0
  %v1583 = vsel %vm530, %v521, 0
  %v1585 = vsel %vm530, %v1578, 0
  %v1587 = vsel %vm530, %v1580, 0
  %1589 = vmatpush.xpose.msra.mxu0 0.0
  %1590 = vmatpush.xpose.msra.mxu0 0.0
  %1591 = vmatpush.xpose.msra.mxu0 0.0
  %1592 = vmatpush.xpose.msra.mxu0 0.0
  %1593 = vmatpush.xpose.msra.mxu0 0.0
  %1594 = vmatpush.xpose.msra.mxu0 0.0
  %1595 = vmatpush.xpose.msra.mxu0 0.0
  %1596 = vmatpush.xpose.msra.mxu0 0.0
  %1597 = vmatpush.xpose.msra.mxu0 0.0
  %1598 = vmatpush.xpose.msra.mxu0 0.0
  %1599 = vmatpush.xpose.msra.mxu0 0.0
  %1600 = vmatpush.xpose.msra.mxu0 0.0
  %1601 = vmatpush.xpose.msra.mxu0 0.0
  %1602 = vmatpush.xpose.msra.mxu0 0.0
  %1603 = vmatpush.xpose.msra.mxu0 %v1587
  %1604 = vmatpush.xpose.msra.mxu0 %v1585
  %1605 = vmatmul.f32.gmra.mxu0 %v1581
  %v1606 = vpop.f32.mrf.mxu0
  %v1607 = vadd.f32 0.0, %v1606
  %1608 = vmatmul.f32.gmra.mxu0 %v1583
  %v1609 = vpop.f32.mrf.mxu0
  %v1610 = vadd.f32 0.0, %v1609
  %1611 = vdwg.mxu0
  %1612 = vrot.lane.b32.xlu0 %v523, 96
  %v1613 = vpop.permute.xlu0 %1612
  %1614 = vrot.lane.b32.xlu0 %v525, 96
  %v1615 = vpop.permute.xlu0 %1614
  %v1616 = vsel %vm530, %v523, 0
  %v1618 = vsel %vm530, %v525, 0
  %v1620 = vsel %vm530, %v1613, 0
  %v1622 = vsel %vm530, %v1615, 0
  %1624 = vmatpush.xpose.msra.mxu0 0.0
  %1625 = vmatpush.xpose.msra.mxu0 0.0
  %1626 = vmatpush.xpose.msra.mxu0 0.0
  %1627 = vmatpush.xpose.msra.mxu0 0.0
  %1628 = vmatpush.xpose.msra.mxu0 0.0
  %1629 = vmatpush.xpose.msra.mxu0 0.0
  %1630 = vmatpush.xpose.msra.mxu0 0.0
  %1631 = vmatpush.xpose.msra.mxu0 0.0
  %1632 = vmatpush.xpose.msra.mxu0 0.0
  %1633 = vmatpush.xpose.msra.mxu0 0.0
  %1634 = vmatpush.xpose.msra.mxu0 0.0
  %1635 = vmatpush.xpose.msra.mxu0 0.0
  %1636 = vmatpush.xpose.msra.mxu0 0.0
  %1637 = vmatpush.xpose.msra.mxu0 0.0
  %1638 = vmatpush.xpose.msra.mxu0 %v1622
  %1639 = vmatpush.xpose.msra.mxu0 %v1620
  %1640 = vmatmul.f32.gmra.mxu0 %v1616
  %v1641 = vpop.f32.mrf.mxu0
  %v1642 = vadd.f32 0.0, %v1641
  %1643 = vmatmul.f32.gmra.mxu0 %v1618
  %v1644 = vpop.f32.mrf.mxu0
  %v1645 = vadd.f32 0.0, %v1644
  %1646 = vdwg.mxu0
  %v1647 = vmul.f32 %v557, 0.35355338
  %v1648 = vmul.f32 %v560, 0.35355338
  %v1649 = vmul.f32 %v592, 0.35355338
  %v1650 = vmul.f32 %v595, 0.35355338
  %v1651 = vmul.f32 %v627, 0.35355338
  %v1652 = vmul.f32 %v630, 0.35355338
  %v1653 = vmul.f32 %v662, 0.35355338
  %v1654 = vmul.f32 %v665, 0.35355338
  %v1655 = vmul.f32 %v697, 0.35355338
  %v1656 = vmul.f32 %v700, 0.35355338
  %v1657 = vmul.f32 %v732, 0.35355338
  %v1658 = vmul.f32 %v735, 0.35355338
  %v1659 = vmul.f32 %v767, 0.35355338
  %v1660 = vmul.f32 %v770, 0.35355338
  %v1661 = vmul.f32 %v802, 0.35355338
  %v1662 = vmul.f32 %v805, 0.35355338
  %v1663 = vmul.f32 %v837, 0.35355338
  %v1664 = vmul.f32 %v840, 0.35355338
  %v1665 = vmul.f32 %v872, 0.35355338
  %v1666 = vmul.f32 %v875, 0.35355338
  %v1667 = vmul.f32 %v907, 0.35355338
  %v1668 = vmul.f32 %v910, 0.35355338
  %v1669 = vmul.f32 %v942, 0.35355338
  %v1670 = vmul.f32 %v945, 0.35355338
  %v1671 = vmul.f32 %v977, 0.35355338
  %v1672 = vmul.f32 %v980, 0.35355338
  %v1673 = vmul.f32 %v1012, 0.35355338
  %v1674 = vmul.f32 %v1015, 0.35355338
  %v1675 = vmul.f32 %v1047, 0.35355338
  %v1676 = vmul.f32 %v1050, 0.35355338
  %v1677 = vmul.f32 %v1082, 0.35355338
  %v1678 = vmul.f32 %v1085, 0.35355338
  %v1679 = vmul.f32 %v1117, 0.35355338
  %v1680 = vmul.f32 %v1120, 0.35355338
  %v1681 = vmul.f32 %v1152, 0.35355338
  %v1682 = vmul.f32 %v1155, 0.35355338
  %v1683 = vmul.f32 %v1187, 0.35355338
  %v1684 = vmul.f32 %v1190, 0.35355338
  %v1685 = vmul.f32 %v1222, 0.35355338
  %v1686 = vmul.f32 %v1225, 0.35355338
  %v1687 = vmul.f32 %v1257, 0.35355338
  %v1688 = vmul.f32 %v1260, 0.35355338
  %v1689 = vmul.f32 %v1292, 0.35355338
  %v1690 = vmul.f32 %v1295, 0.35355338
  %v1691 = vmul.f32 %v1327, 0.35355338
  %v1692 = vmul.f32 %v1330, 0.35355338
  %v1693 = vmul.f32 %v1362, 0.35355338
  %v1694 = vmul.f32 %v1365, 0.35355338
  %v1695 = vmul.f32 %v1397, 0.35355338
  %v1696 = vmul.f32 %v1400, 0.35355338
  %v1697 = vmul.f32 %v1432, 0.35355338
  %v1698 = vmul.f32 %v1435, 0.35355338
  %v1699 = vmul.f32 %v1467, 0.35355338
  %v1700 = vmul.f32 %v1470, 0.35355338
  %v1701 = vmul.f32 %v1502, 0.35355338
  %v1702 = vmul.f32 %v1505, 0.35355338
  %v1703 = vmul.f32 %v1537, 0.35355338
  %v1704 = vmul.f32 %v1540, 0.35355338
  %v1705 = vmul.f32 %v1572, 0.35355338
  %v1706 = vmul.f32 %v1575, 0.35355338
  %v1707 = vmul.f32 %v1607, 0.35355338
  %v1708 = vmul.f32 %v1610, 0.35355338
  %v1709 = vmul.f32 %v1642, 0.35355338
  %v1710 = vmul.f32 %v1645, 0.35355338
  %v1711 = vld [vmem:[%s1] sm:$0xff]
  %vm1712 = vcmp.ne.f32.partialorder %v1711, 0.0
  %v1713 = vsel %vm1712, 1, 0
  %v1714 = vrot.slane %v1713, 1
  %v1715 = vrot.slane %v1713, 2
  %v1716 = vrot.slane %v1713, 3
  %v1717 = vrot.slane %v1713, 4
  %v1718 = vrot.slane %v1713, 5
  %v1719 = vrot.slane %v1713, 6
  %v1720 = vrot.slane %v1713, 7
  %vm1721 = vcmp.ne.s32.totalorder %v1714, 0
  %vm1722 = vcmp.ne.s32.totalorder %v1715, 0
  %vm1723 = vcmp.ne.s32.totalorder %v1716, 0
  %vm1724 = vcmp.ne.s32.totalorder %v1717, 0
  %vm1725 = vcmp.ne.s32.totalorder %v1718, 0
  %vm1726 = vcmp.ne.s32.totalorder %v1719, 0
  %vm1727 = vcmp.ne.s32.totalorder %v1720, 0
  %v1728 = vmax.f32 %v1647, -50.0
  %v1729 = vmax.f32 %v1648, -50.0
  %v1730 = vmax.f32 %v1649, -50.0
  %v1731 = vmax.f32 %v1650, -50.0
  %v1732 = vmax.f32 %v1651, -50.0
  %v1733 = vmax.f32 %v1652, -50.0
  %v1734 = vmax.f32 %v1653, -50.0
  %v1735 = vmax.f32 %v1654, -50.0
  %v1736 = vmax.f32 %v1655, -50.0
  %v1737 = vmax.f32 %v1656, -50.0
  %v1738 = vmax.f32 %v1657, -50.0
  %v1739 = vmax.f32 %v1658, -50.0
  %v1740 = vmax.f32 %v1659, -50.0
  %v1741 = vmax.f32 %v1660, -50.0
  %v1742 = vmax.f32 %v1661, -50.0
  %v1743 = vmax.f32 %v1662, -50.0
  %v1744 = vmax.f32 %v1663, -50.0
  %v1745 = vmax.f32 %v1664, -50.0
  %v1746 = vmax.f32 %v1665, -50.0
  %v1747 = vmax.f32 %v1666, -50.0
  %v1748 = vmax.f32 %v1667, -50.0
  %v1749 = vmax.f32 %v1668, -50.0
  %v1750 = vmax.f32 %v1669, -50.0
  %v1751 = vmax.f32 %v1670, -50.0
  %v1752 = vmax.f32 %v1671, -50.0
  %v1753 = vmax.f32 %v1672, -50.0
  %v1754 = vmax.f32 %v1673, -50.0
  %v1755 = vmax.f32 %v1674, -50.0
  %v1756 = vmax.f32 %v1675, -50.0
  %v1757 = vmax.f32 %v1676, -50.0
  %v1758 = vmax.f32 %v1677, -50.0
  %v1759 = vmax.f32 %v1678, -50.0
  %v1760 = vmax.f32 %v1679, -50.0
  %v1761 = vmax.f32 %v1680, -50.0
  %v1762 = vmax.f32 %v1681, -50.0
  %v1763 = vmax.f32 %v1682, -50.0
  %v1764 = vmax.f32 %v1683, -50.0
  %v1765 = vmax.f32 %v1684, -50.0
  %v1766 = vmax.f32 %v1685, -50.0
  %v1767 = vmax.f32 %v1686, -50.0
  %v1768 = vmax.f32 %v1687, -50.0
  %v1769 = vmax.f32 %v1688, -50.0
  %v1770 = vmax.f32 %v1689, -50.0
  %v1771 = vmax.f32 %v1690, -50.0
  %v1772 = vmax.f32 %v1691, -50.0
  %v1773 = vmax.f32 %v1692, -50.0
  %v1774 = vmax.f32 %v1693, -50.0
  %v1775 = vmax.f32 %v1694, -50.0
  %v1776 = vmax.f32 %v1695, -50.0
  %v1777 = vmax.f32 %v1696, -50.0
  %v1778 = vmax.f32 %v1697, -50.0
  %v1779 = vmax.f32 %v1698, -50.0
  %v1780 = vmax.f32 %v1699, -50.0
  %v1781 = vmax.f32 %v1700, -50.0
  %v1782 = vmax.f32 %v1701, -50.0
  %v1783 = vmax.f32 %v1702, -50.0
  %v1784 = vmax.f32 %v1703, -50.0
  %v1785 = vmax.f32 %v1704, -50.0
  %v1786 = vmax.f32 %v1705, -50.0
  %v1787 = vmax.f32 %v1706, -50.0
  %v1788 = vmax.f32 %v1707, -50.0
  %v1789 = vmax.f32 %v1708, -50.0
  %v1790 = vmax.f32 %v1709, -50.0
  %v1791 = vmax.f32 %v1710, -50.0
  %v1792 = vmin.f32 %v1728, 50.0
  %v1793 = vmin.f32 %v1729, 50.0
  %v1794 = vmin.f32 %v1730, 50.0
  %v1795 = vmin.f32 %v1731, 50.0
  %v1796 = vmin.f32 %v1732, 50.0
  %v1797 = vmin.f32 %v1733, 50.0
  %v1798 = vmin.f32 %v1734, 50.0
  %v1799 = vmin.f32 %v1735, 50.0
  %v1800 = vmin.f32 %v1736, 50.0
  %v1801 = vmin.f32 %v1737, 50.0
  %v1802 = vmin.f32 %v1738, 50.0
  %v1803 = vmin.f32 %v1739, 50.0
  %v1804 = vmin.f32 %v1740, 50.0
  %v1805 = vmin.f32 %v1741, 50.0
  %v1806 = vmin.f32 %v1742, 50.0
  %v1807 = vmin.f32 %v1743, 50.0
  %v1808 = vmin.f32 %v1744, 50.0
  %v1809 = vmin.f32 %v1745, 50.0
  %v1810 = vmin.f32 %v1746, 50.0
  %v1811 = vmin.f32 %v1747, 50.0
  %v1812 = vmin.f32 %v1748, 50.0
  %v1813 = vmin.f32 %v1749, 50.0
  %v1814 = vmin.f32 %v1750, 50.0
  %v1815 = vmin.f32 %v1751, 50.0
  %v1816 = vmin.f32 %v1752, 50.0
  %v1817 = vmin.f32 %v1753, 50.0
  %v1818 = vmin.f32 %v1754, 50.0
  %v1819 = vmin.f32 %v1755, 50.0
  %v1820 = vmin.f32 %v1756, 50.0
  %v1821 = vmin.f32 %v1757, 50.0
  %v1822 = vmin.f32 %v1758, 50.0
  %v1823 = vmin.f32 %v1759, 50.0
  %v1824 = vmin.f32 %v1760, 50.0
  %v1825 = vmin.f32 %v1761, 50.0
  %v1826 = vmin.f32 %v1762, 50.0
  %v1827 = vmin.f32 %v1763, 50.0
  %v1828 = vmin.f32 %v1764, 50.0
  %v1829 = vmin.f32 %v1765, 50.0
  %v1830 = vmin.f32 %v1766, 50.0
  %v1831 = vmin.f32 %v1767, 50.0
  %v1832 = vmin.f32 %v1768, 50.0
  %v1833 = vmin.f32 %v1769, 50.0
  %v1834 = vmin.f32 %v1770, 50.0
  %v1835 = vmin.f32 %v1771, 50.0
  %v1836 = vmin.f32 %v1772, 50.0
  %v1837 = vmin.f32 %v1773, 50.0
  %v1838 = vmin.f32 %v1774, 50.0
  %v1839 = vmin.f32 %v1775, 50.0
  %v1840 = vmin.f32 %v1776, 50.0
  %v1841 = vmin.f32 %v1777, 50.0
  %v1842 = vmin.f32 %v1778, 50.0
  %v1843 = vmin.f32 %v1779, 50.0
  %v1844 = vmin.f32 %v1780, 50.0
  %v1845 = vmin.f32 %v1781, 50.0
  %v1846 = vmin.f32 %v1782, 50.0
  %v1847 = vmin.f32 %v1783, 50.0
  %v1848 = vmin.f32 %v1784, 50.0
  %v1849 = vmin.f32 %v1785, 50.0
  %v1850 = vmin.f32 %v1786, 50.0
  %v1851 = vmin.f32 %v1787, 50.0
  %v1852 = vmin.f32 %v1788, 50.0
  %v1853 = vmin.f32 %v1789, 50.0
  %v1854 = vmin.f32 %v1790, 50.0
  %v1855 = vmin.f32 %v1791, 50.0
  %v1856 = vsel %vm1721, 1, 0
  %v1857 = vsel %vm1722, 1, 0
  %v1858 = vsel %vm1723, 1, 0
  %v1859 = vsel %vm1724, 1, 0
  %v1860 = vsel %vm1725, 1, 0
  %v1861 = vsel %vm1726, 1, 0
  %v1862 = vsel %vm1727, 1, 0
  %v1863 = vperm.slane %v1713, 0
  %v1864 = vperm.slane %v1856, 0
  %v1865 = vperm.slane %v1857, 0
  %v1866 = vperm.slane %v1858, 0
  %v1867 = vperm.slane %v1859, 0
  %v1868 = vperm.slane %v1860, 0
  %v1869 = vperm.slane %v1861, 0
  %v1870 = vperm.slane %v1862, 0
  %vm1871 = vcmp.eq.s32.totalorder %v1863, 1
  %vm1872 = vcmp.eq.s32.totalorder %v1864, 1
  %vm1873 = vcmp.eq.s32.totalorder %v1865, 1
  %vm1874 = vcmp.eq.s32.totalorder %v1866, 1
  %vm1875 = vcmp.eq.s32.totalorder %v1867, 1
  %vm1876 = vcmp.eq.s32.totalorder %v1868, 1
  %vm1877 = vcmp.eq.s32.totalorder %v1869, 1
  %vm1878 = vcmp.eq.s32.totalorder %v1870, 1
  %v1879 = vsel %vm1871, %v1792, -50.0
  %v1880 = vsel %vm1871, %v1793, -50.0
  %v1881 = vsel %vm1872, %v1794, -50.0
  %v1882 = vsel %vm1872, %v1795, -50.0
  %v1883 = vsel %vm1873, %v1796, -50.0
  %v1884 = vsel %vm1873, %v1797, -50.0
  %v1885 = vsel %vm1874, %v1798, -50.0
  %v1886 = vsel %vm1874, %v1799, -50.0
  %v1887 = vsel %vm1875, %v1800, -50.0
  %v1888 = vsel %vm1875, %v1801, -50.0
  %v1889 = vsel %vm1876, %v1802, -50.0
  %v1890 = vsel %vm1876, %v1803, -50.0
  %v1891 = vsel %vm1877, %v1804, -50.0
  %v1892 = vsel %vm1877, %v1805, -50.0
  %v1893 = vsel %vm1878, %v1806, -50.0
  %v1894 = vsel %vm1878, %v1807, -50.0
  %v1895 = vsel %vm1871, %v1808, -50.0
  %v1896 = vsel %vm1871, %v1809, -50.0
  %v1897 = vsel %vm1872, %v1810, -50.0
  %v1898 = vsel %vm1872, %v1811, -50.0
  %v1899 = vsel %vm1873, %v1812, -50.0
  %v1900 = vsel %vm1873, %v1813, -50.0
  %v1901 = vsel %vm1874, %v1814, -50.0
  %v1902 = vsel %vm1874, %v1815, -50.0
  %v1903 = vsel %vm1875, %v1816, -50.0
  %v1904 = vsel %vm1875, %v1817, -50.0
  %v1905 = vsel %vm1876, %v1818, -50.0
  %v1906 = vsel %vm1876, %v1819, -50.0
  %v1907 = vsel %vm1877, %v1820, -50.0
  %v1908 = vsel %vm1877, %v1821, -50.0
  %v1909 = vsel %vm1878, %v1822, -50.0
  %v1910 = vsel %vm1878, %v1823, -50.0
  %v1911 = vsel %vm1871, %v1824, -50.0
  %v1912 = vsel %vm1871, %v1825, -50.0
  %v1913 = vsel %vm1872, %v1826, -50.0
  %v1914 = vsel %vm1872, %v1827, -50.0
  %v1915 = vsel %vm1873, %v1828, -50.0
  %v1916 = vsel %vm1873, %v1829, -50.0
  %v1917 = vsel %vm1874, %v1830, -50.0
  %v1918 = vsel %vm1874, %v1831, -50.0
  %v1919 = vsel %vm1875, %v1832, -50.0
  %v1920 = vsel %vm1875, %v1833, -50.0
  %v1921 = vsel %vm1876, %v1834, -50.0
  %v1922 = vsel %vm1876, %v1835, -50.0
  %v1923 = vsel %vm1877, %v1836, -50.0
  %v1924 = vsel %vm1877, %v1837, -50.0
  %v1925 = vsel %vm1878, %v1838, -50.0
  %v1926 = vsel %vm1878, %v1839, -50.0
  %v1927 = vsel %vm1871, %v1840, -50.0
  %v1928 = vsel %vm1871, %v1841, -50.0
  %v1929 = vsel %vm1872, %v1842, -50.0
  %v1930 = vsel %vm1872, %v1843, -50.0
  %v1931 = vsel %vm1873, %v1844, -50.0
  %v1932 = vsel %vm1873, %v1845, -50.0
  %v1933 = vsel %vm1874, %v1846, -50.0
  %v1934 = vsel %vm1874, %v1847, -50.0
  %v1935 = vsel %vm1875, %v1848, -50.0
  %v1936 = vsel %vm1875, %v1849, -50.0
  %v1937 = vsel %vm1876, %v1850, -50.0
  %v1938 = vsel %vm1876, %v1851, -50.0
  %v1939 = vsel %vm1877, %v1852, -50.0
  %v1940 = vsel %vm1877, %v1853, -50.0
  %v1941 = vsel %vm1878, %v1854, -50.0
  %v1942 = vsel %vm1878, %v1855, -50.0
  %vm1943 = vcmask 130048
  %v1944 = vsel %vm1943, %v1879, -inf
  %1945 = vmax.xlane.f32.xlu0 %v1944
  %v1946 = vpop.xlane.xlu0 %1945
  %v1947 = vsel %vm1943, %v1880, -inf
  %1948 = vmax.xlane.f32.xlu0 %v1947
  %v1949 = vpop.xlane.xlu0 %1948
  %v1950 = vsel %vm1943, %v1881, -inf
  %1951 = vmax.xlane.f32.xlu0 %v1950
  %v1952 = vpop.xlane.xlu0 %1951
  %v1953 = vsel %vm1943, %v1882, -inf
  %1954 = vmax.xlane.f32.xlu0 %v1953
  %v1955 = vpop.xlane.xlu0 %1954
  %v1956 = vsel %vm1943, %v1883, -inf
  %1957 = vmax.xlane.f32.xlu0 %v1956
  %v1958 = vpop.xlane.xlu0 %1957
  %v1959 = vsel %vm1943, %v1884, -inf
  %1960 = vmax.xlane.f32.xlu0 %v1959
  %v1961 = vpop.xlane.xlu0 %1960
  %v1962 = vsel %vm1943, %v1885, -inf
  %1963 = vmax.xlane.f32.xlu0 %v1962
  %v1964 = vpop.xlane.xlu0 %1963
  %v1965 = vsel %vm1943, %v1886, -inf
  %1966 = vmax.xlane.f32.xlu0 %v1965
  %v1967 = vpop.xlane.xlu0 %1966
  %v1968 = vsel %vm1943, %v1887, -inf
  %1969 = vmax.xlane.f32.xlu0 %v1968
  %v1970 = vpop.xlane.xlu0 %1969
  %v1971 = vsel %vm1943, %v1888, -inf
  %1972 = vmax.xlane.f32.xlu0 %v1971
  %v1973 = vpop.xlane.xlu0 %1972
  %v1974 = vsel %vm1943, %v1889, -inf
  %1975 = vmax.xlane.f32.xlu0 %v1974
  %v1976 = vpop.xlane.xlu0 %1975
  %v1977 = vsel %vm1943, %v1890, -inf
  %1978 = vmax.xlane.f32.xlu0 %v1977
  %v1979 = vpop.xlane.xlu0 %1978
  %v1980 = vsel %vm1943, %v1891, -inf
  %1981 = vmax.xlane.f32.xlu0 %v1980
  %v1982 = vpop.xlane.xlu0 %1981
  %v1983 = vsel %vm1943, %v1892, -inf
  %1984 = vmax.xlane.f32.xlu0 %v1983
  %v1985 = vpop.xlane.xlu0 %1984
  %v1986 = vsel %vm1943, %v1893, -inf
  %1987 = vmax.xlane.f32.xlu0 %v1986
  %v1988 = vpop.xlane.xlu0 %1987
  %v1989 = vsel %vm1943, %v1894, -inf
  %1990 = vmax.xlane.f32.xlu0 %v1989
  %v1991 = vpop.xlane.xlu0 %1990
  %v1992 = vsel %vm1943, %v1895, -inf
  %1993 = vmax.xlane.f32.xlu0 %v1992
  %v1994 = vpop.xlane.xlu0 %1993
  %v1995 = vsel %vm1943, %v1896, -inf
  %1996 = vmax.xlane.f32.xlu0 %v1995
  %v1997 = vpop.xlane.xlu0 %1996
  %v1998 = vsel %vm1943, %v1897, -inf
  %1999 = vmax.xlane.f32.xlu0 %v1998
  %v2000 = vpop.xlane.xlu0 %1999
  %v2001 = vsel %vm1943, %v1898, -inf
  %2002 = vmax.xlane.f32.xlu0 %v2001
  %v2003 = vpop.xlane.xlu0 %2002
  %v2004 = vsel %vm1943, %v1899, -inf
  %2005 = vmax.xlane.f32.xlu0 %v2004
  %v2006 = vpop.xlane.xlu0 %2005
  %v2007 = vsel %vm1943, %v1900, -inf
  %2008 = vmax.xlane.f32.xlu0 %v2007
  %v2009 = vpop.xlane.xlu0 %2008
  %v2010 = vsel %vm1943, %v1901, -inf
  %2011 = vmax.xlane.f32.xlu0 %v2010
  %v2012 = vpop.xlane.xlu0 %2011
  %v2013 = vsel %vm1943, %v1902, -inf
  %2014 = vmax.xlane.f32.xlu0 %v2013
  %v2015 = vpop.xlane.xlu0 %2014
  %v2016 = vsel %vm1943, %v1903, -inf
  %2017 = vmax.xlane.f32.xlu0 %v2016
  %v2018 = vpop.xlane.xlu0 %2017
  %v2019 = vsel %vm1943, %v1904, -inf
  %2020 = vmax.xlane.f32.xlu0 %v2019
  %v2021 = vpop.xlane.xlu0 %2020
  %v2022 = vsel %vm1943, %v1905, -inf
  %2023 = vmax.xlane.f32.xlu0 %v2022
  %v2024 = vpop.xlane.xlu0 %2023
  %v2025 = vsel %vm1943, %v1906, -inf
  %2026 = vmax.xlane.f32.xlu0 %v2025
  %v2027 = vpop.xlane.xlu0 %2026
  %v2028 = vsel %vm1943, %v1907, -inf
  %2029 = vmax.xlane.f32.xlu0 %v2028
  %v2030 = vpop.xlane.xlu0 %2029
  %v2031 = vsel %vm1943, %v1908, -inf
  %2032 = vmax.xlane.f32.xlu0 %v2031
  %v2033 = vpop.xlane.xlu0 %2032
  %v2034 = vsel %vm1943, %v1909, -inf
  %2035 = vmax.xlane.f32.xlu0 %v2034
  %v2036 = vpop.xlane.xlu0 %2035
  %v2037 = vsel %vm1943, %v1910, -inf
  %2038 = vmax.xlane.f32.xlu0 %v2037
  %v2039 = vpop.xlane.xlu0 %2038
  %v2040 = vsel %vm1943, %v1911, -inf
  %2041 = vmax.xlane.f32.xlu0 %v2040
  %v2042 = vpop.xlane.xlu0 %2041
  %v2043 = vsel %vm1943, %v1912, -inf
  %2044 = vmax.xlane.f32.xlu0 %v2043
  %v2045 = vpop.xlane.xlu0 %2044
  %v2046 = vsel %vm1943, %v1913, -inf
  %2047 = vmax.xlane.f32.xlu0 %v2046
  %v2048 = vpop.xlane.xlu0 %2047
  %v2049 = vsel %vm1943, %v1914, -inf
  %2050 = vmax.xlane.f32.xlu0 %v2049
  %v2051 = vpop.xlane.xlu0 %2050
  %v2052 = vsel %vm1943, %v1915, -inf
  %2053 = vmax.xlane.f32.xlu0 %v2052
  %v2054 = vpop.xlane.xlu0 %2053
  %v2055 = vsel %vm1943, %v1916, -inf
  %2056 = vmax.xlane.f32.xlu0 %v2055
  %v2057 = vpop.xlane.xlu0 %2056
  %v2058 = vsel %vm1943, %v1917, -inf
  %2059 = vmax.xlane.f32.xlu0 %v2058
  %v2060 = vpop.xlane.xlu0 %2059
  %v2061 = vsel %vm1943, %v1918, -inf
  %2062 = vmax.xlane.f32.xlu0 %v2061
  %v2063 = vpop.xlane.xlu0 %2062
  %v2064 = vsel %vm1943, %v1919, -inf
  %2065 = vmax.xlane.f32.xlu0 %v2064
  %v2066 = vpop.xlane.xlu0 %2065
  %v2067 = vsel %vm1943, %v1920, -inf
  %2068 = vmax.xlane.f32.xlu0 %v2067
  %v2069 = vpop.xlane.xlu0 %2068
  %v2070 = vsel %vm1943, %v1921, -inf
  %2071 = vmax.xlane.f32.xlu0 %v2070
  %v2072 = vpop.xlane.xlu0 %2071
  %v2073 = vsel %vm1943, %v1922, -inf
  %2074 = vmax.xlane.f32.xlu0 %v2073
  %v2075 = vpop.xlane.xlu0 %2074
  %v2076 = vsel %vm1943, %v1923, -inf
  %2077 = vmax.xlane.f32.xlu0 %v2076
  %v2078 = vpop.xlane.xlu0 %2077
  %v2079 = vsel %vm1943, %v1924, -inf
  %2080 = vmax.xlane.f32.xlu0 %v2079
  %v2081 = vpop.xlane.xlu0 %2080
  %v2082 = vsel %vm1943, %v1925, -inf
  %2083 = vmax.xlane.f32.xlu0 %v2082
  %v2084 = vpop.xlane.xlu0 %2083
  %v2085 = vsel %vm1943, %v1926, -inf
  %2086 = vmax.xlane.f32.xlu0 %v2085
  %v2087 = vpop.xlane.xlu0 %2086
  %v2088 = vsel %vm1943, %v1927, -inf
  %2089 = vmax.xlane.f32.xlu0 %v2088
  %v2090 = vpop.xlane.xlu0 %2089
  %v2091 = vsel %vm1943, %v1928, -inf
  %2092 = vmax.xlane.f32.xlu0 %v2091
  %v2093 = vpop.xlane.xlu0 %2092
  %v2094 = vsel %vm1943, %v1929, -inf
  %2095 = vmax.xlane.f32.xlu0 %v2094
  %v2096 = vpop.xlane.xlu0 %2095
  %v2097 = vsel %vm1943, %v1930, -inf
  %2098 = vmax.xlane.f32.xlu0 %v2097
  %v2099 = vpop.xlane.xlu0 %2098
  %v2100 = vsel %vm1943, %v1931, -inf
  %2101 = vmax.xlane.f32.xlu0 %v2100
  %v2102 = vpop.xlane.xlu0 %2101
  %v2103 = vsel %vm1943, %v1932, -inf
  %2104 = vmax.xlane.f32.xlu0 %v2103
  %v2105 = vpop.xlane.xlu0 %2104
  %v2106 = vsel %vm1943, %v1933, -inf
  %2107 = vmax.xlane.f32.xlu0 %v2106
  %v2108 = vpop.xlane.xlu0 %2107
  %v2109 = vsel %vm1943, %v1934, -inf
  %2110 = vmax.xlane.f32.xlu0 %v2109
  %v2111 = vpop.xlane.xlu0 %2110
  %v2112 = vsel %vm1943, %v1935, -inf
  %2113 = vmax.xlane.f32.xlu0 %v2112
  %v2114 = vpop.xlane.xlu0 %2113
  %v2115 = vsel %vm1943, %v1936, -inf
  %2116 = vmax.xlane.f32.xlu0 %v2115
  %v2117 = vpop.xlane.xlu0 %2116
  %v2118 = vsel %vm1943, %v1937, -inf
  %2119 = vmax.xlane.f32.xlu0 %v2118
  %v2120 = vpop.xlane.xlu0 %2119
  %v2121 = vsel %vm1943, %v1938, -inf
  %2122 = vmax.xlane.f32.xlu0 %v2121
  %v2123 = vpop.xlane.xlu0 %2122
  %v2124 = vsel %vm1943, %v1939, -inf
  %2125 = vmax.xlane.f32.xlu0 %v2124
  %v2126 = vpop.xlane.xlu0 %2125
  %v2127 = vsel %vm1943, %v1940, -inf
  %2128 = vmax.xlane.f32.xlu0 %v2127
  %v2129 = vpop.xlane.xlu0 %2128
  %v2130 = vsel %vm1943, %v1941, -inf
  %2131 = vmax.xlane.f32.xlu0 %v2130
  %v2132 = vpop.xlane.xlu0 %2131
  %v2133 = vsel %vm1943, %v1942, -inf
  %2134 = vmax.xlane.f32.xlu0 %v2133
  %v2135 = vpop.xlane.xlu0 %2134
  %v2136 = vsub.f32 %v1879, %v1946
  %v2137 = vsub.f32 %v1880, %v1949
  %v2138 = vsub.f32 %v1881, %v1952
  %v2139 = vsub.f32 %v1882, %v1955
  %v2140 = vsub.f32 %v1883, %v1958
  %v2141 = vsub.f32 %v1884, %v1961
  %v2142 = vsub.f32 %v1885, %v1964
  %v2143 = vsub.f32 %v1886, %v1967
  %v2144 = vsub.f32 %v1887, %v1970
  %v2145 = vsub.f32 %v1888, %v1973
  %v2146 = vsub.f32 %v1889, %v1976
  %v2147 = vsub.f32 %v1890, %v1979
  %v2148 = vsub.f32 %v1891, %v1982
  %v2149 = vsub.f32 %v1892, %v1985
  %v2150 = vsub.f32 %v1893, %v1988
  %v2151 = vsub.f32 %v1894, %v1991
  %v2152 = vsub.f32 %v1895, %v1994
  %v2153 = vsub.f32 %v1896, %v1997
  %v2154 = vsub.f32 %v1897, %v2000
  %v2155 = vsub.f32 %v1898, %v2003
  %v2156 = vsub.f32 %v1899, %v2006
  %v2157 = vsub.f32 %v1900, %v2009
  %v2158 = vsub.f32 %v1901, %v2012
  %v2159 = vsub.f32 %v1902, %v2015
  %v2160 = vsub.f32 %v1903, %v2018
  %v2161 = vsub.f32 %v1904, %v2021
  %v2162 = vsub.f32 %v1905, %v2024
  %v2163 = vsub.f32 %v1906, %v2027
  %v2164 = vsub.f32 %v1907, %v2030
  %v2165 = vsub.f32 %v1908, %v2033
  %v2166 = vsub.f32 %v1909, %v2036
  %v2167 = vsub.f32 %v1910, %v2039
  %v2168 = vsub.f32 %v1911, %v2042
  %v2169 = vsub.f32 %v1912, %v2045
  %v2170 = vsub.f32 %v1913, %v2048
  %v2171 = vsub.f32 %v1914, %v2051
  %v2172 = vsub.f32 %v1915, %v2054
  %v2173 = vsub.f32 %v1916, %v2057
  %v2174 = vsub.f32 %v1917, %v2060
  %v2175 = vsub.f32 %v1918, %v2063
  %v2176 = vsub.f32 %v1919, %v2066
  %v2177 = vsub.f32 %v1920, %v2069
  %v2178 = vsub.f32 %v1921, %v2072
  %v2179 = vsub.f32 %v1922, %v2075
  %v2180 = vsub.f32 %v1923, %v2078
  %v2181 = vsub.f32 %v1924, %v2081
  %v2182 = vsub.f32 %v1925, %v2084
  %v2183 = vsub.f32 %v1926, %v2087
  %v2184 = vsub.f32 %v1927, %v2090
  %v2185 = vsub.f32 %v1928, %v2093
  %v2186 = vsub.f32 %v1929, %v2096
  %v2187 = vsub.f32 %v1930, %v2099
  %v2188 = vsub.f32 %v1931, %v2102
  %v2189 = vsub.f32 %v1932, %v2105
  %v2190 = vsub.f32 %v1933, %v2108
  %v2191 = vsub.f32 %v1934, %v2111
  %v2192 = vsub.f32 %v1935, %v2114
  %v2193 = vsub.f32 %v1936, %v2117
  %v2194 = vsub.f32 %v1937, %v2120
  %v2195 = vsub.f32 %v1938, %v2123
  %v2196 = vsub.f32 %v1939, %v2126
  %v2197 = vsub.f32 %v1940, %v2129
  %v2198 = vsub.f32 %v1941, %v2132
  %v2199 = vsub.f32 %v1942, %v2135
  %v2200 = vmul.f32 %v2136, 1.442695
  %v2201 = vpow.pop %v2200
  %v2202 = vmul.f32 %v2137, 1.442695
  %v2203 = vpow.pop %v2202
  %v2204 = vmul.f32 %v2138, 1.442695
  %v2205 = vpow.pop %v2204
  %v2206 = vmul.f32 %v2139, 1.442695
  %v2207 = vpow.pop %v2206
  %v2208 = vmul.f32 %v2140, 1.442695
  %v2209 = vpow.pop %v2208
  %v2210 = vmul.f32 %v2141, 1.442695
  %v2211 = vpow.pop %v2210
  %v2212 = vmul.f32 %v2142, 1.442695
  %v2213 = vpow.pop %v2212
  %v2214 = vmul.f32 %v2143, 1.442695
  %v2215 = vpow.pop %v2214
  %v2216 = vmul.f32 %v2144, 1.442695
  %v2217 = vpow.pop %v2216
  %v2218 = vmul.f32 %v2145, 1.442695
  %v2219 = vpow.pop %v2218
  %v2220 = vmul.f32 %v2146, 1.442695
  %v2221 = vpow.pop %v2220
  %v2222 = vmul.f32 %v2147, 1.442695
  %v2223 = vpow.pop %v2222
  %v2224 = vmul.f32 %v2148, 1.442695
  %v2225 = vpow.pop %v2224
  %v2226 = vmul.f32 %v2149, 1.442695
  %v2227 = vpow.pop %v2226
  %v2228 = vmul.f32 %v2150, 1.442695
  %v2229 = vpow.pop %v2228
  %v2230 = vmul.f32 %v2151, 1.442695
  %v2231 = vpow.pop %v2230
  %v2232 = vmul.f32 %v2152, 1.442695
  %v2233 = vpow.pop %v2232
  %v2234 = vmul.f32 %v2153, 1.442695
  %v2235 = vpow.pop %v2234
  %v2236 = vmul.f32 %v2154, 1.442695
  %v2237 = vpow.pop %v2236
  %v2238 = vmul.f32 %v2155, 1.442695
  %v2239 = vpow.pop %v2238
  %v2240 = vmul.f32 %v2156, 1.442695
  %v2241 = vpow.pop %v2240
  %v2242 = vmul.f32 %v2157, 1.442695
  %v2243 = vpow.pop %v2242
  %v2244 = vmul.f32 %v2158, 1.442695
  %v2245 = vpow.pop %v2244
  %v2246 = vmul.f32 %v2159, 1.442695
  %v2247 = vpow.pop %v2246
  %v2248 = vmul.f32 %v2160, 1.442695
  %v2249 = vpow.pop %v2248
  %v2250 = vmul.f32 %v2161, 1.442695
  %v2251 = vpow.pop %v2250
  %v2252 = vmul.f32 %v2162, 1.442695
  %v2253 = vpow.pop %v2252
  %v2254 = vmul.f32 %v2163, 1.442695
  %v2255 = vpow.pop %v2254
  %v2256 = vmul.f32 %v2164, 1.442695
  %v2257 = vpow.pop %v2256
  %v2258 = vmul.f32 %v2165, 1.442695
  %v2259 = vpow.pop %v2258
  %v2260 = vmul.f32 %v2166, 1.442695
  %v2261 = vpow.pop %v2260
  %v2262 = vmul.f32 %v2167, 1.442695
  %v2263 = vpow.pop %v2262
  %v2264 = vmul.f32 %v2168, 1.442695
  %v2265 = vpow.pop %v2264
  %v2266 = vmul.f32 %v2169, 1.442695
  %v2267 = vpow.pop %v2266
  %v2268 = vmul.f32 %v2170, 1.442695
  %v2269 = vpow.pop %v2268
  %v2270 = vmul.f32 %v2171, 1.442695
  %v2271 = vpow.pop %v2270
  %v2272 = vmul.f32 %v2172, 1.442695
  %v2273 = vpow.pop %v2272
  %v2274 = vmul.f32 %v2173, 1.442695
  %v2275 = vpow.pop %v2274
  %v2276 = vmul.f32 %v2174, 1.442695
  %v2277 = vpow.pop %v2276
  %v2278 = vmul.f32 %v2175, 1.442695
  %v2279 = vpow.pop %v2278
  %v2280 = vmul.f32 %v2176, 1.442695
  %v2281 = vpow.pop %v2280
  %v2282 = vmul.f32 %v2177, 1.442695
  %v2283 = vpow.pop %v2282
  %v2284 = vmul.f32 %v2178, 1.442695
  %v2285 = vpow.pop %v2284
  %v2286 = vmul.f32 %v2179, 1.442695
  %v2287 = vpow.pop %v2286
  %v2288 = vmul.f32 %v2180, 1.442695
  %v2289 = vpow.pop %v2288
  %v2290 = vmul.f32 %v2181, 1.442695
  %v2291 = vpow.pop %v2290
  %v2292 = vmul.f32 %v2182, 1.442695
  %v2293 = vpow.pop %v2292
  %v2294 = vmul.f32 %v2183, 1.442695
  %v2295 = vpow.pop %v2294
  %v2296 = vmul.f32 %v2184, 1.442695
  %v2297 = vpow.pop %v2296
  %v2298 = vmul.f32 %v2185, 1.442695
  %v2299 = vpow.pop %v2298
  %v2300 = vmul.f32 %v2186, 1.442695
  %v2301 = vpow.pop %v2300
  %v2302 = vmul.f32 %v2187, 1.442695
  %v2303 = vpow.pop %v2302
  %v2304 = vmul.f32 %v2188, 1.442695
  %v2305 = vpow.pop %v2304
  %v2306 = vmul.f32 %v2189, 1.442695
  %v2307 = vpow.pop %v2306
  %v2308 = vmul.f32 %v2190, 1.442695
  %v2309 = vpow.pop %v2308
  %v2310 = vmul.f32 %v2191, 1.442695
  %v2311 = vpow.pop %v2310
  %v2312 = vmul.f32 %v2192, 1.442695
  %v2313 = vpow.pop %v2312
  %v2314 = vmul.f32 %v2193, 1.442695
  %v2315 = vpow.pop %v2314
  %v2316 = vmul.f32 %v2194, 1.442695
  %v2317 = vpow.pop %v2316
  %v2318 = vmul.f32 %v2195, 1.442695
  %v2319 = vpow.pop %v2318
  %v2320 = vmul.f32 %v2196, 1.442695
  %v2321 = vpow.pop %v2320
  %v2322 = vmul.f32 %v2197, 1.442695
  %v2323 = vpow.pop %v2322
  %v2324 = vmul.f32 %v2198, 1.442695
  %v2325 = vpow.pop %v2324
  %v2326 = vmul.f32 %v2199, 1.442695
  %v2327 = vpow.pop %v2326
  %v2328 = vsel %vm1943, %v2201, 0.0
  %2329 = vadd.xlane.f32.xlu0 %v2328
  %v2330 = vpop.xlane.xlu0 %2329
  %v2331 = vsel %vm1943, %v2203, 0.0
  %2332 = vadd.xlane.f32.xlu0 %v2331
  %v2333 = vpop.xlane.xlu0 %2332
  %v2334 = vsel %vm1943, %v2205, 0.0
  %2335 = vadd.xlane.f32.xlu0 %v2334
  %v2336 = vpop.xlane.xlu0 %2335
  %v2337 = vsel %vm1943, %v2207, 0.0
  %2338 = vadd.xlane.f32.xlu0 %v2337
  %v2339 = vpop.xlane.xlu0 %2338
  %v2340 = vsel %vm1943, %v2209, 0.0
  %2341 = vadd.xlane.f32.xlu0 %v2340
  %v2342 = vpop.xlane.xlu0 %2341
  %v2343 = vsel %vm1943, %v2211, 0.0
  %2344 = vadd.xlane.f32.xlu0 %v2343
  %v2345 = vpop.xlane.xlu0 %2344
  %v2346 = vsel %vm1943, %v2213, 0.0
  %2347 = vadd.xlane.f32.xlu0 %v2346
  %v2348 = vpop.xlane.xlu0 %2347
  %v2349 = vsel %vm1943, %v2215, 0.0
  %2350 = vadd.xlane.f32.xlu0 %v2349
  %v2351 = vpop.xlane.xlu0 %2350
  %v2352 = vsel %vm1943, %v2217, 0.0
  %2353 = vadd.xlane.f32.xlu0 %v2352
  %v2354 = vpop.xlane.xlu0 %2353
  %v2355 = vsel %vm1943, %v2219, 0.0
  %2356 = vadd.xlane.f32.xlu0 %v2355
  %v2357 = vpop.xlane.xlu0 %2356
  %v2358 = vsel %vm1943, %v2221, 0.0
  %2359 = vadd.xlane.f32.xlu0 %v2358
  %v2360 = vpop.xlane.xlu0 %2359
  %v2361 = vsel %vm1943, %v2223, 0.0
  %2362 = vadd.xlane.f32.xlu0 %v2361
  %v2363 = vpop.xlane.xlu0 %2362
  %v2364 = vsel %vm1943, %v2225, 0.0
  %2365 = vadd.xlane.f32.xlu0 %v2364
  %v2366 = vpop.xlane.xlu0 %2365
  %v2367 = vsel %vm1943, %v2227, 0.0
  %2368 = vadd.xlane.f32.xlu0 %v2367
  %v2369 = vpop.xlane.xlu0 %2368
  %v2370 = vsel %vm1943, %v2229, 0.0
  %2371 = vadd.xlane.f32.xlu0 %v2370
  %v2372 = vpop.xlane.xlu0 %2371
  %v2373 = vsel %vm1943, %v2231, 0.0
  %2374 = vadd.xlane.f32.xlu0 %v2373
  %v2375 = vpop.xlane.xlu0 %2374
  %v2376 = vsel %vm1943, %v2233, 0.0
  %2377 = vadd.xlane.f32.xlu0 %v2376
  %v2378 = vpop.xlane.xlu0 %2377
  %v2379 = vsel %vm1943, %v2235, 0.0
  %2380 = vadd.xlane.f32.xlu0 %v2379
  %v2381 = vpop.xlane.xlu0 %2380
  %v2382 = vsel %vm1943, %v2237, 0.0
  %2383 = vadd.xlane.f32.xlu0 %v2382
  %v2384 = vpop.xlane.xlu0 %2383
  %v2385 = vsel %vm1943, %v2239, 0.0
  %2386 = vadd.xlane.f32.xlu0 %v2385
  %v2387 = vpop.xlane.xlu0 %2386
  %v2388 = vsel %vm1943, %v2241, 0.0
  %2389 = vadd.xlane.f32.xlu0 %v2388
  %v2390 = vpop.xlane.xlu0 %2389
  %v2391 = vsel %vm1943, %v2243, 0.0
  %2392 = vadd.xlane.f32.xlu0 %v2391
  %v2393 = vpop.xlane.xlu0 %2392
  %v2394 = vsel %vm1943, %v2245, 0.0
  %2395 = vadd.xlane.f32.xlu0 %v2394
  %v2396 = vpop.xlane.xlu0 %2395
  %v2397 = vsel %vm1943, %v2247, 0.0
  %2398 = vadd.xlane.f32.xlu0 %v2397
  %v2399 = vpop.xlane.xlu0 %2398
  %v2400 = vsel %vm1943, %v2249, 0.0
  %2401 = vadd.xlane.f32.xlu0 %v2400
  %v2402 = vpop.xlane.xlu0 %2401
  %v2403 = vsel %vm1943, %v2251, 0.0
  %2404 = vadd.xlane.f32.xlu0 %v2403
  %v2405 = vpop.xlane.xlu0 %2404
  %v2406 = vsel %vm1943, %v2253, 0.0
  %2407 = vadd.xlane.f32.xlu0 %v2406
  %v2408 = vpop.xlane.xlu0 %2407
  %v2409 = vsel %vm1943, %v2255, 0.0
  %2410 = vadd.xlane.f32.xlu0 %v2409
  %v2411 = vpop.xlane.xlu0 %2410
  %v2412 = vsel %vm1943, %v2257, 0.0
  %2413 = vadd.xlane.f32.xlu0 %v2412
  %v2414 = vpop.xlane.xlu0 %2413
  %v2415 = vsel %vm1943, %v2259, 0.0
  %2416 = vadd.xlane.f32.xlu0 %v2415
  %v2417 = vpop.xlane.xlu0 %2416
  %v2418 = vsel %vm1943, %v2261, 0.0
  %2419 = vadd.xlane.f32.xlu0 %v2418
  %v2420 = vpop.xlane.xlu0 %2419
  %v2421 = vsel %vm1943, %v2263, 0.0
  %2422 = vadd.xlane.f32.xlu0 %v2421
  %v2423 = vpop.xlane.xlu0 %2422
  %v2424 = vsel %vm1943, %v2265, 0.0
  %2425 = vadd.xlane.f32.xlu0 %v2424
  %v2426 = vpop.xlane.xlu0 %2425
  %v2427 = vsel %vm1943, %v2267, 0.0
  %2428 = vadd.xlane.f32.xlu0 %v2427
  %v2429 = vpop.xlane.xlu0 %2428
  %v2430 = vsel %vm1943, %v2269, 0.0
  %2431 = vadd.xlane.f32.xlu0 %v2430
  %v2432 = vpop.xlane.xlu0 %2431
  %v2433 = vsel %vm1943, %v2271, 0.0
  %2434 = vadd.xlane.f32.xlu0 %v2433
  %v2435 = vpop.xlane.xlu0 %2434
  %v2436 = vsel %vm1943, %v2273, 0.0
  %2437 = vadd.xlane.f32.xlu0 %v2436
  %v2438 = vpop.xlane.xlu0 %2437
  %v2439 = vsel %vm1943, %v2275, 0.0
  %2440 = vadd.xlane.f32.xlu0 %v2439
  %v2441 = vpop.xlane.xlu0 %2440
  %v2442 = vsel %vm1943, %v2277, 0.0
  %2443 = vadd.xlane.f32.xlu0 %v2442
  %v2444 = vpop.xlane.xlu0 %2443
  %v2445 = vsel %vm1943, %v2279, 0.0
  %2446 = vadd.xlane.f32.xlu0 %v2445
  %v2447 = vpop.xlane.xlu0 %2446
  %v2448 = vsel %vm1943, %v2281, 0.0
  %2449 = vadd.xlane.f32.xlu0 %v2448
  %v2450 = vpop.xlane.xlu0 %2449
  %v2451 = vsel %vm1943, %v2283, 0.0
  %2452 = vadd.xlane.f32.xlu0 %v2451
  %v2453 = vpop.xlane.xlu0 %2452
  %v2454 = vsel %vm1943, %v2285, 0.0
  %2455 = vadd.xlane.f32.xlu0 %v2454
  %v2456 = vpop.xlane.xlu0 %2455
  %v2457 = vsel %vm1943, %v2287, 0.0
  %2458 = vadd.xlane.f32.xlu0 %v2457
  %v2459 = vpop.xlane.xlu0 %2458
  %v2460 = vsel %vm1943, %v2289, 0.0
  %2461 = vadd.xlane.f32.xlu0 %v2460
  %v2462 = vpop.xlane.xlu0 %2461
  %v2463 = vsel %vm1943, %v2291, 0.0
  %2464 = vadd.xlane.f32.xlu0 %v2463
  %v2465 = vpop.xlane.xlu0 %2464
  %v2466 = vsel %vm1943, %v2293, 0.0
  %2467 = vadd.xlane.f32.xlu0 %v2466
  %v2468 = vpop.xlane.xlu0 %2467
  %v2469 = vsel %vm1943, %v2295, 0.0
  %2470 = vadd.xlane.f32.xlu0 %v2469
  %v2471 = vpop.xlane.xlu0 %2470
  %v2472 = vsel %vm1943, %v2297, 0.0
  %2473 = vadd.xlane.f32.xlu0 %v2472
  %v2474 = vpop.xlane.xlu0 %2473
  %v2475 = vsel %vm1943, %v2299, 0.0
  %2476 = vadd.xlane.f32.xlu0 %v2475
  %v2477 = vpop.xlane.xlu0 %2476
  %v2478 = vsel %vm1943, %v2301, 0.0
  %2479 = vadd.xlane.f32.xlu0 %v2478
  %v2480 = vpop.xlane.xlu0 %2479
  %v2481 = vsel %vm1943, %v2303, 0.0
  %2482 = vadd.xlane.f32.xlu0 %v2481
  %v2483 = vpop.xlane.xlu0 %2482
  %v2484 = vsel %vm1943, %v2305, 0.0
  %2485 = vadd.xlane.f32.xlu0 %v2484
  %v2486 = vpop.xlane.xlu0 %2485
  %v2487 = vsel %vm1943, %v2307, 0.0
  %2488 = vadd.xlane.f32.xlu0 %v2487
  %v2489 = vpop.xlane.xlu0 %2488
  %v2490 = vsel %vm1943, %v2309, 0.0
  %2491 = vadd.xlane.f32.xlu0 %v2490
  %v2492 = vpop.xlane.xlu0 %2491
  %v2493 = vsel %vm1943, %v2311, 0.0
  %2494 = vadd.xlane.f32.xlu0 %v2493
  %v2495 = vpop.xlane.xlu0 %2494
  %v2496 = vsel %vm1943, %v2313, 0.0
  %2497 = vadd.xlane.f32.xlu0 %v2496
  %v2498 = vpop.xlane.xlu0 %2497
  %v2499 = vsel %vm1943, %v2315, 0.0
  %2500 = vadd.xlane.f32.xlu0 %v2499
  %v2501 = vpop.xlane.xlu0 %2500
  %v2502 = vsel %vm1943, %v2317, 0.0
  %2503 = vadd.xlane.f32.xlu0 %v2502
  %v2504 = vpop.xlane.xlu0 %2503
  %v2505 = vsel %vm1943, %v2319, 0.0
  %2506 = vadd.xlane.f32.xlu0 %v2505
  %v2507 = vpop.xlane.xlu0 %2506
  %v2508 = vsel %vm1943, %v2321, 0.0
  %2509 = vadd.xlane.f32.xlu0 %v2508
  %v2510 = vpop.xlane.xlu0 %2509
  %v2511 = vsel %vm1943, %v2323, 0.0
  %2512 = vadd.xlane.f32.xlu0 %v2511
  %v2513 = vpop.xlane.xlu0 %2512
  %v2514 = vsel %vm1943, %v2325, 0.0
  %2515 = vadd.xlane.f32.xlu0 %v2514
  %v2516 = vpop.xlane.xlu0 %2515
  %v2517 = vsel %vm1943, %v2327, 0.0
  %2518 = vadd.xlane.f32.xlu0 %v2517
  %v2519 = vpop.xlane.xlu0 %2518
  %2520 = vrot.lane.b32.xlu0 %v375, 64
  %v2521 = vpop.permute.xlu0 %2520
  %2522 = vrot.lane.b32.xlu0 %v377, 64
  %v2523 = vpop.permute.xlu0 %2522
  %v2527 = vsel %vm1943, %v2201, 0
  %v2530 = vsel %vm1943, %v2203, 0
  %2532 = vmatpush.msra.mxu0 0.0
  %2533 = vmatpush.msra.mxu0 0.0
  %2534 = vmatpush.msra.mxu0 0.0
  %2535 = vmatpush.msra.mxu0 0.0
  %2536 = vmatpush.msra.mxu0 0.0
  %2537 = vmatpush.msra.mxu0 0.0
  %2538 = vmatpush.msra.mxu0 0.0
  %2539 = vmatpush.msra.mxu0 0.0
  %2540 = vmatpush.msra.mxu0 0.0
  %2541 = vmatpush.msra.mxu0 0.0
  %2542 = vmatpush.msra.mxu0 0.0
  %2543 = vmatpush.msra.mxu0 0.0
  %2544 = vmatpush.msra.mxu0 0.0
  %2545 = vmatpush.msra.mxu0 0.0
  %2546 = vmatpush.msra.mxu0 %v2523
  %2547 = vmatpush.msra.mxu0 %v2521
  %2548 = vmatmul.f32.gmra.mxu0 %v2527
  %v2549 = vpop.f32.mrf.mxu0
  %v2550 = vadd.f32 0.0, %v2549
  %2551 = vmatmul.f32.gmra.mxu0 %v2530
  %v2552 = vpop.f32.mrf.mxu0
  %v2553 = vadd.f32 0.0, %v2552
  %2554 = vdwg.mxu0
  %2555 = vrot.lane.b32.xlu0 %v380, 64
  %v2556 = vpop.permute.xlu0 %2555
  %2557 = vrot.lane.b32.xlu0 %v382, 64
  %v2558 = vpop.permute.xlu0 %2557
  %v2562 = vsel %vm1943, %v2205, 0
  %v2565 = vsel %vm1943, %v2207, 0
  %2567 = vmatpush.msra.mxu0 0.0
  %2568 = vmatpush.msra.mxu0 0.0
  %2569 = vmatpush.msra.mxu0 0.0
  %2570 = vmatpush.msra.mxu0 0.0
  %2571 = vmatpush.msra.mxu0 0.0
  %2572 = vmatpush.msra.mxu0 0.0
  %2573 = vmatpush.msra.mxu0 0.0
  %2574 = vmatpush.msra.mxu0 0.0
  %2575 = vmatpush.msra.mxu0 0.0
  %2576 = vmatpush.msra.mxu0 0.0
  %2577 = vmatpush.msra.mxu0 0.0
  %2578 = vmatpush.msra.mxu0 0.0
  %2579 = vmatpush.msra.mxu0 0.0
  %2580 = vmatpush.msra.mxu0 0.0
  %2581 = vmatpush.msra.mxu0 %v2558
  %2582 = vmatpush.msra.mxu0 %v2556
  %2583 = vmatmul.f32.gmra.mxu0 %v2562
  %v2584 = vpop.f32.mrf.mxu0
  %v2585 = vadd.f32 0.0, %v2584
  %2586 = vmatmul.f32.gmra.mxu0 %v2565
  %v2587 = vpop.f32.mrf.mxu0
  %v2588 = vadd.f32 0.0, %v2587
  %2589 = vdwg.mxu0
  %2590 = vrot.lane.b32.xlu0 %v385, 64
  %v2591 = vpop.permute.xlu0 %2590
  %2592 = vrot.lane.b32.xlu0 %v387, 64
  %v2593 = vpop.permute.xlu0 %2592
  %v2597 = vsel %vm1943, %v2209, 0
  %v2600 = vsel %vm1943, %v2211, 0
  %2602 = vmatpush.msra.mxu0 0.0
  %2603 = vmatpush.msra.mxu0 0.0
  %2604 = vmatpush.msra.mxu0 0.0
  %2605 = vmatpush.msra.mxu0 0.0
  %2606 = vmatpush.msra.mxu0 0.0
  %2607 = vmatpush.msra.mxu0 0.0
  %2608 = vmatpush.msra.mxu0 0.0
  %2609 = vmatpush.msra.mxu0 0.0
  %2610 = vmatpush.msra.mxu0 0.0
  %2611 = vmatpush.msra.mxu0 0.0
  %2612 = vmatpush.msra.mxu0 0.0
  %2613 = vmatpush.msra.mxu0 0.0
  %2614 = vmatpush.msra.mxu0 0.0
  %2615 = vmatpush.msra.mxu0 0.0
  %2616 = vmatpush.msra.mxu0 %v2593
  %2617 = vmatpush.msra.mxu0 %v2591
  %2618 = vmatmul.f32.gmra.mxu0 %v2597
  %v2619 = vpop.f32.mrf.mxu0
  %v2620 = vadd.f32 0.0, %v2619
  %2621 = vmatmul.f32.gmra.mxu0 %v2600
  %v2622 = vpop.f32.mrf.mxu0
  %v2623 = vadd.f32 0.0, %v2622
  %2624 = vdwg.mxu0
  %2625 = vrot.lane.b32.xlu0 %v390, 64
  %v2626 = vpop.permute.xlu0 %2625
  %2627 = vrot.lane.b32.xlu0 %v392, 64
  %v2628 = vpop.permute.xlu0 %2627
  %v2632 = vsel %vm1943, %v2213, 0
  %v2635 = vsel %vm1943, %v2215, 0
  %2637 = vmatpush.msra.mxu0 0.0
  %2638 = vmatpush.msra.mxu0 0.0
  %2639 = vmatpush.msra.mxu0 0.0
  %2640 = vmatpush.msra.mxu0 0.0
  %2641 = vmatpush.msra.mxu0 0.0
  %2642 = vmatpush.msra.mxu0 0.0
  %2643 = vmatpush.msra.mxu0 0.0
  %2644 = vmatpush.msra.mxu0 0.0
  %2645 = vmatpush.msra.mxu0 0.0
  %2646 = vmatpush.msra.mxu0 0.0
  %2647 = vmatpush.msra.mxu0 0.0
  %2648 = vmatpush.msra.mxu0 0.0
  %2649 = vmatpush.msra.mxu0 0.0
  %2650 = vmatpush.msra.mxu0 0.0
  %2651 = vmatpush.msra.mxu0 %v2628
  %2652 = vmatpush.msra.mxu0 %v2626
  %2653 = vmatmul.f32.gmra.mxu0 %v2632
  %v2654 = vpop.f32.mrf.mxu0
  %v2655 = vadd.f32 0.0, %v2654
  %2656 = vmatmul.f32.gmra.mxu0 %v2635
  %v2657 = vpop.f32.mrf.mxu0
  %v2658 = vadd.f32 0.0, %v2657
  %2659 = vdwg.mxu0
  %2660 = vrot.lane.b32.xlu0 %v395, 64
  %v2661 = vpop.permute.xlu0 %2660
  %2662 = vrot.lane.b32.xlu0 %v397, 64
  %v2663 = vpop.permute.xlu0 %2662
  %v2667 = vsel %vm1943, %v2217, 0
  %v2670 = vsel %vm1943, %v2219, 0
  %2672 = vmatpush.msra.mxu0 0.0
  %2673 = vmatpush.msra.mxu0 0.0
  %2674 = vmatpush.msra.mxu0 0.0
  %2675 = vmatpush.msra.mxu0 0.0
  %2676 = vmatpush.msra.mxu0 0.0
  %2677 = vmatpush.msra.mxu0 0.0
  %2678 = vmatpush.msra.mxu0 0.0
  %2679 = vmatpush.msra.mxu0 0.0
  %2680 = vmatpush.msra.mxu0 0.0
  %2681 = vmatpush.msra.mxu0 0.0
  %2682 = vmatpush.msra.mxu0 0.0
  %2683 = vmatpush.msra.mxu0 0.0
  %2684 = vmatpush.msra.mxu0 0.0
  %2685 = vmatpush.msra.mxu0 0.0
  %2686 = vmatpush.msra.mxu0 %v2663
  %2687 = vmatpush.msra.mxu0 %v2661
  %2688 = vmatmul.f32.gmra.mxu0 %v2667
  %v2689 = vpop.f32.mrf.mxu0
  %v2690 = vadd.f32 0.0, %v2689
  %2691 = vmatmul.f32.gmra.mxu0 %v2670
  %v2692 = vpop.f32.mrf.mxu0
  %v2693 = vadd.f32 0.0, %v2692
  %2694 = vdwg.mxu0
  %2695 = vrot.lane.b32.xlu0 %v400, 64
  %v2696 = vpop.permute.xlu0 %2695
  %2697 = vrot.lane.b32.xlu0 %v402, 64
  %v2698 = vpop.permute.xlu0 %2697
  %v2702 = vsel %vm1943, %v2221, 0
  %v2705 = vsel %vm1943, %v2223, 0
  %2707 = vmatpush.msra.mxu0 0.0
  %2708 = vmatpush.msra.mxu0 0.0
  %2709 = vmatpush.msra.mxu0 0.0
  %2710 = vmatpush.msra.mxu0 0.0
  %2711 = vmatpush.msra.mxu0 0.0
  %2712 = vmatpush.msra.mxu0 0.0
  %2713 = vmatpush.msra.mxu0 0.0
  %2714 = vmatpush.msra.mxu0 0.0
  %2715 = vmatpush.msra.mxu0 0.0
  %2716 = vmatpush.msra.mxu0 0.0
  %2717 = vmatpush.msra.mxu0 0.0
  %2718 = vmatpush.msra.mxu0 0.0
  %2719 = vmatpush.msra.mxu0 0.0
  %2720 = vmatpush.msra.mxu0 0.0
  %2721 = vmatpush.msra.mxu0 %v2698
  %2722 = vmatpush.msra.mxu0 %v2696
  %2723 = vmatmul.f32.gmra.mxu0 %v2702
  %v2724 = vpop.f32.mrf.mxu0
  %v2725 = vadd.f32 0.0, %v2724
  %2726 = vmatmul.f32.gmra.mxu0 %v2705
  %v2727 = vpop.f32.mrf.mxu0
  %v2728 = vadd.f32 0.0, %v2727
  %2729 = vdwg.mxu0
  %2730 = vrot.lane.b32.xlu0 %v405, 64
  %v2731 = vpop.permute.xlu0 %2730
  %2732 = vrot.lane.b32.xlu0 %v407, 64
  %v2733 = vpop.permute.xlu0 %2732
  %v2737 = vsel %vm1943, %v2225, 0
  %v2740 = vsel %vm1943, %v2227, 0
  %2742 = vmatpush.msra.mxu0 0.0
  %2743 = vmatpush.msra.mxu0 0.0
  %2744 = vmatpush.msra.mxu0 0.0
  %2745 = vmatpush.msra.mxu0 0.0
  %2746 = vmatpush.msra.mxu0 0.0
  %2747 = vmatpush.msra.mxu0 0.0
  %2748 = vmatpush.msra.mxu0 0.0
  %2749 = vmatpush.msra.mxu0 0.0
  %2750 = vmatpush.msra.mxu0 0.0
  %2751 = vmatpush.msra.mxu0 0.0
  %2752 = vmatpush.msra.mxu0 0.0
  %2753 = vmatpush.msra.mxu0 0.0
  %2754 = vmatpush.msra.mxu0 0.0
  %2755 = vmatpush.msra.mxu0 0.0
  %2756 = vmatpush.msra.mxu0 %v2733
  %2757 = vmatpush.msra.mxu0 %v2731
  %2758 = vmatmul.f32.gmra.mxu0 %v2737
  %v2759 = vpop.f32.mrf.mxu0
  %v2760 = vadd.f32 0.0, %v2759
  %2761 = vmatmul.f32.gmra.mxu0 %v2740
  %v2762 = vpop.f32.mrf.mxu0
  %v2763 = vadd.f32 0.0, %v2762
  %2764 = vdwg.mxu0
  %2765 = vrot.lane.b32.xlu0 %v410, 64
  %v2766 = vpop.permute.xlu0 %2765
  %2767 = vrot.lane.b32.xlu0 %v412, 64
  %v2768 = vpop.permute.xlu0 %2767
  %v2772 = vsel %vm1943, %v2229, 0
  %v2775 = vsel %vm1943, %v2231, 0
  %2777 = vmatpush.msra.mxu0 0.0
  %2778 = vmatpush.msra.mxu0 0.0
  %2779 = vmatpush.msra.mxu0 0.0
  %2780 = vmatpush.msra.mxu0 0.0
  %2781 = vmatpush.msra.mxu0 0.0
  %2782 = vmatpush.msra.mxu0 0.0
  %2783 = vmatpush.msra.mxu0 0.0
  %2784 = vmatpush.msra.mxu0 0.0
  %2785 = vmatpush.msra.mxu0 0.0
  %2786 = vmatpush.msra.mxu0 0.0
  %2787 = vmatpush.msra.mxu0 0.0
  %2788 = vmatpush.msra.mxu0 0.0
  %2789 = vmatpush.msra.mxu0 0.0
  %2790 = vmatpush.msra.mxu0 0.0
  %2791 = vmatpush.msra.mxu0 %v2768
  %2792 = vmatpush.msra.mxu0 %v2766
  %2793 = vmatmul.f32.gmra.mxu0 %v2772
  %v2794 = vpop.f32.mrf.mxu0
  %v2795 = vadd.f32 0.0, %v2794
  %2796 = vmatmul.f32.gmra.mxu0 %v2775
  %v2797 = vpop.f32.mrf.mxu0
  %v2798 = vadd.f32 0.0, %v2797
  %2799 = vdwg.mxu0
  %2800 = vrot.lane.b32.xlu0 %v431, 64
  %v2801 = vpop.permute.xlu0 %2800
  %2802 = vrot.lane.b32.xlu0 %v433, 64
  %v2803 = vpop.permute.xlu0 %2802
  %v2807 = vsel %vm1943, %v2233, 0
  %v2810 = vsel %vm1943, %v2235, 0
  %2812 = vmatpush.msra.mxu0 0.0
  %2813 = vmatpush.msra.mxu0 0.0
  %2814 = vmatpush.msra.mxu0 0.0
  %2815 = vmatpush.msra.mxu0 0.0
  %2816 = vmatpush.msra.mxu0 0.0
  %2817 = vmatpush.msra.mxu0 0.0
  %2818 = vmatpush.msra.mxu0 0.0
  %2819 = vmatpush.msra.mxu0 0.0
  %2820 = vmatpush.msra.mxu0 0.0
  %2821 = vmatpush.msra.mxu0 0.0
  %2822 = vmatpush.msra.mxu0 0.0
  %2823 = vmatpush.msra.mxu0 0.0
  %2824 = vmatpush.msra.mxu0 0.0
  %2825 = vmatpush.msra.mxu0 0.0
  %2826 = vmatpush.msra.mxu0 %v2803
  %2827 = vmatpush.msra.mxu0 %v2801
  %2828 = vmatmul.f32.gmra.mxu0 %v2807
  %v2829 = vpop.f32.mrf.mxu0
  %v2830 = vadd.f32 0.0, %v2829
  %2831 = vmatmul.f32.gmra.mxu0 %v2810
  %v2832 = vpop.f32.mrf.mxu0
  %v2833 = vadd.f32 0.0, %v2832
  %2834 = vdwg.mxu0
  %2835 = vrot.lane.b32.xlu0 %v435, 64
  %v2836 = vpop.permute.xlu0 %2835
  %2837 = vrot.lane.b32.xlu0 %v437, 64
  %v2838 = vpop.permute.xlu0 %2837
  %v2842 = vsel %vm1943, %v2237, 0
  %v2845 = vsel %vm1943, %v2239, 0
  %2847 = vmatpush.msra.mxu0 0.0
  %2848 = vmatpush.msra.mxu0 0.0
  %2849 = vmatpush.msra.mxu0 0.0
  %2850 = vmatpush.msra.mxu0 0.0
  %2851 = vmatpush.msra.mxu0 0.0
  %2852 = vmatpush.msra.mxu0 0.0
  %2853 = vmatpush.msra.mxu0 0.0
  %2854 = vmatpush.msra.mxu0 0.0
  %2855 = vmatpush.msra.mxu0 0.0
  %2856 = vmatpush.msra.mxu0 0.0
  %2857 = vmatpush.msra.mxu0 0.0
  %2858 = vmatpush.msra.mxu0 0.0
  %2859 = vmatpush.msra.mxu0 0.0
  %2860 = vmatpush.msra.mxu0 0.0
  %2861 = vmatpush.msra.mxu0 %v2838
  %2862 = vmatpush.msra.mxu0 %v2836
  %2863 = vmatmul.f32.gmra.mxu0 %v2842
  %v2864 = vpop.f32.mrf.mxu0
  %v2865 = vadd.f32 0.0, %v2864
  %2866 = vmatmul.f32.gmra.mxu0 %v2845
  %v2867 = vpop.f32.mrf.mxu0
  %v2868 = vadd.f32 0.0, %v2867
  %2869 = vdwg.mxu0
  %2870 = vrot.lane.b32.xlu0 %v439, 64
  %v2871 = vpop.permute.xlu0 %2870
  %2872 = vrot.lane.b32.xlu0 %v441, 64
  %v2873 = vpop.permute.xlu0 %2872
  %v2877 = vsel %vm1943, %v2241, 0
  %v2880 = vsel %vm1943, %v2243, 0
  %2882 = vmatpush.msra.mxu0 0.0
  %2883 = vmatpush.msra.mxu0 0.0
  %2884 = vmatpush.msra.mxu0 0.0
  %2885 = vmatpush.msra.mxu0 0.0
  %2886 = vmatpush.msra.mxu0 0.0
  %2887 = vmatpush.msra.mxu0 0.0
  %2888 = vmatpush.msra.mxu0 0.0
  %2889 = vmatpush.msra.mxu0 0.0
  %2890 = vmatpush.msra.mxu0 0.0
  %2891 = vmatpush.msra.mxu0 0.0
  %2892 = vmatpush.msra.mxu0 0.0
  %2893 = vmatpush.msra.mxu0 0.0
  %2894 = vmatpush.msra.mxu0 0.0
  %2895 = vmatpush.msra.mxu0 0.0
  %2896 = vmatpush.msra.mxu0 %v2873
  %2897 = vmatpush.msra.mxu0 %v2871
  %2898 = vmatmul.f32.gmra.mxu0 %v2877
  %v2899 = vpop.f32.mrf.mxu0
  %v2900 = vadd.f32 0.0, %v2899
  %2901 = vmatmul.f32.gmra.mxu0 %v2880
  %v2902 = vpop.f32.mrf.mxu0
  %v2903 = vadd.f32 0.0, %v2902
  %2904 = vdwg.mxu0
  %2905 = vrot.lane.b32.xlu0 %v443, 64
  %v2906 = vpop.permute.xlu0 %2905
  %2907 = vrot.lane.b32.xlu0 %v445, 64
  %v2908 = vpop.permute.xlu0 %2907
  %v2912 = vsel %vm1943, %v2245, 0
  %v2915 = vsel %vm1943, %v2247, 0
  %2917 = vmatpush.msra.mxu0 0.0
  %2918 = vmatpush.msra.mxu0 0.0
  %2919 = vmatpush.msra.mxu0 0.0
  %2920 = vmatpush.msra.mxu0 0.0
  %2921 = vmatpush.msra.mxu0 0.0
  %2922 = vmatpush.msra.mxu0 0.0
  %2923 = vmatpush.msra.mxu0 0.0
  %2924 = vmatpush.msra.mxu0 0.0
  %2925 = vmatpush.msra.mxu0 0.0
  %2926 = vmatpush.msra.mxu0 0.0
  %2927 = vmatpush.msra.mxu0 0.0
  %2928 = vmatpush.msra.mxu0 0.0
  %2929 = vmatpush.msra.mxu0 0.0
  %2930 = vmatpush.msra.mxu0 0.0
  %2931 = vmatpush.msra.mxu0 %v2908
  %2932 = vmatpush.msra.mxu0 %v2906
  %2933 = vmatmul.f32.gmra.mxu0 %v2912
  %v2934 = vpop.f32.mrf.mxu0
  %v2935 = vadd.f32 0.0, %v2934
  %2936 = vmatmul.f32.gmra.mxu0 %v2915
  %v2937 = vpop.f32.mrf.mxu0
  %v2938 = vadd.f32 0.0, %v2937
  %2939 = vdwg.mxu0
  %2940 = vrot.lane.b32.xlu0 %v447, 64
  %v2941 = vpop.permute.xlu0 %2940
  %2942 = vrot.lane.b32.xlu0 %v449, 64
  %v2943 = vpop.permute.xlu0 %2942
  %v2947 = vsel %vm1943, %v2249, 0
  %v2950 = vsel %vm1943, %v2251, 0
  %2952 = vmatpush.msra.mxu0 0.0
  %2953 = vmatpush.msra.mxu0 0.0
  %2954 = vmatpush.msra.mxu0 0.0
  %2955 = vmatpush.msra.mxu0 0.0
  %2956 = vmatpush.msra.mxu0 0.0
  %2957 = vmatpush.msra.mxu0 0.0
  %2958 = vmatpush.msra.mxu0 0.0
  %2959 = vmatpush.msra.mxu0 0.0
  %2960 = vmatpush.msra.mxu0 0.0
  %2961 = vmatpush.msra.mxu0 0.0
  %2962 = vmatpush.msra.mxu0 0.0
  %2963 = vmatpush.msra.mxu0 0.0
  %2964 = vmatpush.msra.mxu0 0.0
  %2965 = vmatpush.msra.mxu0 0.0
  %2966 = vmatpush.msra.mxu0 %v2943
  %2967 = vmatpush.msra.mxu0 %v2941
  %2968 = vmatmul.f32.gmra.mxu0 %v2947
  %v2969 = vpop.f32.mrf.mxu0
  %v2970 = vadd.f32 0.0, %v2969
  %2971 = vmatmul.f32.gmra.mxu0 %v2950
  %v2972 = vpop.f32.mrf.mxu0
  %v2973 = vadd.f32 0.0, %v2972
  %2974 = vdwg.mxu0
  %2975 = vrot.lane.b32.xlu0 %v451, 64
  %v2976 = vpop.permute.xlu0 %2975
  %2977 = vrot.lane.b32.xlu0 %v453, 64
  %v2978 = vpop.permute.xlu0 %2977
  %v2982 = vsel %vm1943, %v2253, 0
  %v2985 = vsel %vm1943, %v2255, 0
  %2987 = vmatpush.msra.mxu0 0.0
  %2988 = vmatpush.msra.mxu0 0.0
  %2989 = vmatpush.msra.mxu0 0.0
  %2990 = vmatpush.msra.mxu0 0.0
  %2991 = vmatpush.msra.mxu0 0.0
  %2992 = vmatpush.msra.mxu0 0.0
  %2993 = vmatpush.msra.mxu0 0.0
  %2994 = vmatpush.msra.mxu0 0.0
  %2995 = vmatpush.msra.mxu0 0.0
  %2996 = vmatpush.msra.mxu0 0.0
  %2997 = vmatpush.msra.mxu0 0.0
  %2998 = vmatpush.msra.mxu0 0.0
  %2999 = vmatpush.msra.mxu0 0.0
  %3000 = vmatpush.msra.mxu0 0.0
  %3001 = vmatpush.msra.mxu0 %v2978
  %3002 = vmatpush.msra.mxu0 %v2976
  %3003 = vmatmul.f32.gmra.mxu0 %v2982
  %v3004 = vpop.f32.mrf.mxu0
  %v3005 = vadd.f32 0.0, %v3004
  %3006 = vmatmul.f32.gmra.mxu0 %v2985
  %v3007 = vpop.f32.mrf.mxu0
  %v3008 = vadd.f32 0.0, %v3007
  %3009 = vdwg.mxu0
  %3010 = vrot.lane.b32.xlu0 %v455, 64
  %v3011 = vpop.permute.xlu0 %3010
  %3012 = vrot.lane.b32.xlu0 %v457, 64
  %v3013 = vpop.permute.xlu0 %3012
  %v3017 = vsel %vm1943, %v2257, 0
  %v3020 = vsel %vm1943, %v2259, 0
  %3022 = vmatpush.msra.mxu0 0.0
  %3023 = vmatpush.msra.mxu0 0.0
  %3024 = vmatpush.msra.mxu0 0.0
  %3025 = vmatpush.msra.mxu0 0.0
  %3026 = vmatpush.msra.mxu0 0.0
  %3027 = vmatpush.msra.mxu0 0.0
  %3028 = vmatpush.msra.mxu0 0.0
  %3029 = vmatpush.msra.mxu0 0.0
  %3030 = vmatpush.msra.mxu0 0.0
  %3031 = vmatpush.msra.mxu0 0.0
  %3032 = vmatpush.msra.mxu0 0.0
  %3033 = vmatpush.msra.mxu0 0.0
  %3034 = vmatpush.msra.mxu0 0.0
  %3035 = vmatpush.msra.mxu0 0.0
  %3036 = vmatpush.msra.mxu0 %v3013
  %3037 = vmatpush.msra.mxu0 %v3011
  %3038 = vmatmul.f32.gmra.mxu0 %v3017
  %v3039 = vpop.f32.mrf.mxu0
  %v3040 = vadd.f32 0.0, %v3039
  %3041 = vmatmul.f32.gmra.mxu0 %v3020
  %v3042 = vpop.f32.mrf.mxu0
  %v3043 = vadd.f32 0.0, %v3042
  %3044 = vdwg.mxu0
  %3045 = vrot.lane.b32.xlu0 %v459, 64
  %v3046 = vpop.permute.xlu0 %3045
  %3047 = vrot.lane.b32.xlu0 %v461, 64
  %v3048 = vpop.permute.xlu0 %3047
  %v3052 = vsel %vm1943, %v2261, 0
  %v3055 = vsel %vm1943, %v2263, 0
  %3057 = vmatpush.msra.mxu0 0.0
  %3058 = vmatpush.msra.mxu0 0.0
  %3059 = vmatpush.msra.mxu0 0.0
  %3060 = vmatpush.msra.mxu0 0.0
  %3061 = vmatpush.msra.mxu0 0.0
  %3062 = vmatpush.msra.mxu0 0.0
  %3063 = vmatpush.msra.mxu0 0.0
  %3064 = vmatpush.msra.mxu0 0.0
  %3065 = vmatpush.msra.mxu0 0.0
  %3066 = vmatpush.msra.mxu0 0.0
  %3067 = vmatpush.msra.mxu0 0.0
  %3068 = vmatpush.msra.mxu0 0.0
  %3069 = vmatpush.msra.mxu0 0.0
  %3070 = vmatpush.msra.mxu0 0.0
  %3071 = vmatpush.msra.mxu0 %v3048
  %3072 = vmatpush.msra.mxu0 %v3046
  %3073 = vmatmul.f32.gmra.mxu0 %v3052
  %v3074 = vpop.f32.mrf.mxu0
  %v3075 = vadd.f32 0.0, %v3074
  %3076 = vmatmul.f32.gmra.mxu0 %v3055
  %v3077 = vpop.f32.mrf.mxu0
  %v3078 = vadd.f32 0.0, %v3077
  %3079 = vdwg.mxu0
  %3080 = vrot.lane.b32.xlu0 %v463, 64
  %v3081 = vpop.permute.xlu0 %3080
  %3082 = vrot.lane.b32.xlu0 %v465, 64
  %v3083 = vpop.permute.xlu0 %3082
  %v3087 = vsel %vm1943, %v2265, 0
  %v3090 = vsel %vm1943, %v2267, 0
  %3092 = vmatpush.msra.mxu0 0.0
  %3093 = vmatpush.msra.mxu0 0.0
  %3094 = vmatpush.msra.mxu0 0.0
  %3095 = vmatpush.msra.mxu0 0.0
  %3096 = vmatpush.msra.mxu0 0.0
  %3097 = vmatpush.msra.mxu0 0.0
  %3098 = vmatpush.msra.mxu0 0.0
  %3099 = vmatpush.msra.mxu0 0.0
  %3100 = vmatpush.msra.mxu0 0.0
  %3101 = vmatpush.msra.mxu0 0.0
  %3102 = vmatpush.msra.mxu0 0.0
  %3103 = vmatpush.msra.mxu0 0.0
  %3104 = vmatpush.msra.mxu0 0.0
  %3105 = vmatpush.msra.mxu0 0.0
  %3106 = vmatpush.msra.mxu0 %v3083
  %3107 = vmatpush.msra.mxu0 %v3081
  %3108 = vmatmul.f32.gmra.mxu0 %v3087
  %v3109 = vpop.f32.mrf.mxu0
  %v3110 = vadd.f32 0.0, %v3109
  %3111 = vmatmul.f32.gmra.mxu0 %v3090
  %v3112 = vpop.f32.mrf.mxu0
  %v3113 = vadd.f32 0.0, %v3112
  %3114 = vdwg.mxu0
  %3115 = vrot.lane.b32.xlu0 %v467, 64
  %v3116 = vpop.permute.xlu0 %3115
  %3117 = vrot.lane.b32.xlu0 %v469, 64
  %v3118 = vpop.permute.xlu0 %3117
  %v3122 = vsel %vm1943, %v2269, 0
  %v3125 = vsel %vm1943, %v2271, 0
  %3127 = vmatpush.msra.mxu0 0.0
  %3128 = vmatpush.msra.mxu0 0.0
  %3129 = vmatpush.msra.mxu0 0.0
  %3130 = vmatpush.msra.mxu0 0.0
  %3131 = vmatpush.msra.mxu0 0.0
  %3132 = vmatpush.msra.mxu0 0.0
  %3133 = vmatpush.msra.mxu0 0.0
  %3134 = vmatpush.msra.mxu0 0.0
  %3135 = vmatpush.msra.mxu0 0.0
  %3136 = vmatpush.msra.mxu0 0.0
  %3137 = vmatpush.msra.mxu0 0.0
  %3138 = vmatpush.msra.mxu0 0.0
  %3139 = vmatpush.msra.mxu0 0.0
  %3140 = vmatpush.msra.mxu0 0.0
  %3141 = vmatpush.msra.mxu0 %v3118
  %3142 = vmatpush.msra.mxu0 %v3116
  %3143 = vmatmul.f32.gmra.mxu0 %v3122
  %v3144 = vpop.f32.mrf.mxu0
  %v3145 = vadd.f32 0.0, %v3144
  %3146 = vmatmul.f32.gmra.mxu0 %v3125
  %v3147 = vpop.f32.mrf.mxu0
  %v3148 = vadd.f32 0.0, %v3147
  %3149 = vdwg.mxu0
  %3150 = vrot.lane.b32.xlu0 %v471, 64
  %v3151 = vpop.permute.xlu0 %3150
  %3152 = vrot.lane.b32.xlu0 %v473, 64
  %v3153 = vpop.permute.xlu0 %3152
  %v3157 = vsel %vm1943, %v2273, 0
  %v3160 = vsel %vm1943, %v2275, 0
  %3162 = vmatpush.msra.mxu0 0.0
  %3163 = vmatpush.msra.mxu0 0.0
  %3164 = vmatpush.msra.mxu0 0.0
  %3165 = vmatpush.msra.mxu0 0.0
  %3166 = vmatpush.msra.mxu0 0.0
  %3167 = vmatpush.msra.mxu0 0.0
  %3168 = vmatpush.msra.mxu0 0.0
  %3169 = vmatpush.msra.mxu0 0.0
  %3170 = vmatpush.msra.mxu0 0.0
  %3171 = vmatpush.msra.mxu0 0.0
  %3172 = vmatpush.msra.mxu0 0.0
  %3173 = vmatpush.msra.mxu0 0.0
  %3174 = vmatpush.msra.mxu0 0.0
  %3175 = vmatpush.msra.mxu0 0.0
  %3176 = vmatpush.msra.mxu0 %v3153
  %3177 = vmatpush.msra.mxu0 %v3151
  %3178 = vmatmul.f32.gmra.mxu0 %v3157
  %v3179 = vpop.f32.mrf.mxu0
  %v3180 = vadd.f32 0.0, %v3179
  %3181 = vmatmul.f32.gmra.mxu0 %v3160
  %v3182 = vpop.f32.mrf.mxu0
  %v3183 = vadd.f32 0.0, %v3182
  %3184 = vdwg.mxu0
  %3185 = vrot.lane.b32.xlu0 %v475, 64
  %v3186 = vpop.permute.xlu0 %3185
  %3187 = vrot.lane.b32.xlu0 %v477, 64
  %v3188 = vpop.permute.xlu0 %3187
  %v3192 = vsel %vm1943, %v2277, 0
  %v3195 = vsel %vm1943, %v2279, 0
  %3197 = vmatpush.msra.mxu0 0.0
  %3198 = vmatpush.msra.mxu0 0.0
  %3199 = vmatpush.msra.mxu0 0.0
  %3200 = vmatpush.msra.mxu0 0.0
  %3201 = vmatpush.msra.mxu0 0.0
  %3202 = vmatpush.msra.mxu0 0.0
  %3203 = vmatpush.msra.mxu0 0.0
  %3204 = vmatpush.msra.mxu0 0.0
  %3205 = vmatpush.msra.mxu0 0.0
  %3206 = vmatpush.msra.mxu0 0.0
  %3207 = vmatpush.msra.mxu0 0.0
  %3208 = vmatpush.msra.mxu0 0.0
  %3209 = vmatpush.msra.mxu0 0.0
  %3210 = vmatpush.msra.mxu0 0.0
  %3211 = vmatpush.msra.mxu0 %v3188
  %3212 = vmatpush.msra.mxu0 %v3186
  %3213 = vmatmul.f32.gmra.mxu0 %v3192
  %v3214 = vpop.f32.mrf.mxu0
  %v3215 = vadd.f32 0.0, %v3214
  %3216 = vmatmul.f32.gmra.mxu0 %v3195
  %v3217 = vpop.f32.mrf.mxu0
  %v3218 = vadd.f32 0.0, %v3217
  %3219 = vdwg.mxu0
  %3220 = vrot.lane.b32.xlu0 %v479, 64
  %v3221 = vpop.permute.xlu0 %3220
  %3222 = vrot.lane.b32.xlu0 %v481, 64
  %v3223 = vpop.permute.xlu0 %3222
  %v3227 = vsel %vm1943, %v2281, 0
  %v3230 = vsel %vm1943, %v2283, 0
  %3232 = vmatpush.msra.mxu0 0.0
  %3233 = vmatpush.msra.mxu0 0.0
  %3234 = vmatpush.msra.mxu0 0.0
  %3235 = vmatpush.msra.mxu0 0.0
  %3236 = vmatpush.msra.mxu0 0.0
  %3237 = vmatpush.msra.mxu0 0.0
  %3238 = vmatpush.msra.mxu0 0.0
  %3239 = vmatpush.msra.mxu0 0.0
  %3240 = vmatpush.msra.mxu0 0.0
  %3241 = vmatpush.msra.mxu0 0.0
  %3242 = vmatpush.msra.mxu0 0.0
  %3243 = vmatpush.msra.mxu0 0.0
  %3244 = vmatpush.msra.mxu0 0.0
  %3245 = vmatpush.msra.mxu0 0.0
  %3246 = vmatpush.msra.mxu0 %v3223
  %3247 = vmatpush.msra.mxu0 %v3221
  %3248 = vmatmul.f32.gmra.mxu0 %v3227
  %v3249 = vpop.f32.mrf.mxu0
  %v3250 = vadd.f32 0.0, %v3249
  %3251 = vmatmul.f32.gmra.mxu0 %v3230
  %v3252 = vpop.f32.mrf.mxu0
  %v3253 = vadd.f32 0.0, %v3252
  %3254 = vdwg.mxu0
  %3255 = vrot.lane.b32.xlu0 %v483, 64
  %v3256 = vpop.permute.xlu0 %3255
  %3257 = vrot.lane.b32.xlu0 %v485, 64
  %v3258 = vpop.permute.xlu0 %3257
  %v3262 = vsel %vm1943, %v2285, 0
  %v3265 = vsel %vm1943, %v2287, 0
  %3267 = vmatpush.msra.mxu0 0.0
  %3268 = vmatpush.msra.mxu0 0.0
  %3269 = vmatpush.msra.mxu0 0.0
  %3270 = vmatpush.msra.mxu0 0.0
  %3271 = vmatpush.msra.mxu0 0.0
  %3272 = vmatpush.msra.mxu0 0.0
  %3273 = vmatpush.msra.mxu0 0.0
  %3274 = vmatpush.msra.mxu0 0.0
  %3275 = vmatpush.msra.mxu0 0.0
  %3276 = vmatpush.msra.mxu0 0.0
  %3277 = vmatpush.msra.mxu0 0.0
  %3278 = vmatpush.msra.mxu0 0.0
  %3279 = vmatpush.msra.mxu0 0.0
  %3280 = vmatpush.msra.mxu0 0.0
  %3281 = vmatpush.msra.mxu0 %v3258
  %3282 = vmatpush.msra.mxu0 %v3256
  %3283 = vmatmul.f32.gmra.mxu0 %v3262
  %v3284 = vpop.f32.mrf.mxu0
  %v3285 = vadd.f32 0.0, %v3284
  %3286 = vmatmul.f32.gmra.mxu0 %v3265
  %v3287 = vpop.f32.mrf.mxu0
  %v3288 = vadd.f32 0.0, %v3287
  %3289 = vdwg.mxu0
  %3290 = vrot.lane.b32.xlu0 %v487, 64
  %v3291 = vpop.permute.xlu0 %3290
  %3292 = vrot.lane.b32.xlu0 %v489, 64
  %v3293 = vpop.permute.xlu0 %3292
  %v3297 = vsel %vm1943, %v2289, 0
  %v3300 = vsel %vm1943, %v2291, 0
  %3302 = vmatpush.msra.mxu0 0.0
  %3303 = vmatpush.msra.mxu0 0.0
  %3304 = vmatpush.msra.mxu0 0.0
  %3305 = vmatpush.msra.mxu0 0.0
  %3306 = vmatpush.msra.mxu0 0.0
  %3307 = vmatpush.msra.mxu0 0.0
  %3308 = vmatpush.msra.mxu0 0.0
  %3309 = vmatpush.msra.mxu0 0.0
  %3310 = vmatpush.msra.mxu0 0.0
  %3311 = vmatpush.msra.mxu0 0.0
  %3312 = vmatpush.msra.mxu0 0.0
  %3313 = vmatpush.msra.mxu0 0.0
  %3314 = vmatpush.msra.mxu0 0.0
  %3315 = vmatpush.msra.mxu0 0.0
  %3316 = vmatpush.msra.mxu0 %v3293
  %3317 = vmatpush.msra.mxu0 %v3291
  %3318 = vmatmul.f32.gmra.mxu0 %v3297
  %v3319 = vpop.f32.mrf.mxu0
  %v3320 = vadd.f32 0.0, %v3319
  %3321 = vmatmul.f32.gmra.mxu0 %v3300
  %v3322 = vpop.f32.mrf.mxu0
  %v3323 = vadd.f32 0.0, %v3322
  %3324 = vdwg.mxu0
  %3325 = vrot.lane.b32.xlu0 %v491, 64
  %v3326 = vpop.permute.xlu0 %3325
  %3327 = vrot.lane.b32.xlu0 %v493, 64
  %v3328 = vpop.permute.xlu0 %3327
  %v3332 = vsel %vm1943, %v2293, 0
  %v3335 = vsel %vm1943, %v2295, 0
  %3337 = vmatpush.msra.mxu0 0.0
  %3338 = vmatpush.msra.mxu0 0.0
  %3339 = vmatpush.msra.mxu0 0.0
  %3340 = vmatpush.msra.mxu0 0.0
  %3341 = vmatpush.msra.mxu0 0.0
  %3342 = vmatpush.msra.mxu0 0.0
  %3343 = vmatpush.msra.mxu0 0.0
  %3344 = vmatpush.msra.mxu0 0.0
  %3345 = vmatpush.msra.mxu0 0.0
  %3346 = vmatpush.msra.mxu0 0.0
  %3347 = vmatpush.msra.mxu0 0.0
  %3348 = vmatpush.msra.mxu0 0.0
  %3349 = vmatpush.msra.mxu0 0.0
  %3350 = vmatpush.msra.mxu0 0.0
  %3351 = vmatpush.msra.mxu0 %v3328
  %3352 = vmatpush.msra.mxu0 %v3326
  %3353 = vmatmul.f32.gmra.mxu0 %v3332
  %v3354 = vpop.f32.mrf.mxu0
  %v3355 = vadd.f32 0.0, %v3354
  %3356 = vmatmul.f32.gmra.mxu0 %v3335
  %v3357 = vpop.f32.mrf.mxu0
  %v3358 = vadd.f32 0.0, %v3357
  %3359 = vdwg.mxu0
  %3360 = vrot.lane.b32.xlu0 %v495, 64
  %v3361 = vpop.permute.xlu0 %3360
  %3362 = vrot.lane.b32.xlu0 %v497, 64
  %v3363 = vpop.permute.xlu0 %3362
  %v3367 = vsel %vm1943, %v2297, 0
  %v3370 = vsel %vm1943, %v2299, 0
  %3372 = vmatpush.msra.mxu0 0.0
  %3373 = vmatpush.msra.mxu0 0.0
  %3374 = vmatpush.msra.mxu0 0.0
  %3375 = vmatpush.msra.mxu0 0.0
  %3376 = vmatpush.msra.mxu0 0.0
  %3377 = vmatpush.msra.mxu0 0.0
  %3378 = vmatpush.msra.mxu0 0.0
  %3379 = vmatpush.msra.mxu0 0.0
  %3380 = vmatpush.msra.mxu0 0.0
  %3381 = vmatpush.msra.mxu0 0.0
  %3382 = vmatpush.msra.mxu0 0.0
  %3383 = vmatpush.msra.mxu0 0.0
  %3384 = vmatpush.msra.mxu0 0.0
  %3385 = vmatpush.msra.mxu0 0.0
  %3386 = vmatpush.msra.mxu0 %v3363
  %3387 = vmatpush.msra.mxu0 %v3361
  %3388 = vmatmul.f32.gmra.mxu0 %v3367
  %v3389 = vpop.f32.mrf.mxu0
  %v3390 = vadd.f32 0.0, %v3389
  %3391 = vmatmul.f32.gmra.mxu0 %v3370
  %v3392 = vpop.f32.mrf.mxu0
  %v3393 = vadd.f32 0.0, %v3392
  %3394 = vdwg.mxu0
  %3395 = vrot.lane.b32.xlu0 %v499, 64
  %v3396 = vpop.permute.xlu0 %3395
  %3397 = vrot.lane.b32.xlu0 %v501, 64
  %v3398 = vpop.permute.xlu0 %3397
  %v3402 = vsel %vm1943, %v2301, 0
  %v3405 = vsel %vm1943, %v2303, 0
  %3407 = vmatpush.msra.mxu0 0.0
  %3408 = vmatpush.msra.mxu0 0.0
  %3409 = vmatpush.msra.mxu0 0.0
  %3410 = vmatpush.msra.mxu0 0.0
  %3411 = vmatpush.msra.mxu0 0.0
  %3412 = vmatpush.msra.mxu0 0.0
  %3413 = vmatpush.msra.mxu0 0.0
  %3414 = vmatpush.msra.mxu0 0.0
  %3415 = vmatpush.msra.mxu0 0.0
  %3416 = vmatpush.msra.mxu0 0.0
  %3417 = vmatpush.msra.mxu0 0.0
  %3418 = vmatpush.msra.mxu0 0.0
  %3419 = vmatpush.msra.mxu0 0.0
  %3420 = vmatpush.msra.mxu0 0.0
  %3421 = vmatpush.msra.mxu0 %v3398
  %3422 = vmatpush.msra.mxu0 %v3396
  %3423 = vmatmul.f32.gmra.mxu0 %v3402
  %v3424 = vpop.f32.mrf.mxu0
  %v3425 = vadd.f32 0.0, %v3424
  %3426 = vmatmul.f32.gmra.mxu0 %v3405
  %v3427 = vpop.f32.mrf.mxu0
  %v3428 = vadd.f32 0.0, %v3427
  %3429 = vdwg.mxu0
  %3430 = vrot.lane.b32.xlu0 %v503, 64
  %v3431 = vpop.permute.xlu0 %3430
  %3432 = vrot.lane.b32.xlu0 %v505, 64
  %v3433 = vpop.permute.xlu0 %3432
  %v3437 = vsel %vm1943, %v2305, 0
  %v3440 = vsel %vm1943, %v2307, 0
  %3442 = vmatpush.msra.mxu0 0.0
  %3443 = vmatpush.msra.mxu0 0.0
  %3444 = vmatpush.msra.mxu0 0.0
  %3445 = vmatpush.msra.mxu0 0.0
  %3446 = vmatpush.msra.mxu0 0.0
  %3447 = vmatpush.msra.mxu0 0.0
  %3448 = vmatpush.msra.mxu0 0.0
  %3449 = vmatpush.msra.mxu0 0.0
  %3450 = vmatpush.msra.mxu0 0.0
  %3451 = vmatpush.msra.mxu0 0.0
  %3452 = vmatpush.msra.mxu0 0.0
  %3453 = vmatpush.msra.mxu0 0.0
  %3454 = vmatpush.msra.mxu0 0.0
  %3455 = vmatpush.msra.mxu0 0.0
  %3456 = vmatpush.msra.mxu0 %v3433
  %3457 = vmatpush.msra.mxu0 %v3431
  %3458 = vmatmul.f32.gmra.mxu0 %v3437
  %v3459 = vpop.f32.mrf.mxu0
  %v3460 = vadd.f32 0.0, %v3459
  %3461 = vmatmul.f32.gmra.mxu0 %v3440
  %v3462 = vpop.f32.mrf.mxu0
  %v3463 = vadd.f32 0.0, %v3462
  %3464 = vdwg.mxu0
  %3465 = vrot.lane.b32.xlu0 %v507, 64
  %v3466 = vpop.permute.xlu0 %3465
  %3467 = vrot.lane.b32.xlu0 %v509, 64
  %v3468 = vpop.permute.xlu0 %3467
  %v3472 = vsel %vm1943, %v2309, 0
  %v3475 = vsel %vm1943, %v2311, 0
  %3477 = vmatpush.msra.mxu0 0.0
  %3478 = vmatpush.msra.mxu0 0.0
  %3479 = vmatpush.msra.mxu0 0.0
  %3480 = vmatpush.msra.mxu0 0.0
  %3481 = vmatpush.msra.mxu0 0.0
  %3482 = vmatpush.msra.mxu0 0.0
  %3483 = vmatpush.msra.mxu0 0.0
  %3484 = vmatpush.msra.mxu0 0.0
  %3485 = vmatpush.msra.mxu0 0.0
  %3486 = vmatpush.msra.mxu0 0.0
  %3487 = vmatpush.msra.mxu0 0.0
  %3488 = vmatpush.msra.mxu0 0.0
  %3489 = vmatpush.msra.mxu0 0.0
  %3490 = vmatpush.msra.mxu0 0.0
  %3491 = vmatpush.msra.mxu0 %v3468
  %3492 = vmatpush.msra.mxu0 %v3466
  %3493 = vmatmul.f32.gmra.mxu0 %v3472
  %v3494 = vpop.f32.mrf.mxu0
  %v3495 = vadd.f32 0.0, %v3494
  %3496 = vmatmul.f32.gmra.mxu0 %v3475
  %v3497 = vpop.f32.mrf.mxu0
  %v3498 = vadd.f32 0.0, %v3497
  %3499 = vdwg.mxu0
  %3500 = vrot.lane.b32.xlu0 %v511, 64
  %v3501 = vpop.permute.xlu0 %3500
  %3502 = vrot.lane.b32.xlu0 %v513, 64
  %v3503 = vpop.permute.xlu0 %3502
  %v3507 = vsel %vm1943, %v2313, 0
  %v3510 = vsel %vm1943, %v2315, 0
  %3512 = vmatpush.msra.mxu0 0.0
  %3513 = vmatpush.msra.mxu0 0.0
  %3514 = vmatpush.msra.mxu0 0.0
  %3515 = vmatpush.msra.mxu0 0.0
  %3516 = vmatpush.msra.mxu0 0.0
  %3517 = vmatpush.msra.mxu0 0.0
  %3518 = vmatpush.msra.mxu0 0.0
  %3519 = vmatpush.msra.mxu0 0.0
  %3520 = vmatpush.msra.mxu0 0.0
  %3521 = vmatpush.msra.mxu0 0.0
  %3522 = vmatpush.msra.mxu0 0.0
  %3523 = vmatpush.msra.mxu0 0.0
  %3524 = vmatpush.msra.mxu0 0.0
  %3525 = vmatpush.msra.mxu0 0.0
  %3526 = vmatpush.msra.mxu0 %v3503
  %3527 = vmatpush.msra.mxu0 %v3501
  %3528 = vmatmul.f32.gmra.mxu0 %v3507
  %v3529 = vpop.f32.mrf.mxu0
  %v3530 = vadd.f32 0.0, %v3529
  %3531 = vmatmul.f32.gmra.mxu0 %v3510
  %v3532 = vpop.f32.mrf.mxu0
  %v3533 = vadd.f32 0.0, %v3532
  %3534 = vdwg.mxu0
  %3535 = vrot.lane.b32.xlu0 %v515, 64
  %v3536 = vpop.permute.xlu0 %3535
  %3537 = vrot.lane.b32.xlu0 %v517, 64
  %v3538 = vpop.permute.xlu0 %3537
  %v3542 = vsel %vm1943, %v2317, 0
  %v3545 = vsel %vm1943, %v2319, 0
  %3547 = vmatpush.msra.mxu0 0.0
  %3548 = vmatpush.msra.mxu0 0.0
  %3549 = vmatpush.msra.mxu0 0.0
  %3550 = vmatpush.msra.mxu0 0.0
  %3551 = vmatpush.msra.mxu0 0.0
  %3552 = vmatpush.msra.mxu0 0.0
  %3553 = vmatpush.msra.mxu0 0.0
  %3554 = vmatpush.msra.mxu0 0.0
  %3555 = vmatpush.msra.mxu0 0.0
  %3556 = vmatpush.msra.mxu0 0.0
  %3557 = vmatpush.msra.mxu0 0.0
  %3558 = vmatpush.msra.mxu0 0.0
  %3559 = vmatpush.msra.mxu0 0.0
  %3560 = vmatpush.msra.mxu0 0.0
  %3561 = vmatpush.msra.mxu0 %v3538
  %3562 = vmatpush.msra.mxu0 %v3536
  %3563 = vmatmul.f32.gmra.mxu0 %v3542
  %v3564 = vpop.f32.mrf.mxu0
  %v3565 = vadd.f32 0.0, %v3564
  %3566 = vmatmul.f32.gmra.mxu0 %v3545
  %v3567 = vpop.f32.mrf.mxu0
  %v3568 = vadd.f32 0.0, %v3567
  %3569 = vdwg.mxu0
  %3570 = vrot.lane.b32.xlu0 %v519, 64
  %v3571 = vpop.permute.xlu0 %3570
  %3572 = vrot.lane.b32.xlu0 %v521, 64
  %v3573 = vpop.permute.xlu0 %3572
  %v3577 = vsel %vm1943, %v2321, 0
  %v3580 = vsel %vm1943, %v2323, 0
  %3582 = vmatpush.msra.mxu0 0.0
  %3583 = vmatpush.msra.mxu0 0.0
  %3584 = vmatpush.msra.mxu0 0.0
  %3585 = vmatpush.msra.mxu0 0.0
  %3586 = vmatpush.msra.mxu0 0.0
  %3587 = vmatpush.msra.mxu0 0.0
  %3588 = vmatpush.msra.mxu0 0.0
  %3589 = vmatpush.msra.mxu0 0.0
  %3590 = vmatpush.msra.mxu0 0.0
  %3591 = vmatpush.msra.mxu0 0.0
  %3592 = vmatpush.msra.mxu0 0.0
  %3593 = vmatpush.msra.mxu0 0.0
  %3594 = vmatpush.msra.mxu0 0.0
  %3595 = vmatpush.msra.mxu0 0.0
  %3596 = vmatpush.msra.mxu0 %v3573
  %3597 = vmatpush.msra.mxu0 %v3571
  %3598 = vmatmul.f32.gmra.mxu0 %v3577
  %v3599 = vpop.f32.mrf.mxu0
  %v3600 = vadd.f32 0.0, %v3599
  %3601 = vmatmul.f32.gmra.mxu0 %v3580
  %v3602 = vpop.f32.mrf.mxu0
  %v3603 = vadd.f32 0.0, %v3602
  %3604 = vdwg.mxu0
  %3605 = vrot.lane.b32.xlu0 %v523, 64
  %v3606 = vpop.permute.xlu0 %3605
  %3607 = vrot.lane.b32.xlu0 %v525, 64
  %v3608 = vpop.permute.xlu0 %3607
  %v3612 = vsel %vm1943, %v2325, 0
  %v3615 = vsel %vm1943, %v2327, 0
  %3617 = vmatpush.msra.mxu0 0.0
  %3618 = vmatpush.msra.mxu0 0.0
  %3619 = vmatpush.msra.mxu0 0.0
  %3620 = vmatpush.msra.mxu0 0.0
  %3621 = vmatpush.msra.mxu0 0.0
  %3622 = vmatpush.msra.mxu0 0.0
  %3623 = vmatpush.msra.mxu0 0.0
  %3624 = vmatpush.msra.mxu0 0.0
  %3625 = vmatpush.msra.mxu0 0.0
  %3626 = vmatpush.msra.mxu0 0.0
  %3627 = vmatpush.msra.mxu0 0.0
  %3628 = vmatpush.msra.mxu0 0.0
  %3629 = vmatpush.msra.mxu0 0.0
  %3630 = vmatpush.msra.mxu0 0.0
  %3631 = vmatpush.msra.mxu0 %v3608
  %3632 = vmatpush.msra.mxu0 %v3606
  %3633 = vmatmul.f32.gmra.mxu0 %v3612
  %v3634 = vpop.f32.mrf.mxu0
  %v3635 = vadd.f32 0.0, %v3634
  %3636 = vmatmul.f32.gmra.mxu0 %v3615
  %v3637 = vpop.f32.mrf.mxu0
  %v3638 = vadd.f32 0.0, %v3637
  %3639 = vdwg.mxu0
  %v3640 = vrcp.pop %v2330
  %v3641 = vrcp.pop %v2333
  %v3642 = vrcp.pop %v2336
  %v3643 = vrcp.pop %v2339
  %v3644 = vrcp.pop %v2342
  %v3645 = vrcp.pop %v2345
  %v3646 = vrcp.pop %v2348
  %v3647 = vrcp.pop %v2351
  %v3648 = vrcp.pop %v2354
  %v3649 = vrcp.pop %v2357
  %v3650 = vrcp.pop %v2360
  %v3651 = vrcp.pop %v2363
  %v3652 = vrcp.pop %v2366
  %v3653 = vrcp.pop %v2369
  %v3654 = vrcp.pop %v2372
  %v3655 = vrcp.pop %v2375
  %v3656 = vrcp.pop %v2378
  %v3657 = vrcp.pop %v2381
  %v3658 = vrcp.pop %v2384
  %v3659 = vrcp.pop %v2387
  %v3660 = vrcp.pop %v2390
  %v3661 = vrcp.pop %v2393
  %v3662 = vrcp.pop %v2396
  %v3663 = vrcp.pop %v2399
  %v3664 = vrcp.pop %v2402
  %v3665 = vrcp.pop %v2405
  %v3666 = vrcp.pop %v2408
  %v3667 = vrcp.pop %v2411
  %v3668 = vrcp.pop %v2414
  %v3669 = vrcp.pop %v2417
  %v3670 = vrcp.pop %v2420
  %v3671 = vrcp.pop %v2423
  %v3672 = vrcp.pop %v2426
  %v3673 = vrcp.pop %v2429
  %v3674 = vrcp.pop %v2432
  %v3675 = vrcp.pop %v2435
  %v3676 = vrcp.pop %v2438
  %v3677 = vrcp.pop %v2441
  %v3678 = vrcp.pop %v2444
  %v3679 = vrcp.pop %v2447
  %v3680 = vrcp.pop %v2450
  %v3681 = vrcp.pop %v2453
  %v3682 = vrcp.pop %v2456
  %v3683 = vrcp.pop %v2459
  %v3684 = vrcp.pop %v2462
  %v3685 = vrcp.pop %v2465
  %v3686 = vrcp.pop %v2468
  %v3687 = vrcp.pop %v2471
  %v3688 = vrcp.pop %v2474
  %v3689 = vrcp.pop %v2477
  %v3690 = vrcp.pop %v2480
  %v3691 = vrcp.pop %v2483
  %v3692 = vrcp.pop %v2486
  %v3693 = vrcp.pop %v2489
  %v3694 = vrcp.pop %v2492
  %v3695 = vrcp.pop %v2495
  %v3696 = vrcp.pop %v2498
  %v3697 = vrcp.pop %v2501
  %v3698 = vrcp.pop %v2504
  %v3699 = vrcp.pop %v2507
  %v3700 = vrcp.pop %v2510
  %v3701 = vrcp.pop %v2513
  %v3702 = vrcp.pop %v2516
  %v3703 = vrcp.pop %v2519
  %v3704 = vmul.f32 %v2550, %v3640
  %v3705 = vmul.f32 %v2553, %v3641
  %v3706 = vmul.f32 %v2585, %v3642
  %v3707 = vmul.f32 %v2588, %v3643
  %v3708 = vmul.f32 %v2620, %v3644
  %v3709 = vmul.f32 %v2623, %v3645
  %v3710 = vmul.f32 %v2655, %v3646
  %v3711 = vmul.f32 %v2658, %v3647
  %v3712 = vmul.f32 %v2690, %v3648
  %v3713 = vmul.f32 %v2693, %v3649
  %v3714 = vmul.f32 %v2725, %v3650
  %v3715 = vmul.f32 %v2728, %v3651
  %v3716 = vmul.f32 %v2760, %v3652
  %v3717 = vmul.f32 %v2763, %v3653
  %v3718 = vmul.f32 %v2795, %v3654
  %v3719 = vmul.f32 %v2798, %v3655
  %v3720 = vmul.f32 %v2830, %v3656
  %v3721 = vmul.f32 %v2833, %v3657
  %v3722 = vmul.f32 %v2865, %v3658
  %v3723 = vmul.f32 %v2868, %v3659
  %v3724 = vmul.f32 %v2900, %v3660
  %v3725 = vmul.f32 %v2903, %v3661
  %v3726 = vmul.f32 %v2935, %v3662
  %v3727 = vmul.f32 %v2938, %v3663
  %v3728 = vmul.f32 %v2970, %v3664
  %v3729 = vmul.f32 %v2973, %v3665
  %v3730 = vmul.f32 %v3005, %v3666
  %v3731 = vmul.f32 %v3008, %v3667
  %v3732 = vmul.f32 %v3040, %v3668
  %v3733 = vmul.f32 %v3043, %v3669
  %v3734 = vmul.f32 %v3075, %v3670
  %v3735 = vmul.f32 %v3078, %v3671
  %v3736 = vmul.f32 %v3110, %v3672
  %v3737 = vmul.f32 %v3113, %v3673
  %v3738 = vmul.f32 %v3145, %v3674
  %v3739 = vmul.f32 %v3148, %v3675
  %v3740 = vmul.f32 %v3180, %v3676
  %v3741 = vmul.f32 %v3183, %v3677
  %v3742 = vmul.f32 %v3215, %v3678
  %v3743 = vmul.f32 %v3218, %v3679
  %v3744 = vmul.f32 %v3250, %v3680
  %v3745 = vmul.f32 %v3253, %v3681
  %v3746 = vmul.f32 %v3285, %v3682
  %v3747 = vmul.f32 %v3288, %v3683
  %v3748 = vmul.f32 %v3320, %v3684
  %v3749 = vmul.f32 %v3323, %v3685
  %v3750 = vmul.f32 %v3355, %v3686
  %v3751 = vmul.f32 %v3358, %v3687
  %v3752 = vmul.f32 %v3390, %v3688
  %v3753 = vmul.f32 %v3393, %v3689
  %v3754 = vmul.f32 %v3425, %v3690
  %v3755 = vmul.f32 %v3428, %v3691
  %v3756 = vmul.f32 %v3460, %v3692
  %v3757 = vmul.f32 %v3463, %v3693
  %v3758 = vmul.f32 %v3495, %v3694
  %v3759 = vmul.f32 %v3498, %v3695
  %v3760 = vmul.f32 %v3530, %v3696
  %v3761 = vmul.f32 %v3533, %v3697
  %v3762 = vmul.f32 %v3565, %v3698
  %v3763 = vmul.f32 %v3568, %v3699
  %v3764 = vmul.f32 %v3600, %v3700
  %v3765 = vmul.f32 %v3603, %v3701
  %v3766 = vmul.f32 %v3635, %v3702
  %v3767 = vmul.f32 %v3638, %v3703
  %3784 = vrot.lane.b32.xlu0 %v3720, 8
  %v3785 = vpop.permute.xlu0 %3784
  %3786 = vrot.lane.b32.xlu0 %v3721, 8
  %v3787 = vpop.permute.xlu0 %3786
  %3788 = vrot.lane.b32.xlu0 %v3722, 8
  %v3789 = vpop.permute.xlu0 %3788
  %3790 = vrot.lane.b32.xlu0 %v3723, 8
  %v3791 = vpop.permute.xlu0 %3790
  %3792 = vrot.lane.b32.xlu0 %v3724, 8
  %v3793 = vpop.permute.xlu0 %3792
  %3794 = vrot.lane.b32.xlu0 %v3725, 8
  %v3795 = vpop.permute.xlu0 %3794
  %3796 = vrot.lane.b32.xlu0 %v3726, 8
  %v3797 = vpop.permute.xlu0 %3796
  %3798 = vrot.lane.b32.xlu0 %v3727, 8
  %v3799 = vpop.permute.xlu0 %3798
  %3800 = vrot.lane.b32.xlu0 %v3728, 8
  %v3801 = vpop.permute.xlu0 %3800
  %3802 = vrot.lane.b32.xlu0 %v3729, 8
  %v3803 = vpop.permute.xlu0 %3802
  %3804 = vrot.lane.b32.xlu0 %v3730, 8
  %v3805 = vpop.permute.xlu0 %3804
  %3806 = vrot.lane.b32.xlu0 %v3731, 8
  %v3807 = vpop.permute.xlu0 %3806
  %3808 = vrot.lane.b32.xlu0 %v3732, 8
  %v3809 = vpop.permute.xlu0 %3808
  %3810 = vrot.lane.b32.xlu0 %v3733, 8
  %v3811 = vpop.permute.xlu0 %3810
  %3812 = vrot.lane.b32.xlu0 %v3734, 8
  %v3813 = vpop.permute.xlu0 %3812
  %3814 = vrot.lane.b32.xlu0 %v3735, 8
  %v3815 = vpop.permute.xlu0 %3814
  %3848 = vrot.lane.b32.xlu0 %v3736, 16
  %v3849 = vpop.permute.xlu0 %3848
  %3850 = vrot.lane.b32.xlu0 %v3737, 16
  %v3851 = vpop.permute.xlu0 %3850
  %3852 = vrot.lane.b32.xlu0 %v3738, 16
  %v3853 = vpop.permute.xlu0 %3852
  %3854 = vrot.lane.b32.xlu0 %v3739, 16
  %v3855 = vpop.permute.xlu0 %3854
  %3856 = vrot.lane.b32.xlu0 %v3740, 16
  %v3857 = vpop.permute.xlu0 %3856
  %3858 = vrot.lane.b32.xlu0 %v3741, 16
  %v3859 = vpop.permute.xlu0 %3858
  %3860 = vrot.lane.b32.xlu0 %v3742, 16
  %v3861 = vpop.permute.xlu0 %3860
  %3862 = vrot.lane.b32.xlu0 %v3743, 16
  %v3863 = vpop.permute.xlu0 %3862
  %3864 = vrot.lane.b32.xlu0 %v3744, 16
  %v3865 = vpop.permute.xlu0 %3864
  %3866 = vrot.lane.b32.xlu0 %v3745, 16
  %v3867 = vpop.permute.xlu0 %3866
  %3868 = vrot.lane.b32.xlu0 %v3746, 16
  %v3869 = vpop.permute.xlu0 %3868
  %3870 = vrot.lane.b32.xlu0 %v3747, 16
  %v3871 = vpop.permute.xlu0 %3870
  %3872 = vrot.lane.b32.xlu0 %v3748, 16
  %v3873 = vpop.permute.xlu0 %3872
  %3874 = vrot.lane.b32.xlu0 %v3749, 16
  %v3875 = vpop.permute.xlu0 %3874
  %3876 = vrot.lane.b32.xlu0 %v3750, 16
  %v3877 = vpop.permute.xlu0 %3876
  %3878 = vrot.lane.b32.xlu0 %v3751, 16
  %v3879 = vpop.permute.xlu0 %3878
  %3912 = vrot.lane.b32.xlu0 %v3752, 24
  %v3913 = vpop.permute.xlu0 %3912
  %3914 = vrot.lane.b32.xlu0 %v3753, 24
  %v3915 = vpop.permute.xlu0 %3914
  %3916 = vrot.lane.b32.xlu0 %v3754, 24
  %v3917 = vpop.permute.xlu0 %3916
  %3918 = vrot.lane.b32.xlu0 %v3755, 24
  %v3919 = vpop.permute.xlu0 %3918
  %3920 = vrot.lane.b32.xlu0 %v3756, 24
  %v3921 = vpop.permute.xlu0 %3920
  %3922 = vrot.lane.b32.xlu0 %v3757, 24
  %v3923 = vpop.permute.xlu0 %3922
  %3924 = vrot.lane.b32.xlu0 %v3758, 24
  %v3925 = vpop.permute.xlu0 %3924
  %3926 = vrot.lane.b32.xlu0 %v3759, 24
  %v3927 = vpop.permute.xlu0 %3926
  %3928 = vrot.lane.b32.xlu0 %v3760, 24
  %v3929 = vpop.permute.xlu0 %3928
  %3930 = vrot.lane.b32.xlu0 %v3761, 24
  %v3931 = vpop.permute.xlu0 %3930
  %3932 = vrot.lane.b32.xlu0 %v3762, 24
  %v3933 = vpop.permute.xlu0 %3932
  %3934 = vrot.lane.b32.xlu0 %v3763, 24
  %v3935 = vpop.permute.xlu0 %3934
  %3936 = vrot.lane.b32.xlu0 %v3764, 24
  %v3937 = vpop.permute.xlu0 %3936
  %3938 = vrot.lane.b32.xlu0 %v3765, 24
  %v3939 = vpop.permute.xlu0 %3938
  %3940 = vrot.lane.b32.xlu0 %v3766, 24
  %v3941 = vpop.permute.xlu0 %3940
  %3942 = vrot.lane.b32.xlu0 %v3767, 24
  %v3943 = vpop.permute.xlu0 %3942
  %v3960 = vsel %vm530, %v3704, %v3785
  %v3961 = vsel %vm530, %v3705, %v3787
  %v3962 = vsel %vm530, %v3706, %v3789
  %v3963 = vsel %vm530, %v3707, %v3791
  %v3964 = vsel %vm530, %v3708, %v3793
  %v3965 = vsel %vm530, %v3709, %v3795
  %v3966 = vsel %vm530, %v3710, %v3797
  %v3967 = vsel %vm530, %v3711, %v3799
  %v3968 = vsel %vm530, %v3712, %v3801
  %v3969 = vsel %vm530, %v3713, %v3803
  %v3970 = vsel %vm530, %v3714, %v3805
  %v3971 = vsel %vm530, %v3715, %v3807
  %v3972 = vsel %vm530, %v3716, %v3809
  %v3973 = vsel %vm530, %v3717, %v3811
  %v3974 = vsel %vm530, %v3718, %v3813
  %v3975 = vsel %vm530, %v3719, %v3815
  %v3976 = vsel %vm1943, %v3960, %v3849
  %v3977 = vsel %vm1943, %v3961, %v3851
  %v3978 = vsel %vm1943, %v3962, %v3853
  %v3979 = vsel %vm1943, %v3963, %v3855
  %v3980 = vsel %vm1943, %v3964, %v3857
  %v3981 = vsel %vm1943, %v3965, %v3859
  %v3982 = vsel %vm1943, %v3966, %v3861
  %v3983 = vsel %vm1943, %v3967, %v3863
  %v3984 = vsel %vm1943, %v3968, %v3865
  %v3985 = vsel %vm1943, %v3969, %v3867
  %v3986 = vsel %vm1943, %v3970, %v3869
  %v3987 = vsel %vm1943, %v3971, %v3871
  %v3988 = vsel %vm1943, %v3972, %v3873
  %v3989 = vsel %vm1943, %v3973, %v3875
  %v3990 = vsel %vm1943, %v3974, %v3877
  %v3991 = vsel %vm1943, %v3975, %v3879
  %vm3992 = vcmask 195584
  %v3993 = vsel %vm3992, %v3976, %v3913
  %v3994 = vsel %vm3992, %v3977, %v3915
  %v3995 = vsel %vm3992, %v3978, %v3917
  %v3996 = vsel %vm3992, %v3979, %v3919
  %v3997 = vsel %vm3992, %v3980, %v3921
  %v3998 = vsel %vm3992, %v3981, %v3923
  %v3999 = vsel %vm3992, %v3982, %v3925
  %v4000 = vsel %vm3992, %v3983, %v3927
  %v4001 = vsel %vm3992, %v3984, %v3929
  %v4002 = vsel %vm3992, %v3985, %v3931
  %v4003 = vsel %vm3992, %v3986, %v3933
  %v4004 = vsel %vm3992, %v3987, %v3935
  %v4005 = vsel %vm3992, %v3988, %v3937
  %v4006 = vsel %vm3992, %v3989, %v3939
  %v4007 = vsel %vm3992, %v3990, %v3941
  %v4008 = vsel %vm3992, %v3991, %v3943
  %v4009 = vpack.c.bf16 %v3994, %v3993
  %v4010 = vpack.c.bf16 %v3996, %v3995
  %v4011 = vpack.c.bf16 %v3998, %v3997
  %v4012 = vpack.c.bf16 %v4000, %v3999
  %v4013 = vpack.c.bf16 %v4002, %v4001
  %v4014 = vpack.c.bf16 %v4004, %v4003
  %v4015 = vpack.c.bf16 %v4006, %v4005
  %v4016 = vpack.c.bf16 %v4008, %v4007
  %v4017 = vld [vmem:[%s4] sm:$0xf]
  %v4018 = vld [vmem:[%s4 + $0x4] sm:$0xf]
  %v4019 = vld [vmem:[%s4 + $0x8] sm:$0xf]
  %v4020 = vld [vmem:[%s4 + $0xc] sm:$0xf]
  %v4025 = vunpack.c.l.b16 %v4017
  %v4026 = vunpack.c.l.b16 %v4018
  %v4027 = vunpack.c.l.b16 %v4019
  %v4028 = vunpack.c.l.b16 %v4020
  %v4029 = vpack.c.b16 %v4026, %v4025
  %v4030 = vpack.c.b16 %v4028, %v4027
  %v4034 = vsel %vm340, %v4009, 0
  %v4037 = vsel %vm340, %v4010, 0
  %v4040 = vsel %vm340, %v4011, 0
  %v4043 = vsel %vm340, %v4012, 0
  %v4046 = vsel %vm340, %v4013, 0
  %v4049 = vsel %vm340, %v4014, 0
  %v4052 = vsel %vm340, %v4015, 0
  %v4055 = vsel %vm340, %v4016, 0
  %4057 = vmatpush.bf16.msra.mxu0 0
  %4058 = vmatpush.bf16.msra.mxu0 0
  %4059 = vmatpush.bf16.msra.mxu0 0
  %4060 = vmatpush.bf16.msra.mxu0 0
  %4061 = vmatpush.bf16.msra.mxu0 0
  %4062 = vmatpush.bf16.msra.mxu0 0
  %4063 = vmatpush.bf16.msra.mxu0 %v4030
  %4064 = vmatpush.bf16.msra.mxu0 %v4029
  %4065 = vmatmul.bf16.gmra.mxu0 %v4034
  %v4066 = vpop.f32.mrf.mxu0
  %v4067 = vadd.f32 0.0, %v4066
  %v4068 = vpop.f32.mrf.mxu0
  %v4069 = vadd.f32 0.0, %v4068
  %4070 = vmatmul.bf16.gmra.mxu0 %v4037
  %v4071 = vpop.f32.mrf.mxu0
  %v4072 = vadd.f32 0.0, %v4071
  %v4073 = vpop.f32.mrf.mxu0
  %v4074 = vadd.f32 0.0, %v4073
  %4075 = vmatmul.bf16.gmra.mxu0 %v4040
  %v4076 = vpop.f32.mrf.mxu0
  %v4077 = vadd.f32 0.0, %v4076
  %v4078 = vpop.f32.mrf.mxu0
  %v4079 = vadd.f32 0.0, %v4078
  %4080 = vmatmul.bf16.gmra.mxu0 %v4043
  %v4081 = vpop.f32.mrf.mxu0
  %v4082 = vadd.f32 0.0, %v4081
  %v4083 = vpop.f32.mrf.mxu0
  %v4084 = vadd.f32 0.0, %v4083
  %4085 = vmatmul.bf16.gmra.mxu0 %v4046
  %v4086 = vpop.f32.mrf.mxu0
  %v4087 = vadd.f32 0.0, %v4086
  %v4088 = vpop.f32.mrf.mxu0
  %v4089 = vadd.f32 0.0, %v4088
  %4090 = vmatmul.bf16.gmra.mxu0 %v4049
  %v4091 = vpop.f32.mrf.mxu0
  %v4092 = vadd.f32 0.0, %v4091
  %v4093 = vpop.f32.mrf.mxu0
  %v4094 = vadd.f32 0.0, %v4093
  %4095 = vmatmul.bf16.gmra.mxu0 %v4052
  %v4096 = vpop.f32.mrf.mxu0
  %v4097 = vadd.f32 0.0, %v4096
  %v4098 = vpop.f32.mrf.mxu0
  %v4099 = vadd.f32 0.0, %v4098
  %4100 = vmatmul.bf16.gmra.mxu0 %v4055
  %v4101 = vpop.f32.mrf.mxu0
  %v4102 = vadd.f32 0.0, %v4101
  %v4103 = vpop.f32.mrf.mxu0
  %v4104 = vadd.f32 0.0, %v4103
  %4105 = vdwg.mxu0
  %v4106 = vsel %vm340, %v4067, -inf
  %v4107 = vsel %vm340, %v4069, -inf
  %v4108 = vmax.f32 %v4106, %v4107
  %v4109 = vrot.slane %v4108, 4
  %v4110 = vmax.f32 %v4108, %v4109
  %v4111 = vrot.slane %v4110, 2
  %v4112 = vmax.f32 %v4110, %v4111
  %v4113 = vrot.slane %v4112, 1
  %v4114 = vmax.f32 %v4112, %v4113
  %v4115 = vsel %vm340, %v4072, -inf
  %v4116 = vsel %vm340, %v4074, -inf
  %v4117 = vmax.f32 %v4115, %v4116
  %v4118 = vrot.slane %v4117, 4
  %v4119 = vmax.f32 %v4117, %v4118
  %v4120 = vrot.slane %v4119, 2
  %v4121 = vmax.f32 %v4119, %v4120
  %v4122 = vrot.slane %v4121, 1
  %v4123 = vmax.f32 %v4121, %v4122
  %v4124 = vsel %vm340, %v4077, -inf
  %v4125 = vsel %vm340, %v4079, -inf
  %v4126 = vmax.f32 %v4124, %v4125
  %v4127 = vrot.slane %v4126, 4
  %v4128 = vmax.f32 %v4126, %v4127
  %v4129 = vrot.slane %v4128, 2
  %v4130 = vmax.f32 %v4128, %v4129
  %v4131 = vrot.slane %v4130, 1
  %v4132 = vmax.f32 %v4130, %v4131
  %v4133 = vsel %vm340, %v4082, -inf
  %v4134 = vsel %vm340, %v4084, -inf
  %v4135 = vmax.f32 %v4133, %v4134
  %v4136 = vrot.slane %v4135, 4
  %v4137 = vmax.f32 %v4135, %v4136
  %v4138 = vrot.slane %v4137, 2
  %v4139 = vmax.f32 %v4137, %v4138
  %v4140 = vrot.slane %v4139, 1
  %v4141 = vmax.f32 %v4139, %v4140
  %v4142 = vsel %vm340, %v4087, -inf
  %v4143 = vsel %vm340, %v4089, -inf
  %v4144 = vmax.f32 %v4142, %v4143
  %v4145 = vrot.slane %v4144, 4
  %v4146 = vmax.f32 %v4144, %v4145
  %v4147 = vrot.slane %v4146, 2
  %v4148 = vmax.f32 %v4146, %v4147
  %v4149 = vrot.slane %v4148, 1
  %v4150 = vmax.f32 %v4148, %v4149
  %v4151 = vsel %vm340, %v4092, -inf
  %v4152 = vsel %vm340, %v4094, -inf
  %v4153 = vmax.f32 %v4151, %v4152
  %v4154 = vrot.slane %v4153, 4
  %v4155 = vmax.f32 %v4153, %v4154
  %v4156 = vrot.slane %v4155, 2
  %v4157 = vmax.f32 %v4155, %v4156
  %v4158 = vrot.slane %v4157, 1
  %v4159 = vmax.f32 %v4157, %v4158
  %v4160 = vsel %vm340, %v4097, -inf
  %v4161 = vsel %vm340, %v4099, -inf
  %v4162 = vmax.f32 %v4160, %v4161
  %v4163 = vrot.slane %v4162, 4
  %v4164 = vmax.f32 %v4162, %v4163
  %v4165 = vrot.slane %v4164, 2
  %v4166 = vmax.f32 %v4164, %v4165
  %v4167 = vrot.slane %v4166, 1
  %v4168 = vmax.f32 %v4166, %v4167
  %v4169 = vsel %vm340, %v4102, -inf
  %v4170 = vsel %vm340, %v4104, -inf
  %v4171 = vmax.f32 %v4169, %v4170
  %v4172 = vrot.slane %v4171, 4
  %v4173 = vmax.f32 %v4171, %v4172
  %v4174 = vrot.slane %v4173, 2
  %v4175 = vmax.f32 %v4173, %v4174
  %v4176 = vrot.slane %v4175, 1
  %v4177 = vmax.f32 %v4175, %v4176
  %v4178 = vld [vmem:[%s5] sm:$0x1]
  %v4180 = vperm.slane %v4178, 0
  %v4182 = vadd.f32 %v4114, %v4180
  %v4183 = vadd.f32 %v4123, %v4180
  %v4184 = vadd.f32 %v4132, %v4180
  %v4185 = vadd.f32 %v4141, %v4180
  %v4186 = vadd.f32 %v4150, %v4180
  %v4187 = vadd.f32 %v4159, %v4180
  %v4188 = vadd.f32 %v4168, %v4180
  %v4189 = vadd.f32 %v4177, %v4180
  %v4198 = vrot.slane %v4183, 7
  %vm4199 = vcmask 1041409
  %v4200 = vsel %vm4199, %v4198, %v4182
  %v4201 = vrot.slane %v4184, 6
  %vm4202 = vcmask 1042434
  %v4203 = vsel %vm4202, %v4201, %v4200
  %v4204 = vrot.slane %v4185, 5
  %vm4205 = vcmask 1043459
  %v4206 = vsel %vm4205, %v4204, %v4203
  %v4207 = vrot.slane %v4186, 4
  %vm4208 = vcmask 1044484
  %v4209 = vsel %vm4208, %v4207, %v4206
  %v4210 = vrot.slane %v4187, 3
  %vm4211 = vcmask 1045509
  %v4212 = vsel %vm4211, %v4210, %v4209
  %v4213 = vrot.slane %v4188, 2
  %vm4214 = vcmask 1046534
  %v4215 = vsel %vm4214, %v4213, %v4212
  %v4216 = vrot.slane %v4189, 1
  %vm4217 = vcmask 1047559
  %v4218 = vsel %vm4217, %v4216, %v4215
  %4220 = vst.msk [vmem:[%s6] sm:$0xff] %vm340, %v4218
  // Predicated region
  $region26: #{attention_temporal_encoder.1} parent=0 // pred_check
    _
  $region27: #{attention_temporal_encoder.1} parent=0 // pred_check_branch
    %4222 = sbr.rel (0) target = $region29
  $region28: #{attention_temporal_encoder.1} parent=0 // pred_region
    _
  $region29: #{attention_temporal_encoder.1} parent=0 // pred_fallthru
    _
  // Predicated region
  $region30: #{attention_temporal_encoder.1} parent=0 // pred_check
    _
  $region31: #{attention_temporal_encoder.1} parent=0 // pred_check_branch
    %4224 = sbr.rel (0) target = $region33
  $region32: #{attention_temporal_encoder.1} parent=0 // pred_region
    _
  $region33: #{attention_temporal_encoder.1} parent=0 // pred_fallthru
    _

</llo_original>
